<compile_context>
chip_gen: v7x
topology: tpu7x:2x2x1
jax: 0.10.0
libtpu: 0.0.40
codegen_flags: <defaults>
</compile_context>

<pallas_src>
import functools
import math

import jax
import jax.numpy as jnp
from jax.experimental import pallas as pl
from jax.experimental.pallas import tpu as pltpu


def _vmem_limit_bytes():
    kind = ""
    try:
        kind = jax.devices()[0].device_kind.lower()
    except Exception:
        pass
    if "v7" in kind or "7x" in kind:
        return 48 * 1024 * 1024        # v7x: 64 MiB/TC physical, leave headroom
    return 100 * 1024 * 1024           # v5e/v6e: 128 MiB physical


VMEM_LIMIT = _vmem_limit_bytes()


def _pick_tile(dim, target, align):
    """Largest tile <= target that divides dim and is `align`-aligned,
    else the full dim (full-dim blocks are always legal)."""
    if dim <= target:
        return dim
    t = (target // align) * align
    while t >= align:
        if dim % t == 0:
            return t
        t -= align
    return dim


def _row_tile(M, target):
    """Row tile; prefer >= 2 blocks along the (parallel) row axis for v7x."""
    tm = _pick_tile(M, target, 8)
    if tm == M and M >= 16 and (M // 2) % 8 == 0:
        tm = M // 2
    return tm


def _largest_divisor_le(n, target):
    t = max(1, min(n, target))
    while n % t:
        t -= 1
    return t


# ---------------------------------------------------------------------------
# Kernels
# ---------------------------------------------------------------------------
def _linear_kernel(x_ref, w_ref, b_ref, o_ref, acc_ref, *, relu):
    # acc += x_tile(bf16) @ w_tile(bf16) with f32 accumulation.
    @pl.when(pl.program_id(2) == 0)
    def _init():
        acc_ref[...] = jnp.zeros(acc_ref.shape, acc_ref.dtype)

    acc_ref[...] += jnp.dot(
        x_ref[...].astype(jnp.bfloat16), w_ref[...].astype(jnp.bfloat16),
        preferred_element_type=jnp.float32)

    @pl.when(pl.program_id(2) == pl.num_programs(2) - 1)
    def _fin():
        y = acc_ref[...] + b_ref[...]
        if relu:
            y = jnp.maximum(y, 0.0)
        o_ref[...] = y.astype(o_ref.dtype)


def linear(x, w, b, relu=False, out_dtype=jnp.bfloat16):
    """y = x @ w + b.  x:(M,K) f32/bf16, w:(K,N) bf16, b:(N,) f32."""
    M, K = x.shape
    N = w.shape[1]
    x_bytes = jnp.dtype(x.dtype).itemsize
    o_bytes = jnp.dtype(out_dtype).itemsize

    tm = _row_tile(M, 512)
    tk = _pick_tile(K, 512, 128)

    # Prefer full-N blocks (x tile streamed exactly once per row block, most
    # lane-dense output) whenever the double-buffered working set fits.
    def _fullN_bytes(n):
        return (2 * tm * tk * x_bytes + 2 * tk * n * 2
                + tm * n * 4 + 2 * tm * n * o_bytes + 2 * n * 4)

    tn = N if _fullN_bytes(N) <= int(0.6 * VMEM_LIMIT) else _pick_tile(N, 512, 128)

    grid = (M // tm, N // tn, K // tk)
    return pl.pallas_call(
        functools.partial(_linear_kernel, relu=relu),
        out_shape=jax.ShapeDtypeStruct((M, N), out_dtype),
        grid_spec=pltpu.PrefetchScalarGridSpec(
            num_scalar_prefetch=0,
            grid=grid,
            in_specs=[
                pl.BlockSpec((tm, tk), lambda i, j, k: (i, k)),
                pl.BlockSpec((tk, tn), lambda i, j, k: (k, j)),
                pl.BlockSpec((1, tn), lambda i, j, k: (0, j)),
            ],
            out_specs=pl.BlockSpec((tm, tn), lambda i, j, k: (i, j)),
            scratch_shapes=[pltpu.VMEM((tm, tn), jnp.float32)],
        ),
        compiler_params=pltpu.CompilerParams(
            dimension_semantics=("parallel", "parallel", "arbitrary"),
            vmem_limit_bytes=VMEM_LIMIT,
        ),
    )(x, w, b.reshape(1, -1))


def _linear_res_ln_kernel(x_ref, res_ref, w_ref, b_ref, g_ref, bt_ref, o_ref,
                          *, eps):
    # LayerNorm(res + x @ w + b) * gamma + beta, fused epilogue on the tile.
    y = jnp.dot(x_ref[...].astype(jnp.bfloat16), w_ref[...],
                preferred_element_type=jnp.float32)
    z = y + b_ref[...] + res_ref[...].astype(jnp.float32)
    mu = jnp.mean(z, axis=-1, keepdims=True)
    var = jnp.mean((z - mu) * (z - mu), axis=-1, keepdims=True)
    zn = (z - mu) * jax.lax.rsqrt(var + eps)
    o_ref[...] = (zn * g_ref[...] + bt_ref[...]).astype(o_ref.dtype)


def linear_residual_layernorm(x, res, w, b, gamma, beta, eps=1e-5,
                              out_dtype=jnp.bfloat16):
    M, K = x.shape
    N = w.shape[1]
    tm = _row_tile(M, 256)
    grid = (M // tm,)
    # NOTE: the (K,N) out_proj weight (constant index) is small (d^2 bf16);
    # the large FFN weights are streamed in ffn_residual_layernorm instead.
    return pl.pallas_call(
        functools.partial(_linear_res_ln_kernel, eps=eps),
        out_shape=jax.ShapeDtypeStruct((M, N), out_dtype),
        grid_spec=pltpu.PrefetchScalarGridSpec(
            num_scalar_prefetch=0,
            grid=grid,
            in_specs=[
                pl.BlockSpec((tm, K), lambda i: (i, 0)),
                pl.BlockSpec((tm, N), lambda i: (i, 0)),
                pl.BlockSpec((K, N), lambda i: (0, 0)),   # stationary weight
                pl.BlockSpec((1, N), lambda i: (0, 0)),
                pl.BlockSpec((1, N), lambda i: (0, 0)),
                pl.BlockSpec((1, N), lambda i: (0, 0)),
            ],
            out_specs=pl.BlockSpec((tm, N), lambda i: (i, 0)),
        ),
        compiler_params=pltpu.CompilerParams(
            dimension_semantics=("parallel",),
            vmem_limit_bytes=VMEM_LIMIT,
        ),
    )(x, res, w, b.reshape(1, -1), gamma.reshape(1, -1), beta.reshape(1, -1))


def _ffn_res_ln_kernel(x_ref, w1_ref, b1_ref, w2_ref, b2_ref, g_ref, bt_ref,
                       o_ref, acc_ref, *, eps):
    # acc += relu(x @ w1[:, f] + b1[f]) @ w2[f, :] streamed over F chunks;
    # finalize with residual + LayerNorm.  Only a (tm, tf) hidden slice lives.
    f = pl.program_id(1)

    @pl.when(f == 0)
    def _init():
        acc_ref[...] = jnp.zeros(acc_ref.shape, acc_ref.dtype)

    x_bf = x_ref[...].astype(jnp.bfloat16)
    h = jnp.dot(x_bf, w1_ref[...], preferred_element_type=jnp.float32)
    h = jnp.maximum(h + b1_ref[...], 0.0)
    acc_ref[...] += jnp.dot(h.astype(jnp.bfloat16), w2_ref[...],
                            preferred_element_type=jnp.float32)

    @pl.when(f == pl.num_programs(1) - 1)
    def _fin():
        z = acc_ref[...] + b2_ref[...] + x_ref[...].astype(jnp.float32)
        mu = jnp.mean(z, axis=-1, keepdims=True)
        var = jnp.mean((z - mu) * (z - mu), axis=-1, keepdims=True)
        zn = (z - mu) * jax.lax.rsqrt(var + eps)
        o_ref[...] = (zn * g_ref[...] + bt_ref[...]).astype(o_ref.dtype)


def ffn_residual_layernorm(x, w1, b1, w2, b2, gamma, beta, eps=1e-5,
                           out_dtype=jnp.bfloat16):
    M, D = x.shape
    F = w1.shape[1]
    tm = _row_tile(M, 256)
    tf = _pick_tile(F, 512, 128)
    grid = (M // tm, F // tf)
    return pl.pallas_call(
        functools.partial(_ffn_res_ln_kernel, eps=eps),
        out_shape=jax.ShapeDtypeStruct((M, D), out_dtype),
        grid_spec=pltpu.PrefetchScalarGridSpec(
            num_scalar_prefetch=0,
            grid=grid,
            in_specs=[
                pl.BlockSpec((tm, D), lambda i, f: (i, 0)),
                pl.BlockSpec((D, tf), lambda i, f: (0, f)),
                pl.BlockSpec((1, tf), lambda i, f: (0, f)),
                pl.BlockSpec((tf, D), lambda i, f: (f, 0)),
                pl.BlockSpec((1, D), lambda i, f: (0, 0)),
                pl.BlockSpec((1, D), lambda i, f: (0, 0)),
                pl.BlockSpec((1, D), lambda i, f: (0, 0)),
            ],
            out_specs=pl.BlockSpec((tm, D), lambda i, f: (i, 0)),
            scratch_shapes=[pltpu.VMEM((tm, D), jnp.float32)],
        ),
        compiler_params=pltpu.CompilerParams(
            dimension_semantics=("parallel", "arbitrary"),
            vmem_limit_bytes=VMEM_LIMIT,
        ),
    )(x, w1, b1.reshape(1, -1), w2, b2.reshape(1, -1),
      gamma.reshape(1, -1), beta.reshape(1, -1))


def _layernorm_kernel(x_ref, g_ref, b_ref, o_ref, *, eps):
    z = x_ref[...].astype(jnp.float32)
    mu = jnp.mean(z, axis=-1, keepdims=True)
    var = jnp.mean((z - mu) * (z - mu), axis=-1, keepdims=True)
    zn = (z - mu) * jax.lax.rsqrt(var + eps)
    o_ref[...] = (zn * g_ref[...] + b_ref[...]).astype(o_ref.dtype)


def layernorm(x, gamma, beta, eps=1e-5, out_dtype=jnp.float32):
    M, D = x.shape
    tm = _row_tile(M, 512)
    grid = (M // tm,)
    return pl.pallas_call(
        functools.partial(_layernorm_kernel, eps=eps),
        out_shape=jax.ShapeDtypeStruct((M, D), out_dtype),
        grid_spec=pltpu.PrefetchScalarGridSpec(
            num_scalar_prefetch=0,
            grid=grid,
            in_specs=[
                pl.BlockSpec((tm, D), lambda i: (i, 0)),
                pl.BlockSpec((1, D), lambda i: (0, 0)),
                pl.BlockSpec((1, D), lambda i: (0, 0)),
            ],
            out_specs=pl.BlockSpec((tm, D), lambda i: (i, 0)),
        ),
        compiler_params=pltpu.CompilerParams(
            dimension_semantics=("parallel",),
            vmem_limit_bytes=VMEM_LIMIT,
        ),
    )(x, gamma.reshape(1, -1), beta.reshape(1, -1))


def _flash_attn_kernel(q_ref, k_ref, v_ref, o_ref, m_sc, l_sc, acc_sc):
    # Online-softmax attention over KV blocks.  The 1/sqrt(dh) scale is folded
    # into the q projection weights, so no per-step rescale here.
    kv = pl.program_id(2)

    @pl.when(kv == 0)
    def _init():
        m_sc[...] = jnp.full(m_sc.shape, -jnp.inf, m_sc.dtype)
        l_sc[...] = jnp.zeros(l_sc.shape, l_sc.dtype)
        acc_sc[...] = jnp.zeros(acc_sc.shape, acc_sc.dtype)

    s = jnp.einsum('bqd,bkd->bqk', q_ref[...], k_ref[...],
                   preferred_element_type=jnp.float32)

    m_prev = m_sc[...]
    m_new = jnp.maximum(m_prev, s.max(axis=-1, keepdims=True))
    alpha = jnp.exp(m_prev - m_new)
    # TODO(synk): on v6e/v7x a bf16 exp path would roughly double EUP
    # throughput for small head dims; kept f32 for accuracy.
    p = jnp.exp(s - m_new)
    l_sc[...] = alpha * l_sc[...] + p.sum(axis=-1, keepdims=True)
    acc_sc[...] = alpha * acc_sc[...] + jnp.einsum(
        'bqk,bkd->bqd', p.astype(jnp.bfloat16), v_ref[...],
        preferred_element_type=jnp.float32)
    m_sc[...] = m_new

    @pl.when(kv == pl.num_programs(2) - 1)
    def _fin():
        o_ref[...] = (acc_sc[...] *
                      pl.reciprocal(l_sc[...], approx=True)).astype(o_ref.dtype)


def attention(q, k, v, out_dtype=jnp.bfloat16):
    """q,k,v: (B*H, S, Dh) bf16 -> (B*H, S, Dh) bf16 (scale pre-folded)."""
    BH, S, Dh = q.shape
    # Several (batch, head) pairs per grid step so the per-step work is at
    # least ~128 lanes worth even when Dh < 128.
    Hb = _largest_divisor_le(BH, max(1, -(-128 // Dh)))
    if BH // Hb < 2 and Hb % 2 == 0:
        Hb //= 2                      # keep both v7x TensorCores busy
    tq = _pick_tile(S, 256, 8)
    tkv = _pick_tile(S, 512, 8)
    grid = (BH // Hb, S // tq, S // tkv)
    return pl.pallas_call(
        _flash_attn_kernel,
        out_shape=jax.ShapeDtypeStruct((BH, S, Dh), out_dtype),
        grid_spec=pltpu.PrefetchScalarGridSpec(
            num_scalar_prefetch=0,
            grid=grid,
            in_specs=[
                pl.BlockSpec((Hb, tq, Dh), lambda b, qi, ki: (b, qi, 0)),
                pl.BlockSpec((Hb, tkv, Dh), lambda b, qi, ki: (b, ki, 0)),
                pl.BlockSpec((Hb, tkv, Dh), lambda b, qi, ki: (b, ki, 0)),
            ],
            out_specs=pl.BlockSpec((Hb, tq, Dh), lambda b, qi, ki: (b, qi, 0)),
            scratch_shapes=[
                pltpu.VMEM((Hb, tq, 1), jnp.float32),
                pltpu.VMEM((Hb, tq, 1), jnp.float32),
                pltpu.VMEM((Hb, tq, Dh), jnp.float32),
            ],
        ),
        compiler_params=pltpu.CompilerParams(
            dimension_semantics=("parallel", "parallel", "arbitrary"),
            vmem_limit_bytes=VMEM_LIMIT,
        ),
    )(q, k, v)


# ---------------------------------------------------------------------------
# Model glue (reshapes / parameter plumbing in plain JAX)
# ---------------------------------------------------------------------------
def encoder_layer(xf, p, S, B, H):
    d = p['out_proj_w'].shape[0]
    dh = d // H

    # Self attention (nn.MultiheadAttention, batch_first=False semantics).
    qkv = linear(xf, p['in_proj_w'], p['in_proj_b'])            # (S*B, 3d) bf16
    q, k, v = jnp.split(qkv, 3, axis=-1)

    def to_heads(t):  # (S*B, d) -> (B*H, S, dh)   (bf16, half the bytes)
        return t.reshape(S, B, H, dh).transpose(1, 2, 0, 3).reshape(B * H, S, dh)

    attn = attention(to_heads(q), to_heads(k), to_heads(v))     # (B*H, S, dh)
    attn = attn.reshape(B, H, S, dh).transpose(2, 0, 1, 3).reshape(S * B, d)

    # out_proj + residual + norm1 fused (dropout1 = identity in eval mode).
    x1 = linear_residual_layernorm(attn, xf, p['out_proj_w'], p['out_proj_b'],
                                   p['norm1_g'], p['norm1_b'])

    # Fused FFN (linear1 -> ReLU -> linear2) + residual + norm2,
    # streamed over the feed-forward axis.
    return ffn_residual_layernorm(x1, p['lin1_w'], p['lin1_b'],
                                  p['lin2_w'], p['lin2_b'],
                                  p['norm2_g'], p['norm2_b'])


def transformer_forward(x, params, num_heads):
    S, B, Din = x.shape
    hidden = params['emb_w'].shape[1]
    # Pad batch so the flattened row count is sublane (8) aligned; padded
    # columns are computed independently and sliced off.
    # TODO(synk): use a larger padding quantum (128/256) + masked tails for
    # awkward production row counts.
    quantum = 8 // math.gcd(S, 8)
    Bp = B + ((-B) % quantum)
    if Bp != B:
        x = jnp.pad(x, ((0, 0), (0, Bp - B), (0, 0)))
    xf = x.reshape(S * Bp, Din)
    xf = linear(xf, params['emb_w'], params['emb_b'])            # bf16
    for lp in params['layers']:
        xf = encoder_layer(xf, lp, S, Bp, num_heads)
    xf = layernorm(xf, params['ln_g'], params['ln_b'],
                   out_dtype=jnp.float32)                        # final in f32
    return xf.reshape(S, Bp, hidden)[:, :B, :]


# ---------------------------------------------------------------------------
# Parameters (synthetic init), kernel-side preparation, and a f32 reference
# ---------------------------------------------------------------------------
def init_params(key, input_size, hidden, num_layers, ff=2048):
    # Deterministic synthetic init (not a checkpoint load).  Weights are
    # stored pre-transposed to (K, N), in f32 (the kernel path casts to bf16).
    keys = jax.random.split(key, 1 + num_layers)

    def w(k, shape, scale=0.1):
        return scale * jax.random.normal(k, shape, dtype=jnp.float32)

    params = {
        'emb_w': w(keys[0], (input_size, hidden)),
        'emb_b': w(jax.random.fold_in(keys[0], 1), (hidden,), 0.02),
        'ln_g': 1.0 + w(jax.random.fold_in(keys[0], 2), (hidden,), 0.05),
        'ln_b': w(jax.random.fold_in(keys[0], 3), (hidden,), 0.02),
        'layers': [],
    }
    for i in range(num_layers):
        lk = jax.random.split(keys[1 + i], 12)
        params['layers'].append({
            'in_proj_w': w(lk[0], (hidden, 3 * hidden)),
            'in_proj_b': w(lk[1], (3 * hidden,), 0.02),
            'out_proj_w': w(lk[2], (hidden, hidden)),
            'out_proj_b': w(lk[3], (hidden,), 0.02),
            'lin1_w': w(lk[4], (hidden, ff)),
            'lin1_b': w(lk[5], (ff,), 0.02),
            'lin2_w': w(lk[6], (ff, hidden)),
            'lin2_b': w(lk[7], (hidden,), 0.02),
            'norm1_g': 1.0 + w(lk[8], (hidden,), 0.05),
            'norm1_b': w(lk[9], (hidden,), 0.02),
            'norm2_g': 1.0 + w(lk[10], (hidden,), 0.05),
            'norm2_b': w(lk[11], (hidden,), 0.02),
        })
    return params


def prepare_params(params, num_heads):
    """Kernel-side parameter prep: cast weights to bf16 and fold the
    1/sqrt(dh) attention scale into the q third of in_proj (mathematically
    identical to PyTorch's explicit scaling)."""
    d = params['emb_w'].shape[1]
    dh = d // num_heads
    scale = 1.0 / math.sqrt(dh)

    def bf(a):
        return a.astype(jnp.bfloat16)

    out = {
        'emb_w': bf(params['emb_w']), 'emb_b': params['emb_b'],
        'ln_g': params['ln_g'], 'ln_b': params['ln_b'], 'layers': [],
    }
    for p in params['layers']:
        in_w = p['in_proj_w'].at[:, :d].multiply(scale)
        in_b = p['in_proj_b'].at[:d].multiply(scale)
        out['layers'].append({
            'in_proj_w': bf(in_w), 'in_proj_b': in_b,
            'out_proj_w': bf(p['out_proj_w']), 'out_proj_b': p['out_proj_b'],
            'lin1_w': bf(p['lin1_w']), 'lin1_b': p['lin1_b'],
            'lin2_w': bf(p['lin2_w']), 'lin2_b': p['lin2_b'],
            'norm1_g': p['norm1_g'], 'norm1_b': p['norm1_b'],
            'norm2_g': p['norm2_g'], 'norm2_b': p['norm2_b'],
        })
    return out


def _ln_ref(z, g, b, eps=1e-5):
    mu = jnp.mean(z, axis=-1, keepdims=True)
    var = jnp.mean((z - mu) ** 2, axis=-1, keepdims=True)
    return (z - mu) * jax.lax.rsqrt(var + eps) * g + b


def reference_forward(x, params, num_heads):
    """Plain-JAX f32 reference of the PyTorch module (eval mode)."""
    S, B, _ = x.shape
    h = x @ params['emb_w'] + params['emb_b']
    d = h.shape[-1]
    dh = d // num_heads
    for p in params['layers']:
        qkv = h @ p['in_proj_w'] + p['in_proj_b']
        q, k, v = jnp.split(qkv, 3, axis=-1)

        def heads(t):
            return t.reshape(S, B, num_heads, dh).transpose(1, 2, 0, 3)

        qh, kh, vh = heads(q), heads(k), heads(v)                 # (B,H,S,dh)
        s = jnp.einsum('bhqd,bhkd->bhqk', qh, kh) / math.sqrt(dh)
        a = jax.nn.softmax(s, axis=-1)
        o = jnp.einsum('bhqk,bhkd->bhqd', a, vh)
        o = o.transpose(2, 0, 1, 3).reshape(S, B, d)
        attn = o @ p['out_proj_w'] + p['out_proj_b']
        h1 = _ln_ref(h + attn, p['norm1_g'], p['norm1_b'])
        ff = jnp.maximum(h1 @ p['lin1_w'] + p['lin1_b'], 0.0)
        ff = ff @ p['lin2_w'] + p['lin2_b']
        h = _ln_ref(h1 + ff, p['norm2_g'], p['norm2_b'])
    return _ln_ref(h, params['ln_g'], params['ln_b'])


if __name__ == "__main__":
    # Small shapes consistent with the module's forward (seq-first input).
    S, B, INPUT_SIZE = 8, 2, 16
    HIDDEN, NUM_LAYERS, NUM_HEADS = 32, 2, 4
    FFN = 2048  # nn.TransformerEncoderLayer default dim_feedforward

    key = jax.random.PRNGKey(0)
    kx, kp = jax.random.split(key)
    x = jax.random.normal(kx, (S, B, INPUT_SIZE), dtype=jnp.float32)
    params = init_params(kp, INPUT_SIZE, HIDDEN, NUM_LAYERS, ff=FFN)
    kparams = prepare_params(params, NUM_HEADS)

    fwd = jax.jit(functools.partial(transformer_forward, num_heads=NUM_HEADS))
    out = jax.block_until_ready(fwd(x, kparams))
    assert out.shape == (S, B, HIDDEN), out.shape
    assert bool(jnp.all(jnp.isfinite(out)))

    # Tolerance reflects bf16 weights/activations + approx softmax reciprocal.
    ref = reference_forward(x, params, NUM_HEADS)
    assert bool(jnp.allclose(out, ref, atol=0.15, rtol=0.05)), (
        float(jnp.max(jnp.abs(out - ref))))
    print("KERNEL_OK")
</pallas_src>

<mosaic_0001>
module attributes {stable_mosaic.version = 11 : i64} {
  func.func @_linear_kernel(%arg0: i32, %arg1: i32, %arg2: i32, %arg3: memref<8x16xf32, #tpu.memory_space<vmem>>, %arg4: memref<16x32xbf16, #tpu.memory_space<vmem>>, %arg5: memref<1x32xf32, #tpu.memory_space<vmem>>, %arg6: memref<8x32xbf16, #tpu.memory_space<vmem>>, %arg7: memref<8x32xf32, #tpu.memory_space<vmem>>) attributes {dimension_semantics = [#tpu.dimension_semantics<parallel>, #tpu.dimension_semantics<parallel>, #tpu.dimension_semantics<arbitrary>], iteration_bounds = array<i64: 2, 1, 1>, scalar_prefetch = 0 : i64, scratch_operands = 1 : i64, tpu.core_type = #tpu.core_type<tc>, window_params = [{transform_indices = @transform_0, window_bounds = array<i64: 8, 16>}, {transform_indices = @transform_1, window_bounds = array<i64: 16, 32>}, {transform_indices = @transform_2, window_bounds = array<i64: 1, 32>}, {transform_indices = @transform_3, window_bounds = array<i64: 8, 32>}]} {
    %c0_i32 = arith.constant 0 : i32
    %0 = arith.cmpi eq, %arg2, %c0_i32 : i32
    %1 = arith.extui %0 : i1 to i32
    %c0_i32_0 = arith.constant 0 : i32
    %2 = arith.cmpi ne, %1, %c0_i32_0 : i32
    scf.if %2 {
      %cst_10 = arith.constant 0.000000e+00 : f32
      %13 = vector.broadcast %cst_10 : f32 to vector<8x32xf32>
      %c0_11 = arith.constant 0 : index
      %c0_12 = arith.constant 0 : index
      %14 = vector.load %arg7[%c0_11, %c0_12] : memref<8x32xf32, #tpu.memory_space<vmem>>, vector<8x32xf32>
      tpu.vector_store %arg7[%c0_11, %c0_12], %13 {strides = array<i32>} : memref<8x32xf32, #tpu.memory_space<vmem>>, vector<8x32xf32>,
    } else {
    }
    %c0 = arith.constant 0 : index
    %c0_1 = arith.constant 0 : index
    %3 = vector.load %arg7[%c0, %c0_1] : memref<8x32xf32, #tpu.memory_space<vmem>>, vector<8x32xf32>
    %c0_2 = arith.constant 0 : index
    %c0_3 = arith.constant 0 : index
    %4 = vector.load %arg3[%c0_2, %c0_3] : memref<8x16xf32, #tpu.memory_space<vmem>>, vector<8x16xf32>
    %5 = arith.truncf %4 : vector<8x16xf32> to vector<8x16xbf16>
    %c0_4 = arith.constant 0 : index
    %c0_5 = arith.constant 0 : index
    %6 = vector.load %arg4[%c0_4, %c0_5] : memref<16x32xbf16, #tpu.memory_space<vmem>>, vector<16x32xbf16>
    %cst = arith.constant dense<0.000000e+00> : vector<8x32xf32>
    %7 = tpu.matmul %5, %6, %cst {dimension_numbers = #tpu.dot_dimension_numbers<[1], [0], [0], [1], [0, 0, 1, 1], [], []>} : vector<8x16xbf16>, vector<16x32xbf16>, vector<8x32xf32> -> vector<8x32xf32>
    %8 = arith.addf %3, %7 : vector<8x32xf32>
    %c0_6 = arith.constant 0 : index
    %c0_7 = arith.constant 0 : index
    %9 = vector.load %arg7[%c0_6, %c0_7] : memref<8x32xf32, #tpu.memory_space<vmem>>, vector<8x32xf32>
    tpu.vector_store %arg7[%c0_6, %c0_7], %8 {strides = array<i32>} : memref<8x32xf32, #tpu.memory_space<vmem>>, vector<8x32xf32>,
    %c0_i32_8 = arith.constant 0 : i32
    %10 = arith.cmpi eq, %arg2, %c0_i32_8 : i32
    %11 = arith.extui %10 : i1 to i32
    %c0_i32_9 = arith.constant 0 : i32
    %12 = arith.cmpi ne, %11, %c0_i32_9 : i32
    scf.if %12 {
      %c0_10 = arith.constant 0 : index
      %c0_11 = arith.constant 0 : index
      %13 = vector.load %arg7[%c0_10, %c0_11] : memref<8x32xf32, #tpu.memory_space<vmem>>, vector<8x32xf32>
      %c0_12 = arith.constant 0 : index
      %c0_13 = arith.constant 0 : index
      %14 = vector.load %arg5[%c0_12, %c0_13] : memref<1x32xf32, #tpu.memory_space<vmem>>, vector<1x32xf32>
      %15 = vector.broadcast %14 : vector<1x32xf32> to vector<8x32xf32>
      %16 = arith.addf %13, %15 : vector<8x32xf32>
      %17 = arith.truncf %16 : vector<8x32xf32> to vector<8x32xbf16>
      %c0_14 = arith.constant 0 : index
      %c0_15 = arith.constant 0 : index
      %18 = vector.load %arg6[%c0_14, %c0_15] : memref<8x32xbf16, #tpu.memory_space<vmem>>, vector<8x32xbf16>
      tpu.vector_store %arg6[%c0_14, %c0_15], %17 {strides = array<i32>} : memref<8x32xbf16, #tpu.memory_space<vmem>>, vector<8x32xbf16>,
    } else {
    }
    return
  }
  func.func @transform_0(%arg0: i32, %arg1: i32, %arg2: i32) -> (i32, i32) {
    %c0_i32 = arith.constant 0 : i32
    return %arg0, %arg2 : i32, i32
  }
  func.func @transform_1(%arg0: i32, %arg1: i32, %arg2: i32) -> (i32, i32) {
    %c0_i32 = arith.constant 0 : i32
    return %arg2, %arg1 : i32, i32
  }
  func.func @transform_2(%arg0: i32, %arg1: i32, %arg2: i32) -> (i32, i32) {
    %c0_i32 = arith.constant 0 : i32
    %c0_i32_0 = arith.constant 0 : i32
    return %c0_i32, %arg1 : i32, i32
  }
  func.func @transform_3(%arg0: i32, %arg1: i32, %arg2: i32) -> (i32, i32) {
    %c0_i32 = arith.constant 0 : i32
    return %arg0, %arg1 : i32, i32
  }
}

module attributes {stable_mosaic.version = 11 : i64} {
  func.func @_linear_kernel(%arg0: i32, %arg1: i32, %arg2: i32, %arg3: memref<8x32xbf16, #tpu.memory_space<vmem>>, %arg4: memref<32x96xbf16, #tpu.memory_space<vmem>>, %arg5: memref<1x96xf32, #tpu.memory_space<vmem>>, %arg6: memref<8x96xbf16, #tpu.memory_space<vmem>>, %arg7: memref<8x96xf32, #tpu.memory_space<vmem>>) attributes {dimension_semantics = [#tpu.dimension_semantics<parallel>, #tpu.dimension_semantics<parallel>, #tpu.dimension_semantics<arbitrary>], iteration_bounds = array<i64: 2, 1, 1>, scalar_prefetch = 0 : i64, scratch_operands = 1 : i64, tpu.core_type = #tpu.core_type<tc>, window_params = [{transform_indices = @transform_0, window_bounds = array<i64: 8, 32>}, {transform_indices = @transform_1, window_bounds = array<i64: 32, 96>}, {transform_indices = @transform_2, window_bounds = array<i64: 1, 96>}, {transform_indices = @transform_3, window_bounds = array<i64: 8, 96>}]} {
    %c0_i32 = arith.constant 0 : i32
    %0 = arith.cmpi eq, %arg2, %c0_i32 : i32
    %1 = arith.extui %0 : i1 to i32
    %c0_i32_0 = arith.constant 0 : i32
    %2 = arith.cmpi ne, %1, %c0_i32_0 : i32
    scf.if %2 {
      %cst_10 = arith.constant 0.000000e+00 : f32
      %12 = vector.broadcast %cst_10 : f32 to vector<8x96xf32>
      %c0_11 = arith.constant 0 : index
      %c0_12 = arith.constant 0 : index
      %13 = vector.load %arg7[%c0_11, %c0_12] : memref<8x96xf32, #tpu.memory_space<vmem>>, vector<8x96xf32>
      tpu.vector_store %arg7[%c0_11, %c0_12], %12 {strides = array<i32>} : memref<8x96xf32, #tpu.memory_space<vmem>>, vector<8x96xf32>,
    } else {
    }
    %c0 = arith.constant 0 : index
    %c0_1 = arith.constant 0 : index
    %3 = vector.load %arg7[%c0, %c0_1] : memref<8x96xf32, #tpu.memory_space<vmem>>, vector<8x96xf32>
    %c0_2 = arith.constant 0 : index
    %c0_3 = arith.constant 0 : index
    %4 = vector.load %arg3[%c0_2, %c0_3] : memref<8x32xbf16, #tpu.memory_space<vmem>>, vector<8x32xbf16>
    %c0_4 = arith.constant 0 : index
    %c0_5 = arith.constant 0 : index
    %5 = vector.load %arg4[%c0_4, %c0_5] : memref<32x96xbf16, #tpu.memory_space<vmem>>, vector<32x96xbf16>
    %cst = arith.constant dense<0.000000e+00> : vector<8x96xf32>
    %6 = tpu.matmul %4, %5, %cst {dimension_numbers = #tpu.dot_dimension_numbers<[1], [0], [0], [1], [0, 0, 1, 1], [], []>} : vector<8x32xbf16>, vector<32x96xbf16>, vector<8x96xf32> -> vector<8x96xf32>
    %7 = arith.addf %3, %6 : vector<8x96xf32>
    %c0_6 = arith.constant 0 : index
    %c0_7 = arith.constant 0 : index
    %8 = vector.load %arg7[%c0_6, %c0_7] : memref<8x96xf32, #tpu.memory_space<vmem>>, vector<8x96xf32>
    tpu.vector_store %arg7[%c0_6, %c0_7], %7 {strides = array<i32>} : memref<8x96xf32, #tpu.memory_space<vmem>>, vector<8x96xf32>,
    %c0_i32_8 = arith.constant 0 : i32
    %9 = arith.cmpi eq, %arg2, %c0_i32_8 : i32
    %10 = arith.extui %9 : i1 to i32
    %c0_i32_9 = arith.constant 0 : i32
    %11 = arith.cmpi ne, %10, %c0_i32_9 : i32
    scf.if %11 {
      %c0_10 = arith.constant 0 : index
      %c0_11 = arith.constant 0 : index
      %12 = vector.load %arg7[%c0_10, %c0_11] : memref<8x96xf32, #tpu.memory_space<vmem>>, vector<8x96xf32>
      %c0_12 = arith.constant 0 : index
      %c0_13 = arith.constant 0 : index
      %13 = vector.load %arg5[%c0_12, %c0_13] : memref<1x96xf32, #tpu.memory_space<vmem>>, vector<1x96xf32>
      %14 = vector.broadcast %13 : vector<1x96xf32> to vector<8x96xf32>
      %15 = arith.addf %12, %14 : vector<8x96xf32>
      %16 = arith.truncf %15 : vector<8x96xf32> to vector<8x96xbf16>
      %c0_14 = arith.constant 0 : index
      %c0_15 = arith.constant 0 : index
      %17 = vector.load %arg6[%c0_14, %c0_15] : memref<8x96xbf16, #tpu.memory_space<vmem>>, vector<8x96xbf16>
      tpu.vector_store %arg6[%c0_14, %c0_15], %16 {strides = array<i32>} : memref<8x96xbf16, #tpu.memory_space<vmem>>, vector<8x96xbf16>,
    } else {
    }
    return
  }
  func.func @transform_0(%arg0: i32, %arg1: i32, %arg2: i32) -> (i32, i32) {
    %c0_i32 = arith.constant 0 : i32
    return %arg0, %arg2 : i32, i32
  }
  func.func @transform_1(%arg0: i32, %arg1: i32, %arg2: i32) -> (i32, i32) {
    %c0_i32 = arith.constant 0 : i32
    return %arg2, %arg1 : i32, i32
  }
  func.func @transform_2(%arg0: i32, %arg1: i32, %arg2: i32) -> (i32, i32) {
    %c0_i32 = arith.constant 0 : i32
    %c0_i32_0 = arith.constant 0 : i32
    return %c0_i32, %arg1 : i32, i32
  }
  func.func @transform_3(%arg0: i32, %arg1: i32, %arg2: i32) -> (i32, i32) {
    %c0_i32 = arith.constant 0 : i32
    return %arg0, %arg1 : i32, i32
  }
}

module attributes {stable_mosaic.version = 11 : i64} {
  func.func @_flash_attn_kernel(%arg0: i32, %arg1: i32, %arg2: i32, %arg3: memref<4x8x8xbf16, #tpu.memory_space<vmem>>, %arg4: memref<4x8x8xbf16, #tpu.memory_space<vmem>>, %arg5: memref<4x8x8xbf16, #tpu.memory_space<vmem>>, %arg6: memref<4x8x8xbf16, #tpu.memory_space<vmem>>, %arg7: memref<4x8x1xf32, #tpu.memory_space<vmem>>, %arg8: memref<4x8x1xf32, #tpu.memory_space<vmem>>, %arg9: memref<4x8x8xf32, #tpu.memory_space<vmem>>) attributes {dimension_semantics = [#tpu.dimension_semantics<parallel>, #tpu.dimension_semantics<parallel>, #tpu.dimension_semantics<arbitrary>], iteration_bounds = array<i64: 2, 1, 1>, scalar_prefetch = 0 : i64, scratch_operands = 3 : i64, tpu.core_type = #tpu.core_type<tc>, window_params = [{transform_indices = @transform_0, window_bounds = array<i64: 4, 8, 8>}, {transform_indices = @transform_1, window_bounds = array<i64: 4, 8, 8>}, {transform_indices = @transform_2, window_bounds = array<i64: 4, 8, 8>}, {transform_indices = @transform_3, window_bounds = array<i64: 4, 8, 8>}]} {
    %c0_i32 = arith.constant 0 : i32
    %0 = arith.cmpi eq, %arg2, %c0_i32 : i32
    %1 = arith.extui %0 : i1 to i32
    %c0_i32_0 = arith.constant 0 : i32
    %2 = arith.cmpi ne, %1, %c0_i32_0 : i32
    scf.if %2 {
      %cst_32 = arith.constant 0xFF800000 : f32
      %33 = vector.broadcast %cst_32 : f32 to vector<4x8x1xf32>
      %c0_33 = arith.constant 0 : index
      %c0_34 = arith.constant 0 : index
      %c0_35 = arith.constant 0 : index
      %34 = vector.load %arg7[%c0_33, %c0_34, %c0_35] : memref<4x8x1xf32, #tpu.memory_space<vmem>>, vector<4x8x1xf32>
      tpu.vector_store %arg7[%c0_33, %c0_34, %c0_35], %33 {strides = array<i32>} : memref<4x8x1xf32, #tpu.memory_space<vmem>>, vector<4x8x1xf32>,
      %cst_36 = arith.constant 0.000000e+00 : f32
      %35 = vector.broadcast %cst_36 : f32 to vector<4x8x1xf32>
      %c0_37 = arith.constant 0 : index
      %c0_38 = arith.constant 0 : index
      %c0_39 = arith.constant 0 : index
      %36 = vector.load %arg8[%c0_37, %c0_38, %c0_39] : memref<4x8x1xf32, #tpu.memory_space<vmem>>, vector<4x8x1xf32>
      tpu.vector_store %arg8[%c0_37, %c0_38, %c0_39], %35 {strides = array<i32>} : memref<4x8x1xf32, #tpu.memory_space<vmem>>, vector<4x8x1xf32>,
      %cst_40 = arith.constant 0.000000e+00 : f32
      %37 = vector.broadcast %cst_40 : f32 to vector<4x8x8xf32>
      %c0_41 = arith.constant 0 : index
      %c0_42 = arith.constant 0 : index
      %c0_43 = arith.constant 0 : index
      %38 = vector.load %arg9[%c0_41, %c0_42, %c0_43] : memref<4x8x8xf32, #tpu.memory_space<vmem>>, vector<4x8x8xf32>
      tpu.vector_store %arg9[%c0_41, %c0_42, %c0_43], %37 {strides = array<i32>} : memref<4x8x8xf32, #tpu.memory_space<vmem>>, vector<4x8x8xf32>,
    } else {
    }
    %c0 = arith.constant 0 : index
    %c0_1 = arith.constant 0 : index
    %c0_2 = arith.constant 0 : index
    %3 = vector.load %arg3[%c0, %c0_1, %c0_2] : memref<4x8x8xbf16, #tpu.memory_space<vmem>>, vector<4x8x8xbf16>
    %c0_3 = arith.constant 0 : index
    %c0_4 = arith.constant 0 : index
    %c0_5 = arith.constant 0 : index
    %4 = vector.load %arg4[%c0_3, %c0_4, %c0_5] : memref<4x8x8xbf16, #tpu.memory_space<vmem>>, vector<4x8x8xbf16>
    "tpu.trace_start"() <{level = 10 : i32, message = "bqd,bkd->bqk"}> : () -> ()
    %cst = arith.constant dense<0.000000e+00> : vector<4x8x8xf32>
    %5 = tpu.matmul %3, %4, %cst {dimension_numbers = #tpu.dot_dimension_numbers<[2], [2], [1], [1], [0, 0, 0, 1, 1, 1], [0], [0]>} : vector<4x8x8xbf16>, vector<4x8x8xbf16>, vector<4x8x8xf32> -> vector<4x8x8xf32>
    "tpu.trace_stop"() : () -> ()
    %c0_6 = arith.constant 0 : index
    %c0_7 = arith.constant 0 : index
    %c0_8 = arith.constant 0 : index
    %6 = vector.load %arg7[%c0_6, %c0_7, %c0_8] : memref<4x8x1xf32, #tpu.memory_space<vmem>>, vector<4x8x1xf32>
    %cst_9 = arith.constant dense<0xFF800000> : vector<4x8xf32>
    %7 = vector.multi_reduction <maximumf>, %5, %cst_9 [2] : vector<4x8x8xf32> to vector<4x8xf32>
    %8 = vector.shape_cast %7 : vector<4x8xf32> to vector<4x8x1xf32>
    %9 = arith.maximumf %6, %8 : vector<4x8x1xf32>
    %10 = arith.subf %6, %9 : vector<4x8x1xf32>
    %11 = math.exp %10 : vector<4x8x1xf32>
    %12 = vector.broadcast %9 : vector<4x8x1xf32> to vector<4x8x8xf32>
    %13 = arith.subf %5, %12 : vector<4x8x8xf32>
    %14 = math.exp %13 : vector<4x8x8xf32>
    %c0_10 = arith.constant 0 : index
    %c0_11 = arith.constant 0 : index
    %c0_12 = arith.constant 0 : index
    %15 = vector.load %arg8[%c0_10, %c0_11, %c0_12] : memref<4x8x1xf32, #tpu.memory_space<vmem>>, vector<4x8x1xf32>
    %16 = arith.mulf %11, %15 : vector<4x8x1xf32>
    %cst_13 = arith.constant dense<0.000000e+00> : vector<4x8xf32>
    %17 = vector.multi_reduction <add>, %14, %cst_13 [2] : vector<4x8x8xf32> to vector<4x8xf32>
    %18 = vector.shape_cast %17 : vector<4x8xf32> to vector<4x8x1xf32>
    %19 = arith.addf %16, %18 : vector<4x8x1xf32>
    %c0_14 = arith.constant 0 : index
    %c0_15 = arith.constant 0 : index
    %c0_16 = arith.constant 0 : index
    %20 = vector.load %arg8[%c0_14, %c0_15, %c0_16] : memref<4x8x1xf32, #tpu.memory_space<vmem>>, vector<4x8x1xf32>
    tpu.vector_store %arg8[%c0_14, %c0_15, %c0_16], %19 {strides = array<i32>} : memref<4x8x1xf32, #tpu.memory_space<vmem>>, vector<4x8x1xf32>,
    %c0_17 = arith.constant 0 : index
    %c0_18 = arith.constant 0 : index
    %c0_19 = arith.constant 0 : index
    %21 = vector.load %arg9[%c0_17, %c0_18, %c0_19] : memref<4x8x8xf32, #tpu.memory_space<vmem>>, vector<4x8x8xf32>
    %22 = vector.broadcast %11 : vector<4x8x1xf32> to vector<4x8x8xf32>
    %23 = arith.mulf %22, %21 : vector<4x8x8xf32>
    %24 = arith.truncf %14 : vector<4x8x8xf32> to vector<4x8x8xbf16>
    %c0_20 = arith.constant 0 : index
    %c0_21 = arith.constant 0 : index
    %c0_22 = arith.constant 0 : index
    %25 = vector.load %arg5[%c0_20, %c0_21, %c0_22] : memref<4x8x8xbf16, #tpu.memory_space<vmem>>, vector<4x8x8xbf16>
    "tpu.trace_start"() <{level = 10 : i32, message = "bqk,bkd->bqd"}> : () -> ()
    %cst_23 = arith.constant dense<0.000000e+00> : vector<4x8x8xf32>
    %26 = tpu.matmul %24, %25, %cst_23 {dimension_numbers = #tpu.dot_dimension_numbers<[2], [1], [1], [2], [0, 0, 0, 1, 1, 2], [0], [0]>} : vector<4x8x8xbf16>, vector<4x8x8xbf16>, vector<4x8x8xf32> -> vector<4x8x8xf32>
    "tpu.trace_stop"() : () -> ()
    %27 = arith.addf %23, %26 : vector<4x8x8xf32>
    %c0_24 = arith.constant 0 : index
    %c0_25 = arith.constant 0 : index
    %c0_26 = arith.constant 0 : index
    %28 = vector.load %arg9[%c0_24, %c0_25, %c0_26] : memref<4x8x8xf32, #tpu.memory_space<vmem>>, vector<4x8x8xf32>
    tpu.vector_store %arg9[%c0_24, %c0_25, %c0_26], %27 {strides = array<i32>} : memref<4x8x8xf32, #tpu.memory_space<vmem>>, vector<4x8x8xf32>,
    %c0_27 = arith.constant 0 : index
    %c0_28 = arith.constant 0 : index
    %c0_29 = arith.constant 0 : index
    %29 = vector.load %arg7[%c0_27, %c0_28, %c0_29] : memref<4x8x1xf32, #tpu.memory_space<vmem>>, vector<4x8x1xf32>
    tpu.vector_store %arg7[%c0_27, %c0_28, %c0_29], %9 {strides = array<i32>} : memref<4x8x1xf32, #tpu.memory_space<vmem>>, vector<4x8x1xf32>,
    %c0_i32_30 = arith.constant 0 : i32
    %30 = arith.cmpi eq, %arg2, %c0_i32_30 : i32
    %31 = arith.extui %30 : i1 to i32
    %c0_i32_31 = arith.constant 0 : i32
    %32 = arith.cmpi ne, %31, %c0_i32_31 : i32
    scf.if %32 {
      %c0_32 = arith.constant 0 : index
      %c0_33 = arith.constant 0 : index
      %c0_34 = arith.constant 0 : index
      %33 = vector.load %arg9[%c0_32, %c0_33, %c0_34] : memref<4x8x8xf32, #tpu.memory_space<vmem>>, vector<4x8x8xf32>
      %c0_35 = arith.constant 0 : index
      %c0_36 = arith.constant 0 : index
      %c0_37 = arith.constant 0 : index
      %34 = vector.load %arg8[%c0_35, %c0_36, %c0_37] : memref<4x8x1xf32, #tpu.memory_space<vmem>>, vector<4x8x1xf32>
      %35 = tpu.reciprocal %34 {approx = true} : vector<4x8x1xf32> -> vector<4x8x1xf32>
      %36 = vector.broadcast %35 : vector<4x8x1xf32> to vector<4x8x8xf32>
      %37 = arith.mulf %33, %36 : vector<4x8x8xf32>
      %38 = arith.truncf %37 : vector<4x8x8xf32> to vector<4x8x8xbf16>
      %c0_38 = arith.constant 0 : index
      %c0_39 = arith.constant 0 : index
      %c0_40 = arith.constant 0 : index
      %39 = vector.load %arg6[%c0_38, %c0_39, %c0_40] : memref<4x8x8xbf16, #tpu.memory_space<vmem>>, vector<4x8x8xbf16>
      tpu.vector_store %arg6[%c0_38, %c0_39, %c0_40], %38 {strides = array<i32>} : memref<4x8x8xbf16, #tpu.memory_space<vmem>>, vector<4x8x8xbf16>,
    } else {
    }
    return
  }
  func.func @transform_0(%arg0: i32, %arg1: i32, %arg2: i32) -> (i32, i32, i32) {
    %c0_i32 = arith.constant 0 : i32
    %c0_i32_0 = arith.constant 0 : i32
    return %arg0, %arg1, %c0_i32 : i32, i32, i32
  }
  func.func @transform_1(%arg0: i32, %arg1: i32, %arg2: i32) -> (i32, i32, i32) {
    %c0_i32 = arith.constant 0 : i32
    %c0_i32_0 = arith.constant 0 : i32
    return %arg0, %arg2, %c0_i32 : i32, i32, i32
  }
  func.func @transform_2(%arg0: i32, %arg1: i32, %arg2: i32) -> (i32, i32, i32) {
    %c0_i32 = arith.constant 0 : i32
    %c0_i32_0 = arith.constant 0 : i32
    return %arg0, %arg2, %c0_i32 : i32, i32, i32
  }
  func.func @transform_3(%arg0: i32, %arg1: i32, %arg2: i32) -> (i32, i32, i32) {
    %c0_i32 = arith.constant 0 : i32
    %c0_i32_0 = arith.constant 0 : i32
    return %arg0, %arg1, %c0_i32 : i32, i32, i32
  }
}

module attributes {stable_mosaic.version = 11 : i64} {
  func.func @_linear_res_ln_kernel(%arg0: i32, %arg1: memref<8x32xbf16, #tpu.memory_space<vmem>>, %arg2: memref<8x32xbf16, #tpu.memory_space<vmem>>, %arg3: memref<32x32xbf16, #tpu.memory_space<vmem>>, %arg4: memref<1x32xf32, #tpu.memory_space<vmem>>, %arg5: memref<1x32xf32, #tpu.memory_space<vmem>>, %arg6: memref<1x32xf32, #tpu.memory_space<vmem>>, %arg7: memref<8x32xbf16, #tpu.memory_space<vmem>>) attributes {dimension_semantics = [#tpu.dimension_semantics<parallel>], iteration_bounds = array<i64: 2>, scalar_prefetch = 0 : i64, scratch_operands = 0 : i64, tpu.core_type = #tpu.core_type<tc>, window_params = [{transform_indices = @transform_0, window_bounds = array<i64: 8, 32>}, {transform_indices = @transform_1, window_bounds = array<i64: 8, 32>}, {pipeline_mode = #tpu.pipeline_mode<synchronous>, transform_indices = @transform_2, window_bounds = array<i64: 32, 32>}, {pipeline_mode = #tpu.pipeline_mode<synchronous>, transform_indices = @transform_3, window_bounds = array<i64: 1, 32>}, {pipeline_mode = #tpu.pipeline_mode<synchronous>, transform_indices = @transform_4, window_bounds = array<i64: 1, 32>}, {pipeline_mode = #tpu.pipeline_mode<synchronous>, transform_indices = @transform_5, window_bounds = array<i64: 1, 32>}, {transform_indices = @transform_6, window_bounds = array<i64: 8, 32>}]} {
    %c0 = arith.constant 0 : index
    %c0_0 = arith.constant 0 : index
    %0 = vector.load %arg1[%c0, %c0_0] : memref<8x32xbf16, #tpu.memory_space<vmem>>, vector<8x32xbf16>
    %c0_1 = arith.constant 0 : index
    %c0_2 = arith.constant 0 : index
    %1 = vector.load %arg3[%c0_1, %c0_2] : memref<32x32xbf16, #tpu.memory_space<vmem>>, vector<32x32xbf16>
    %cst = arith.constant dense<0.000000e+00> : vector<8x32xf32>
    %2 = tpu.matmul %0, %1, %cst {dimension_numbers = #tpu.dot_dimension_numbers<[1], [0], [0], [1], [0, 0, 1, 1], [], []>} : vector<8x32xbf16>, vector<32x32xbf16>, vector<8x32xf32> -> vector<8x32xf32>
    %c0_3 = arith.constant 0 : index
    %c0_4 = arith.constant 0 : index
    %3 = vector.load %arg4[%c0_3, %c0_4] : memref<1x32xf32, #tpu.memory_space<vmem>>, vector<1x32xf32>
    %4 = vector.broadcast %3 : vector<1x32xf32> to vector<8x32xf32>
    %5 = arith.addf %2, %4 : vector<8x32xf32>
    %c0_5 = arith.constant 0 : index
    %c0_6 = arith.constant 0 : index
    %6 = vector.load %arg2[%c0_5, %c0_6] : memref<8x32xbf16, #tpu.memory_space<vmem>>, vector<8x32xbf16>
    %7 = arith.extf %6 : vector<8x32xbf16> to vector<8x32xf32>
    %8 = arith.addf %5, %7 : vector<8x32xf32>
    %cst_7 = arith.constant dense<0.000000e+00> : vector<8xf32>
    %9 = vector.multi_reduction <add>, %8, %cst_7 [1] : vector<8x32xf32> to vector<8xf32>
    %10 = vector.shape_cast %9 : vector<8xf32> to vector<8x1xf32>
    %cst_8 = arith.constant 3.200000e+01 : f32
    %11 = vector.broadcast %cst_8 : f32 to vector<8x1xf32>
    %12 = arith.divf %10, %11 : vector<8x1xf32>
    %13 = vector.broadcast %12 : vector<8x1xf32> to vector<8x32xf32>
    %14 = arith.subf %8, %13 : vector<8x32xf32>
    %15 = vector.broadcast %12 : vector<8x1xf32> to vector<8x32xf32>
    %16 = arith.subf %8, %15 : vector<8x32xf32>
    %17 = arith.mulf %14, %16 : vector<8x32xf32>
    %cst_9 = arith.constant dense<0.000000e+00> : vector<8xf32>
    %18 = vector.multi_reduction <add>, %17, %cst_9 [1] : vector<8x32xf32> to vector<8xf32>
    %19 = vector.shape_cast %18 : vector<8xf32> to vector<8x1xf32>
    %cst_10 = arith.constant 3.200000e+01 : f32
    %20 = vector.broadcast %cst_10 : f32 to vector<8x1xf32>
    %21 = arith.divf %19, %20 : vector<8x1xf32>
    %22 = vector.broadcast %12 : vector<8x1xf32> to vector<8x32xf32>
    %23 = arith.subf %8, %22 : vector<8x32xf32>
    %cst_11 = arith.constant 9.99999974E-6 : f32
    %24 = vector.broadcast %cst_11 : f32 to vector<8x1xf32>
    %25 = arith.addf %21, %24 : vector<8x1xf32>
    %26 = math.rsqrt %25 : vector<8x1xf32>
    %27 = vector.broadcast %26 : vector<8x1xf32> to vector<8x32xf32>
    %28 = arith.mulf %23, %27 : vector<8x32xf32>
    %c0_12 = arith.constant 0 : index
    %c0_13 = arith.constant 0 : index
    %29 = vector.load %arg5[%c0_12, %c0_13] : memref<1x32xf32, #tpu.memory_space<vmem>>, vector<1x32xf32>
    %30 = vector.broadcast %29 : vector<1x32xf32> to vector<8x32xf32>
    %31 = arith.mulf %28, %30 : vector<8x32xf32>
    %c0_14 = arith.constant 0 : index
    %c0_15 = arith.constant 0 : index
    %32 = vector.load %arg6[%c0_14, %c0_15] : memref<1x32xf32, #tpu.memory_space<vmem>>, vector<1x32xf32>
    %33 = vector.broadcast %32 : vector<1x32xf32> to vector<8x32xf32>
    %34 = arith.addf %31, %33 : vector<8x32xf32>
    %35 = arith.truncf %34 : vector<8x32xf32> to vector<8x32xbf16>
    %c0_16 = arith.constant 0 : index
    %c0_17 = arith.constant 0 : index
    %36 = vector.load %arg7[%c0_16, %c0_17] : memref<8x32xbf16, #tpu.memory_space<vmem>>, vector<8x32xbf16>
    tpu.vector_store %arg7[%c0_16, %c0_17], %35 {strides = array<i32>} : memref<8x32xbf16, #tpu.memory_space<vmem>>, vector<8x32xbf16>,
    return
  }
  func.func @transform_0(%arg0: i32) -> (i32, i32) {
    %c0_i32 = arith.constant 0 : i32
    %c0_i32_0 = arith.constant 0 : i32
    return %arg0, %c0_i32 : i32, i32
  }
  func.func @transform_1(%arg0: i32) -> (i32, i32) {
    %c0_i32 = arith.constant 0 : i32
    %c0_i32_0 = arith.constant 0 : i32
    return %arg0, %c0_i32 : i32, i32
  }
  func.func @transform_2(%arg0: i32) -> (i32, i32) {
    %c0_i32 = arith.constant 0 : i32
    %c0_i32_0 = arith.constant 0 : i32
    %c0_i32_1 = arith.constant 0 : i32
    return %c0_i32, %c0_i32_0 : i32, i32
  }
  func.func @transform_3(%arg0: i32) -> (i32, i32) {
    %c0_i32 = arith.constant 0 : i32
    %c0_i32_0 = arith.constant 0 : i32
    %c0_i32_1 = arith.constant 0 : i32
    return %c0_i32, %c0_i32_0 : i32, i32
  }
  func.func @transform_4(%arg0: i32) -> (i32, i32) {
    %c0_i32 = arith.constant 0 : i32
    %c0_i32_0 = arith.constant 0 : i32
    %c0_i32_1 = arith.constant 0 : i32
    return %c0_i32, %c0_i32_0 : i32, i32
  }
  func.func @transform_5(%arg0: i32) -> (i32, i32) {
    %c0_i32 = arith.constant 0 : i32
    %c0_i32_0 = arith.constant 0 : i32
    %c0_i32_1 = arith.constant 0 : i32
    return %c0_i32, %c0_i32_0 : i32, i32
  }
  func.func @transform_6(%arg0: i32) -> (i32, i32) {
    %c0_i32 = arith.constant 0 : i32
    %c0_i32_0 = arith.constant 0 : i32
    return %arg0, %c0_i32 : i32, i32
  }
}

module attributes {stable_mosaic.version = 11 : i64} {
  func.func @_ffn_res_ln_kernel(%arg0: i32, %arg1: i32, %arg2: memref<8x32xbf16, #tpu.memory_space<vmem>>, %arg3: memref<32x512xbf16, #tpu.memory_space<vmem>>, %arg4: memref<1x512xf32, #tpu.memory_space<vmem>>, %arg5: memref<512x32xbf16, #tpu.memory_space<vmem>>, %arg6: memref<1x32xf32, #tpu.memory_space<vmem>>, %arg7: memref<1x32xf32, #tpu.memory_space<vmem>>, %arg8: memref<1x32xf32, #tpu.memory_space<vmem>>, %arg9: memref<8x32xbf16, #tpu.memory_space<vmem>>, %arg10: memref<8x32xf32, #tpu.memory_space<vmem>>) attributes {dimension_semantics = [#tpu.dimension_semantics<parallel>, #tpu.dimension_semantics<arbitrary>], iteration_bounds = array<i64: 2, 4>, scalar_prefetch = 0 : i64, scratch_operands = 1 : i64, tpu.core_type = #tpu.core_type<tc>, window_params = [{transform_indices = @transform_0, window_bounds = array<i64: 8, 32>}, {transform_indices = @transform_1, window_bounds = array<i64: 32, 512>}, {transform_indices = @transform_2, window_bounds = array<i64: 1, 512>}, {transform_indices = @transform_3, window_bounds = array<i64: 512, 32>}, {pipeline_mode = #tpu.pipeline_mode<synchronous>, transform_indices = @transform_4, window_bounds = array<i64: 1, 32>}, {pipeline_mode = #tpu.pipeline_mode<synchronous>, transform_indices = @transform_5, window_bounds = array<i64: 1, 32>}, {pipeline_mode = #tpu.pipeline_mode<synchronous>, transform_indices = @transform_6, window_bounds = array<i64: 1, 32>}, {transform_indices = @transform_7, window_bounds = array<i64: 8, 32>}]} {
    %c0_i32 = arith.constant 0 : i32
    %0 = arith.cmpi eq, %arg1, %c0_i32 : i32
    %1 = arith.extui %0 : i1 to i32
    %c0_i32_0 = arith.constant 0 : i32
    %2 = arith.cmpi ne, %1, %c0_i32_0 : i32
    scf.if %2 {
      %cst_15 = arith.constant 0.000000e+00 : f32
      %20 = vector.broadcast %cst_15 : f32 to vector<8x32xf32>
      %c0_16 = arith.constant 0 : index
      %c0_17 = arith.constant 0 : index
      %21 = vector.load %arg10[%c0_16, %c0_17] : memref<8x32xf32, #tpu.memory_space<vmem>>, vector<8x32xf32>
      tpu.vector_store %arg10[%c0_16, %c0_17], %20 {strides = array<i32>} : memref<8x32xf32, #tpu.memory_space<vmem>>, vector<8x32xf32>,
    } else {
    }
    %c0 = arith.constant 0 : index
    %c0_1 = arith.constant 0 : index
    %3 = vector.load %arg2[%c0, %c0_1] : memref<8x32xbf16, #tpu.memory_space<vmem>>, vector<8x32xbf16>
    %c0_2 = arith.constant 0 : index
    %c0_3 = arith.constant 0 : index
    %4 = vector.load %arg3[%c0_2, %c0_3] : memref<32x512xbf16, #tpu.memory_space<vmem>>, vector<32x512xbf16>
    %cst = arith.constant dense<0.000000e+00> : vector<8x512xf32>
    %5 = tpu.matmul %3, %4, %cst {dimension_numbers = #tpu.dot_dimension_numbers<[1], [0], [0], [1], [0, 0, 1, 1], [], []>} : vector<8x32xbf16>, vector<32x512xbf16>, vector<8x512xf32> -> vector<8x512xf32>
    %c0_4 = arith.constant 0 : index
    %c0_5 = arith.constant 0 : index
    %6 = vector.load %arg4[%c0_4, %c0_5] : memref<1x512xf32, #tpu.memory_space<vmem>>, vector<1x512xf32>
    %7 = vector.broadcast %6 : vector<1x512xf32> to vector<8x512xf32>
    %8 = arith.addf %5, %7 : vector<8x512xf32>
    %cst_6 = arith.constant 0.000000e+00 : f32
    %9 = vector.broadcast %cst_6 : f32 to vector<8x512xf32>
    %10 = arith.maximumf %8, %9 : vector<8x512xf32>
    %c0_7 = arith.constant 0 : index
    %c0_8 = arith.constant 0 : index
    %11 = vector.load %arg10[%c0_7, %c0_8] : memref<8x32xf32, #tpu.memory_space<vmem>>, vector<8x32xf32>
    %12 = arith.truncf %10 : vector<8x512xf32> to vector<8x512xbf16>
    %c0_9 = arith.constant 0 : index
    %c0_10 = arith.constant 0 : index
    %13 = vector.load %arg5[%c0_9, %c0_10] : memref<512x32xbf16, #tpu.memory_space<vmem>>, vector<512x32xbf16>
    %cst_11 = arith.constant dense<0.000000e+00> : vector<8x32xf32>
    %14 = tpu.matmul %12, %13, %cst_11 {dimension_numbers = #tpu.dot_dimension_numbers<[1], [0], [0], [1], [0, 0, 1, 1], [], []>} : vector<8x512xbf16>, vector<512x32xbf16>, vector<8x32xf32> -> vector<8x32xf32>
    %15 = arith.addf %11, %14 : vector<8x32xf32>
    %c0_12 = arith.constant 0 : index
    %c0_13 = arith.constant 0 : index
    %16 = vector.load %arg10[%c0_12, %c0_13] : memref<8x32xf32, #tpu.memory_space<vmem>>, vector<8x32xf32>
    tpu.vector_store %arg10[%c0_12, %c0_13], %15 {strides = array<i32>} : memref<8x32xf32, #tpu.memory_space<vmem>>, vector<8x32xf32>,
    %c3_i32 = arith.constant 3 : i32
    %17 = arith.cmpi eq, %arg1, %c3_i32 : i32
    %18 = arith.extui %17 : i1 to i32
    %c0_i32_14 = arith.constant 0 : i32
    %19 = arith.cmpi ne, %18, %c0_i32_14 : i32
    scf.if %19 {
      %c0_15 = arith.constant 0 : index
      %c0_16 = arith.constant 0 : index
      %20 = vector.load %arg10[%c0_15, %c0_16] : memref<8x32xf32, #tpu.memory_space<vmem>>, vector<8x32xf32>
      %c0_17 = arith.constant 0 : index
      %c0_18 = arith.constant 0 : index
      %21 = vector.load %arg6[%c0_17, %c0_18] : memref<1x32xf32, #tpu.memory_space<vmem>>, vector<1x32xf32>
      %22 = vector.broadcast %21 : vector<1x32xf32> to vector<8x32xf32>
      %23 = arith.addf %20, %22 : vector<8x32xf32>
      %c0_19 = arith.constant 0 : index
      %c0_20 = arith.constant 0 : index
      %24 = vector.load %arg2[%c0_19, %c0_20] : memref<8x32xbf16, #tpu.memory_space<vmem>>, vector<8x32xbf16>
      %25 = arith.extf %24 : vector<8x32xbf16> to vector<8x32xf32>
      %26 = arith.addf %23, %25 : vector<8x32xf32>
      %cst_21 = arith.constant dense<0.000000e+00> : vector<8xf32>
      %27 = vector.multi_reduction <add>, %26, %cst_21 [1] : vector<8x32xf32> to vector<8xf32>
      %28 = vector.shape_cast %27 : vector<8xf32> to vector<8x1xf32>
      %cst_22 = arith.constant 3.200000e+01 : f32
      %29 = vector.broadcast %cst_22 : f32 to vector<8x1xf32>
      %30 = arith.divf %28, %29 : vector<8x1xf32>
      %31 = vector.broadcast %30 : vector<8x1xf32> to vector<8x32xf32>
      %32 = arith.subf %26, %31 : vector<8x32xf32>
      %33 = vector.broadcast %30 : vector<8x1xf32> to vector<8x32xf32>
      %34 = arith.subf %26, %33 : vector<8x32xf32>
      %35 = arith.mulf %32, %34 : vector<8x32xf32>
      %cst_23 = arith.constant dense<0.000000e+00> : vector<8xf32>
      %36 = vector.multi_reduction <add>, %35, %cst_23 [1] : vector<8x32xf32> to vector<8xf32>
      %37 = vector.shape_cast %36 : vector<8xf32> to vector<8x1xf32>
      %cst_24 = arith.constant 3.200000e+01 : f32
      %38 = vector.broadcast %cst_24 : f32 to vector<8x1xf32>
      %39 = arith.divf %37, %38 : vector<8x1xf32>
      %40 = vector.broadcast %30 : vector<8x1xf32> to vector<8x32xf32>
      %41 = arith.subf %26, %40 : vector<8x32xf32>
      %cst_25 = arith.constant 9.99999974E-6 : f32
      %42 = vector.broadcast %cst_25 : f32 to vector<8x1xf32>
      %43 = arith.addf %39, %42 : vector<8x1xf32>
      %44 = math.rsqrt %43 : vector<8x1xf32>
      %45 = vector.broadcast %44 : vector<8x1xf32> to vector<8x32xf32>
      %46 = arith.mulf %41, %45 : vector<8x32xf32>
      %c0_26 = arith.constant 0 : index
      %c0_27 = arith.constant 0 : index
      %47 = vector.load %arg7[%c0_26, %c0_27] : memref<1x32xf32, #tpu.memory_space<vmem>>, vector<1x32xf32>
      %48 = vector.broadcast %47 : vector<1x32xf32> to vector<8x32xf32>
      %49 = arith.mulf %46, %48 : vector<8x32xf32>
      %c0_28 = arith.constant 0 : index
      %c0_29 = arith.constant 0 : index
      %50 = vector.load %arg8[%c0_28, %c0_29] : memref<1x32xf32, #tpu.memory_space<vmem>>, vector<1x32xf32>
      %51 = vector.broadcast %50 : vector<1x32xf32> to vector<8x32xf32>
      %52 = arith.addf %49, %51 : vector<8x32xf32>
      %53 = arith.truncf %52 : vector<8x32xf32> to vector<8x32xbf16>
      %c0_30 = arith.constant 0 : index
      %c0_31 = arith.constant 0 : index
      %54 = vector.load %arg9[%c0_30, %c0_31] : memref<8x32xbf16, #tpu.memory_space<vmem>>, vector<8x32xbf16>
      tpu.vector_store %arg9[%c0_30, %c0_31], %53 {strides = array<i32>} : memref<8x32xbf16, #tpu.memory_space<vmem>>, vector<8x32xbf16>,
    } else {
    }
    return
  }
  func.func @transform_0(%arg0: i32, %arg1: i32) -> (i32, i32) {
    %c0_i32 = arith.constant 0 : i32
    %c0_i32_0 = arith.constant 0 : i32
    return %arg0, %c0_i32 : i32, i32
  }
  func.func @transform_1(%arg0: i32, %arg1: i32) -> (i32, i32) {
    %c0_i32 = arith.constant 0 : i32
    %c0_i32_0 = arith.constant 0 : i32
    return %c0_i32, %arg1 : i32, i32
  }
  func.func @transform_2(%arg0: i32, %arg1: i32) -> (i32, i32) {
    %c0_i32 = arith.constant 0 : i32
    %c0_i32_0 = arith.constant 0 : i32
    return %c0_i32, %arg1 : i32, i32
  }
  func.func @transform_3(%arg0: i32, %arg1: i32) -> (i32, i32) {
    %c0_i32 = arith.constant 0 : i32
    %c0_i32_0 = arith.constant 0 : i32
    return %arg1, %c0_i32 : i32, i32
  }
  func.func @transform_4(%arg0: i32, %arg1: i32) -> (i32, i32) {
    %c0_i32 = arith.constant 0 : i32
    %c0_i32_0 = arith.constant 0 : i32
    %c0_i32_1 = arith.constant 0 : i32
    return %c0_i32, %c0_i32_0 : i32, i32
  }
  func.func @transform_5(%arg0: i32, %arg1: i32) -> (i32, i32) {
    %c0_i32 = arith.constant 0 : i32
    %c0_i32_0 = arith.constant 0 : i32
    %c0_i32_1 = arith.constant 0 : i32
    return %c0_i32, %c0_i32_0 : i32, i32
  }
  func.func @transform_6(%arg0: i32, %arg1: i32) -> (i32, i32) {
    %c0_i32 = arith.constant 0 : i32
    %c0_i32_0 = arith.constant 0 : i32
    %c0_i32_1 = arith.constant 0 : i32
    return %c0_i32, %c0_i32_0 : i32, i32
  }
  func.func @transform_7(%arg0: i32, %arg1: i32) -> (i32, i32) {
    %c0_i32 = arith.constant 0 : i32
    %c0_i32_0 = arith.constant 0 : i32
    return %arg0, %c0_i32 : i32, i32
  }
}

module attributes {stable_mosaic.version = 11 : i64} {
  func.func @_layernorm_kernel(%arg0: i32, %arg1: memref<8x32xbf16, #tpu.memory_space<vmem>>, %arg2: memref<1x32xf32, #tpu.memory_space<vmem>>, %arg3: memref<1x32xf32, #tpu.memory_space<vmem>>, %arg4: memref<8x32xf32, #tpu.memory_space<vmem>>) attributes {dimension_semantics = [#tpu.dimension_semantics<parallel>], iteration_bounds = array<i64: 2>, scalar_prefetch = 0 : i64, scratch_operands = 0 : i64, tpu.core_type = #tpu.core_type<tc>, window_params = [{transform_indices = @transform_0, window_bounds = array<i64: 8, 32>}, {pipeline_mode = #tpu.pipeline_mode<synchronous>, transform_indices = @transform_1, window_bounds = array<i64: 1, 32>}, {pipeline_mode = #tpu.pipeline_mode<synchronous>, transform_indices = @transform_2, window_bounds = array<i64: 1, 32>}, {transform_indices = @transform_3, window_bounds = array<i64: 8, 32>}]} {
    %c0 = arith.constant 0 : index
    %c0_0 = arith.constant 0 : index
    %0 = vector.load %arg1[%c0, %c0_0] : memref<8x32xbf16, #tpu.memory_space<vmem>>, vector<8x32xbf16>
    %1 = arith.extf %0 : vector<8x32xbf16> to vector<8x32xf32>
    %cst = arith.constant dense<0.000000e+00> : vector<8xf32>
    %2 = vector.multi_reduction <add>, %1, %cst [1] : vector<8x32xf32> to vector<8xf32>
    %3 = vector.shape_cast %2 : vector<8xf32> to vector<8x1xf32>
    %cst_1 = arith.constant 3.200000e+01 : f32
    %4 = vector.broadcast %cst_1 : f32 to vector<8x1xf32>
    %5 = arith.divf %3, %4 : vector<8x1xf32>
    %6 = vector.broadcast %5 : vector<8x1xf32> to vector<8x32xf32>
    %7 = arith.subf %1, %6 : vector<8x32xf32>
    %8 = vector.broadcast %5 : vector<8x1xf32> to vector<8x32xf32>
    %9 = arith.subf %1, %8 : vector<8x32xf32>
    %10 = arith.mulf %7, %9 : vector<8x32xf32>
    %cst_2 = arith.constant dense<0.000000e+00> : vector<8xf32>
    %11 = vector.multi_reduction <add>, %10, %cst_2 [1] : vector<8x32xf32> to vector<8xf32>
    %12 = vector.shape_cast %11 : vector<8xf32> to vector<8x1xf32>
    %cst_3 = arith.constant 3.200000e+01 : f32
    %13 = vector.broadcast %cst_3 : f32 to vector<8x1xf32>
    %14 = arith.divf %12, %13 : vector<8x1xf32>
    %15 = vector.broadcast %5 : vector<8x1xf32> to vector<8x32xf32>
    %16 = arith.subf %1, %15 : vector<8x32xf32>
    %cst_4 = arith.constant 9.99999974E-6 : f32
    %17 = vector.broadcast %cst_4 : f32 to vector<8x1xf32>
    %18 = arith.addf %14, %17 : vector<8x1xf32>
    %19 = math.rsqrt %18 : vector<8x1xf32>
    %20 = vector.broadcast %19 : vector<8x1xf32> to vector<8x32xf32>
    %21 = arith.mulf %16, %20 : vector<8x32xf32>
    %c0_5 = arith.constant 0 : index
    %c0_6 = arith.constant 0 : index
    %22 = vector.load %arg2[%c0_5, %c0_6] : memref<1x32xf32, #tpu.memory_space<vmem>>, vector<1x32xf32>
    %23 = vector.broadcast %22 : vector<1x32xf32> to vector<8x32xf32>
    %24 = arith.mulf %21, %23 : vector<8x32xf32>
    %c0_7 = arith.constant 0 : index
    %c0_8 = arith.constant 0 : index
    %25 = vector.load %arg3[%c0_7, %c0_8] : memref<1x32xf32, #tpu.memory_space<vmem>>, vector<1x32xf32>
    %26 = vector.broadcast %25 : vector<1x32xf32> to vector<8x32xf32>
    %27 = arith.addf %24, %26 : vector<8x32xf32>
    %c0_9 = arith.constant 0 : index
    %c0_10 = arith.constant 0 : index
    %28 = vector.load %arg4[%c0_9, %c0_10] : memref<8x32xf32, #tpu.memory_space<vmem>>, vector<8x32xf32>
    tpu.vector_store %arg4[%c0_9, %c0_10], %27 {strides = array<i32>} : memref<8x32xf32, #tpu.memory_space<vmem>>, vector<8x32xf32>,
    return
  }
  func.func @transform_0(%arg0: i32) -> (i32, i32) {
    %c0_i32 = arith.constant 0 : i32
    %c0_i32_0 = arith.constant 0 : i32
    return %arg0, %c0_i32 : i32, i32
  }
  func.func @transform_1(%arg0: i32) -> (i32, i32) {
    %c0_i32 = arith.constant 0 : i32
    %c0_i32_0 = arith.constant 0 : i32
    %c0_i32_1 = arith.constant 0 : i32
    return %c0_i32, %c0_i32_0 : i32, i32
  }
  func.func @transform_2(%arg0: i32) -> (i32, i32) {
    %c0_i32 = arith.constant 0 : i32
    %c0_i32_0 = arith.constant 0 : i32
    %c0_i32_1 = arith.constant 0 : i32
    return %c0_i32, %c0_i32_0 : i32, i32
  }
  func.func @transform_3(%arg0: i32) -> (i32, i32) {
    %c0_i32 = arith.constant 0 : i32
    %c0_i32_0 = arith.constant 0 : i32
    return %arg0, %c0_i32 : i32, i32
  }
}

</mosaic_0001>

<llo_original>
// kernel: transformer_forward.11
$region0: #{transformer_forward.11}
  #allocation0 [shape = 'u32[]', space=smem, size = 0x4, offset = 0x4, fixed_abs, tag = 'smem constant byte address 0x4 - core index']
  #allocation1 [shape = 'u32[144,128]{1,0:T(1,128)}', space=vmem, size = 0x12000, scoped, tag = 'internal scratch']
  #allocation2 [shape = 'f32[8,96]{1,0:T(8,128)}', space=vmem, size = 0x1000, scoped, tag = 'scratch operand']
  %s0 = inlined_call_operand.hbm [shape: bf16[16,32], index: 0, kind: input, shape index: {}]
  %s1 = inlined_call_operand.hbm [shape: bf16[32,96], index: 1, kind: input, shape index: {}]
  %s2 = inlined_call_operand.hbm [shape: f32[1,96], index: 2, kind: input, shape index: {}]
  %s3 = inlined_call_operand.hbm [shape: bf16[16,96], index: 3, kind: output, shape index: {}]
  %s4 = sld [smem:[#allocation0]]
  $region65: #{transformer_forward.11} parent=0
    _
  %s6 = ssub.s32 1, %s4
  %s7 = scalar_select 0, %s6, %s4
  $region1: #{transformer_forward.11} parent=0
    #allocation3 [shape = 'u8[4096]{0}', space=vmem, size = 0x1000, scoped, tag = 'input window, operand 0']
    #allocation4 [shape = 's32[2]{0}', space=sflag, size = 0x8, scoped, tag = 'scoped memory for transformer_forward.11']
    #allocation5 [shape = 's32[2]{0}', space=sflag, size = 0x8, scoped, tag = 'scoped memory for transformer_forward.11']
    #allocation6 [shape = 'u8[8192]{0}', space=vmem, size = 0x2000, scoped, tag = 'input window, operand 1, single buffered']
    #allocation7 [shape = 's32[1]{0}', space=sflag, size = 0x4, scoped, tag = 'scoped memory for transformer_forward.11']
    #allocation8 [shape = 'u8[512]{0}', space=vmem, size = 0x400, scoped, tag = 'input window, operand 2, single buffered']
    #allocation9 [shape = 'u8[4096]{0}', space=vmem, size = 0x1000, scoped, tag = 'output window, operand 0']
    %8 = vsyncpa [#allocation4], 0
    %s9 = scalar_lea.sflag [#allocation4], 1
    %10 = vsyncpa %s9, 0
    %11 = vsyncpa [#allocation7], 0
    %12 = vsyncpa [#allocation5], 0
    %s13 = scalar_lea.sflag [#allocation5], 1
    %14 = vsyncpa %s13, 0
    loop: start=0, step=1, limit=4
    $region2: #{transformer_forward.11} parent=1 // loop_pre_header
      _
    $region3: #{transformer_forward.11} parent=1 // loop_header
      %s16 = sphi 0, %s20
      %p17 = scmp.ge.s32.totalorder %s16, 4
      %s23 = sphi 0, %s42
      %s24 = sphi 0, %s38
      %s25 = sphi 0, %s34
      %s26 = sphi 0, %s23
      %s27 = sphi 0, %s24
      %s28 = sphi 0, %s25
      %s29 = sphi 0, %s26
      %s30 = sphi 0, %s27
      %s31 = sphi 0, %s28
      %s47 = sphi 0, %s49
      %s50 = sphi 0, %s47
      %s51 = sphi 0, %s50
      %s67 = sphi 0, %s51
      %s75 = sphi 0, %s77
      %s78 = sphi 0, %s75
      %s79 = sphi 0, %s78
      %s95 = sphi 0, %s79
      %s101 = sphi 0, %s103
      %s104 = sphi 0, %s101
      %s105 = sphi 0, %s104
      %s121 = sphi 0, %s105
      %s129 = sphi 0, %s131
      %s132 = sphi 0, %s129
      %s133 = sphi 0, %s132
      %s149 = sphi 0, %s133
    $region4: #{transformer_forward.11} parent=1 // loop_header_branch
      %19 = sbr.rel (%p17) target = $region8
    $region5: #{transformer_forward.11} parent=1 // loop_body
      %s21 = ssub.s32 %s16, 1
      %s22 = ssub.s32 %s16, 2
      %s32 = sadd.s32 1, %s25
      %p33 = scmp.ge.s32.totalorder %s32, 1
      %s34 = scalar_select %p33, 0, %s32
      %s35 = sadd.s32 1, %s24
      %s36 = scalar_select %p33, %s35, %s24
      %p37 = scmp.ge.s32.totalorder %s36, 1
      %s38 = scalar_select %p37, 0, %s36
      %s39 = sadd.s32 1, %s23
      %s40 = scalar_select %p37, %s39, %s23
      %p41 = scmp.ge.s32.totalorder %s40, 2
      %s42 = scalar_select %p41, 0, %s40
      %s43 = ssub.s32 %s23, %s42
      %s44 = ssub.s32 %s25, %s34
      %s45 = sor.u32 %s43, %s44
      %p46 = scmp.eq.s32.totalorder %s45, 0
      %s48 = sadd.s32 %s47, 1
      %s49 = scalar_select %p46, %s47, %s48
      %p52 = pneg %p46
      %p53 = scmp.eq.s32.totalorder %s16, 1
      %p54 = por %p52, %p53
      %p55 = scmp.ne.s32.totalorder %s47, %s50
      %p56 = scmp.eq.s32.totalorder %s16, 0
      %p57 = por %p55, %p56
      %p58 = scmp.ne.s32.totalorder %s47, %s50
      %p59 = scmp.eq.s32.totalorder %s21, 1
      %p60 = por %p58, %p59
      %p61 = scmp.ne.s32.totalorder %s50, %s51
      %p62 = scmp.eq.s32.totalorder %s21, 0
      %p63 = por %p61, %p62
      %p64 = scmp.ne.s32.totalorder %s50, %s51
      %p65 = scmp.eq.s32.totalorder %s22, 1
      %p66 = por %p64, %p65
      %p68 = scmp.ne.s32.totalorder %s51, %s67
      %p69 = scmp.eq.s32.totalorder %s22, 0
      %p70 = por %p68, %p69
      %s71 = ssub.s32 %s25, %s34
      %s72 = ssub.s32 %s24, %s38
      %s73 = sor.u32 %s71, %s72
      %p74 = scmp.eq.s32.totalorder %s73, 0
      %s76 = sadd.s32 %s75, 1
      %s77 = scalar_select %p74, %s75, %s76
      %p80 = pneg %p74
      %p81 = scmp.eq.s32.totalorder %s16, 1
      %p82 = por %p80, %p81
      %p83 = scmp.ne.s32.totalorder %s75, %s78
      %p84 = scmp.eq.s32.totalorder %s16, 0
      %p85 = por %p83, %p84
      %p86 = scmp.ne.s32.totalorder %s75, %s78
      %p87 = scmp.eq.s32.totalorder %s21, 1
      %p88 = por %p86, %p87
      %p89 = scmp.ne.s32.totalorder %s78, %s79
      %p90 = scmp.eq.s32.totalorder %s21, 0
      %p91 = por %p89, %p90
      %p92 = scmp.ne.s32.totalorder %s78, %s79
      %p93 = scmp.eq.s32.totalorder %s22, 1
      %p94 = por %p92, %p93
      %p96 = scmp.ne.s32.totalorder %s79, %s95
      %p97 = scmp.eq.s32.totalorder %s22, 0
      %p98 = por %p96, %p97
      %s99 = ssub.s32 %s24, %s38
      %p100 = scmp.eq.s32.totalorder %s99, 0
      %s102 = sadd.s32 %s101, 1
      %s103 = scalar_select %p100, %s101, %s102
      %p106 = pneg %p100
      %p107 = scmp.eq.s32.totalorder %s16, 1
      %p108 = por %p106, %p107
      %p109 = scmp.ne.s32.totalorder %s101, %s104
      %p110 = scmp.eq.s32.totalorder %s16, 0
      %p111 = por %p109, %p110
      %p112 = scmp.ne.s32.totalorder %s101, %s104
      %p113 = scmp.eq.s32.totalorder %s21, 1
      %p114 = por %p112, %p113
      %p115 = scmp.ne.s32.totalorder %s104, %s105
      %p116 = scmp.eq.s32.totalorder %s21, 0
      %p117 = por %p115, %p116
      %p118 = scmp.ne.s32.totalorder %s104, %s105
      %p119 = scmp.eq.s32.totalorder %s22, 1
      %p120 = por %p118, %p119
      %p122 = scmp.ne.s32.totalorder %s105, %s121
      %p123 = scmp.eq.s32.totalorder %s22, 0
      %p124 = por %p122, %p123
      %s125 = ssub.s32 %s23, %s42
      %s126 = ssub.s32 %s24, %s38
      %s127 = sor.u32 %s125, %s126
      %p128 = scmp.eq.s32.totalorder %s127, 0
      %s130 = sadd.s32 %s129, 1
      %s131 = scalar_select %p128, %s129, %s130
      %p134 = pneg %p128
      %p135 = scmp.eq.s32.totalorder %s16, 1
      %p136 = por %p134, %p135
      %p137 = scmp.ne.s32.totalorder %s129, %s132
      %p138 = scmp.eq.s32.totalorder %s16, 0
      %p139 = por %p137, %p138
      %p140 = scmp.ne.s32.totalorder %s129, %s132
      %p141 = scmp.eq.s32.totalorder %s21, 1
      %p142 = por %p140, %p141
      %p143 = scmp.ne.s32.totalorder %s132, %s133
      %p144 = scmp.eq.s32.totalorder %s21, 0
      %p145 = por %p143, %p144
      %p146 = scmp.ne.s32.totalorder %s132, %s133
      %p147 = scmp.eq.s32.totalorder %s22, 1
      %p148 = por %p146, %p147
      %p150 = scmp.ne.s32.totalorder %s133, %s149
      %p151 = scmp.eq.s32.totalorder %s22, 0
      %p152 = por %p150, %p151
      %p153 = scmp.le.s32.totalorder 1, %s16
      %p154 = scmp.lt.s32.totalorder %s16, 3
      %p155 = pnand %p153, %p154
      %p156 = pneg %p155
      // Predicated region
      $region9: #{transformer_forward.11} parent=5 // pred_check
        _
      $region10: #{transformer_forward.11} parent=5 // pred_check_branch
        %158 = sbr.rel (%p155) target = $region12
      $region11: #{transformer_forward.11} parent=5 // pred_region
        %s159 = ssub.s32 %s16, 1
        // Predicated region
        $region13: #{transformer_forward.11} parent=11 // pred_check
          %p160 = pneg %p91
        $region14: #{transformer_forward.11} parent=11 // pred_check_branch
          %162 = sbr.rel (%p160) target = $region16
        $region15: #{transformer_forward.11} parent=11 // pred_region
          %s163 = smul.u32 4, %s28
          %s165 = ssub.s32 256, 256
          %166 = vsyncadd [#allocation7], %s165
          %s167 = sadd.s32 %s27, %s163
          %s168 = smul.addr %s167, 64
          %s169 = scalar_lea.hbm %s1, %s168
          %s170 = sshll.u32 [#allocation6], 4
          %s171 = int_to_ptr.vmem [resolvable:$true] %s170
          %176 = dma.hbm_to_vmem [thread:$0]  %s169, 256, %s171, [#allocation7], 64, 64, 4
        $region16: #{transformer_forward.11} parent=11 // pred_fallthru
          _
        // Predicated region
        $region17: #{transformer_forward.11} parent=11 // pred_check
          %p177 = pneg %p117
        $region18: #{transformer_forward.11} parent=11 // pred_check_branch
          %179 = sbr.rel (%p177) target = $region20
        $region19: #{transformer_forward.11} parent=11 // pred_region
          %s181 = ssub.s32 16, 16
          %182 = vsyncadd [#allocation7], %s181
          %s183 = smul.addr %s27, 16
          %s184 = scalar_lea.hbm %s2, %s183
          %s186 = sshll.u32 [#allocation8], 4
          %s187 = int_to_ptr.vmem [resolvable:$true] %s186
          %189 = dma.hbm_to_vmem [thread:$0]  %s184, 16, %s187, [#allocation7]
        $region20: #{transformer_forward.11} parent=11 // pred_fallthru
          _
      $region12: #{transformer_forward.11} parent=5 // pred_fallthru
        _
      %p190 = scmp.lt.s32.totalorder %s16, 2
      // Predicated region
      $region21: #{transformer_forward.11} parent=5 // pred_check
        %p191 = pneg %p190
      $region22: #{transformer_forward.11} parent=5 // pred_check_branch
        %193 = sbr.rel (%p191) target = $region24
      $region23: #{transformer_forward.11} parent=5 // pred_region
        // Predicated region
        $region25: #{transformer_forward.11} parent=23 // pred_check
          %p194 = pneg %p57
        $region26: #{transformer_forward.11} parent=23 // pred_check_branch
          %196 = sbr.rel (%p194) target = $region28
        $region27: #{transformer_forward.11} parent=23 // pred_region
          %s197 = sand.u32 %s47, 1
          %s198 = scalar_lea.sflag [#allocation4], %s197
          %s199 = sand.u32 %s47, 1
          %s200 = smul.addr %s199, 4
          %s201 = scalar_lea.vmem [#allocation3], %s200
          %s203 = ssub.s32 64, 64
          %204 = vsyncadd %s198, %s203
          %s205 = sadd.s32 %s25, %s23
          %s206 = smul.addr %s205, 64
          %s207 = scalar_lea.hbm %s0, %s206
          %s209 = sshll.u32 %s201, 4
          %s210 = int_to_ptr.vmem [resolvable:$true] %s209
          %212 = dma.hbm_to_vmem [thread:$0]  %s207, 64, %s210, %s198
        $region28: #{transformer_forward.11} parent=23 // pred_fallthru
          _
      $region24: #{transformer_forward.11} parent=5 // pred_fallthru
        _
      %p213 = scmp.le.s32.totalorder 1, %s16
      %p214 = scmp.lt.s32.totalorder %s16, 3
      %p215 = pnand %p213, %p214
      %p216 = pneg %p215
      // Predicated region
      $region29: #{transformer_forward.11} parent=5 // pred_check
        _
      $region30: #{transformer_forward.11} parent=5 // pred_check_branch
        %218 = sbr.rel (%p215) target = $region32
      $region31: #{transformer_forward.11} parent=5 // pred_region
        %s219 = ssub.s32 %s16, 1
        %s220 = sand.u32 %s50, 1
        %s221 = scalar_lea.sflag [#allocation4], %s220
        %s222 = sand.u32 %s50, 1
        %s223 = smul.addr %s222, 4
        %s224 = scalar_lea.vmem [#allocation3], %s223
        // Predicated region
        $region33: #{transformer_forward.11} parent=31 // pred_check
          %p225 = pneg %p63
        $region34: #{transformer_forward.11} parent=31 // pred_check_branch
          %227 = sbr.rel (%p225) target = $region36
        $region35: #{transformer_forward.11} parent=31 // pred_region
          %228 = dma.done %s221, 64
        $region36: #{transformer_forward.11} parent=31 // pred_fallthru
          _
        // Predicated region
        $region37: #{transformer_forward.11} parent=31 // pred_check
          %p229 = pneg %p91
        $region38: #{transformer_forward.11} parent=31 // pred_check_branch
          %231 = sbr.rel (%p229) target = $region40
        $region39: #{transformer_forward.11} parent=31 // pred_region
          %232 = dma.done [#allocation7], 256
        $region40: #{transformer_forward.11} parent=31 // pred_fallthru
          _
        // Predicated region
        $region41: #{transformer_forward.11} parent=31 // pred_check
          %p233 = pneg %p117
        $region42: #{transformer_forward.11} parent=31 // pred_check_branch
          %235 = sbr.rel (%p233) target = $region44
        $region43: #{transformer_forward.11} parent=31 // pred_region
          %236 = dma.done [#allocation7], 16
        $region44: #{transformer_forward.11} parent=31 // pred_fallthru
          _
        %s237 = sand.u32 %s50, 1
        %s238 = scalar_lea.sflag [#allocation4], %s237
        %s239 = sand.u32 %s50, 1
        %s240 = smul.addr %s239, 4
        %s241 = scalar_lea.vmem [#allocation3], %s240
        %p242 = pneg %p63
        %p243 = pneg %p60
        %p244 = pneg %p91
        %p245 = pneg %p88
        %p246 = pneg %p117
        %p247 = pneg %p114
        %p248 = pneg %p145
        %p249 = pneg %p142
        %s250 = sand.u32 %s132, 1
        %s251 = scalar_lea.sflag [#allocation5], %s250
        %s252 = sand.u32 %s132, 1
        %s253 = smul.addr %s252, 4
        %s254 = scalar_lea.vmem [#allocation9], %s253
        %s255 = smul.u32 4, %s28
        %p257 = scmp.eq.s32.totalorder %s28, 0
        // Predicated region
        $region45: #{transformer_forward.11} parent=31 // pred_check
          %p258 = pneg %p257
        $region46: #{transformer_forward.11} parent=31 // pred_check_branch
          %260 = sbr.rel (%p258) target = $region48
        $region47: #{transformer_forward.11} parent=31 // pred_region
          %vm261 = vcmask 785408
          %262 = vst.msk [vmem:[#allocation2] sm:$0xff] %vm261, 0.0
        $region48: #{transformer_forward.11} parent=31 // pred_fallthru
          _
        %v263 = vld [vmem:[#allocation2] sm:$0xff]
        %v264 = vld [vmem:[%s224] sm:$0xf]
        %v265 = vld [vmem:[#allocation6] sm:$0xf]
        %v266 = vld [vmem:[#allocation6 + $0x4] sm:$0xf]
        %v267 = vld [vmem:[#allocation6 + $0x8] sm:$0xf]
        %v268 = vld [vmem:[#allocation6 + $0xc] sm:$0xf]
        %v273 = vunpack.c.l.b16 %v265
        %v274 = vunpack.c.l.b16 %v266
        %v275 = vunpack.c.l.b16 %v267
        %v276 = vunpack.c.l.b16 %v268
        %v277 = vpack.c.b16 %v274, %v273
        %v278 = vpack.c.b16 %v276, %v275
        %vm281 = vcmask 261120
        %v283 = vsel %vm281, %v264, 0
        %285 = vmatprep.subr.bf16.mxu0 0
        %286 = vmatpush1.bf16.msra.mxu0 %v277
        %287 = vmatprep.subr.bf16.mxu0 0
        %288 = vmatpush1.bf16.msra.mxu0 %v278
        %289 = vmatprep.subr.bf16.mxu0 0
        %290 = vmatpush1.bf16.msra.mxu0 0
        %291 = vmatprep.subr.bf16.mxu0 0
        %292 = vmatpush1.bf16.msra.mxu0 0
        %293 = vmatprep.subr.bf16.mxu0 0
        %294 = vmatpush1.bf16.msra.mxu0 0
        %295 = vmatprep.subr.bf16.mxu0 0
        %296 = vmatpush1.bf16.msra.mxu0 0
        %297 = vmatprep.subr.bf16.mxu0 0
        %298 = vmatpush1.bf16.msra.mxu0 0
        %299 = vmatprep.subr.bf16.mxu0 0
        %300 = vmatpush1.bf16.msra.mxu0 0
        %301 = vmatprep.subr.bf16.mxu0 0
        %302 = vmatpush1.bf16.msra.mxu0 0
        %303 = vmatprep.subr.bf16.mxu0 0
        %304 = vmatpush1.bf16.msra.mxu0 0
        %305 = vmatprep.subr.bf16.mxu0 0
        %306 = vmatpush1.bf16.msra.mxu0 0
        %307 = vmatprep.subr.bf16.mxu0 0
        %308 = vmatpush1.bf16.msra.mxu0 0
        %309 = vmatprep.subr.bf16.mxu0 0
        %310 = vmatpush1.bf16.msra.mxu0 0
        %311 = vmatprep.subr.bf16.mxu0 0
        %312 = vmatpush1.bf16.msra.mxu0 0
        %313 = vmatprep.subr.bf16.mxu0 0
        %314 = vmatpush1.bf16.msra.mxu0 0
        %315 = vmatprep.subr.bf16.mxu0 0
        %316 = vmatpush1.bf16.msra.mxu0 0
        %317 = vmatprep.mubr.bf16.mxu0 0
        %318 = vmatmul.mubr.bf16.gmra.mrb[0].mxu0 %v283
        %v319 = vpop.f32.mrb[0].mxu0
        %v320 = vadd.f32 0.0, %v319
        %v321 = vpop.f32.mrb[0].mxu0
        %v322 = vpop.f32.mrb[0].mxu0
        %v323 = vpop.f32.mrb[0].mxu0
        %324 = vdwg.mxu0
        %v325 = vadd.f32 %v263, %v320
        %vm326 = vcmask 785408
        %327 = vst.msk [vmem:[#allocation2] sm:$0xff] %vm326, %v325
        // Predicated region
        $region49: #{transformer_forward.11} parent=31 // pred_check
          %p328 = pneg %p257
        $region50: #{transformer_forward.11} parent=31 // pred_check_branch
          %330 = sbr.rel (%p328) target = $region52
        $region51: #{transformer_forward.11} parent=31 // pred_region
          %v331 = vld [vmem:[#allocation2] sm:$0xff]
          %v332 = vld [vmem:[#allocation8] sm:$0x1]
          %v334 = vlaneseq
          %v335 = vshrl.u32 %v334, 7
          %v336 = vsub.s32 0, %v335
          %v337 = vrot.slane %v332, %v336
          %v339 = vadd.f32 %v331, %v337
          %v340 = vpack.c.bf16 %v339, %v339
          %vm341 = vcmask 781312
          %342 = vst.msk [vmem:[%s254] sm:$0xf] %vm341, %v340
        $region52: #{transformer_forward.11} parent=31 // pred_fallthru
          _
        %s343 = sand.u32 %s132, 1
        %s344 = scalar_lea.sflag [#allocation5], %s343
        %s345 = sand.u32 %s132, 1
        %s346 = smul.addr %s345, 4
        %s347 = scalar_lea.vmem [#allocation9], %s346
        // Predicated region
        $region53: #{transformer_forward.11} parent=31 // pred_check
          %p348 = pneg %p142
        $region54: #{transformer_forward.11} parent=31 // pred_check_branch
          %350 = sbr.rel (%p348) target = $region56
        $region55: #{transformer_forward.11} parent=31 // pred_region
          %s352 = ssub.s32 64, 64
          %353 = vsyncadd %s344, %s352
          %s354 = sadd.s32 %s27, %s26
          %s355 = smul.addr %s354, 64
          %s356 = scalar_lea.hbm %s3, %s355
          %s358 = sshll.u32 %s347, 4
          %s359 = int_to_ptr.vmem [resolvable:$true] %s358
          %361 = dma.vmem_to_hbm [thread:$0]  %s359, 64, %s356, %s344
        $region56: #{transformer_forward.11} parent=31 // pred_fallthru
          _
      $region32: #{transformer_forward.11} parent=5 // pred_fallthru
        _
      %p362 = scmp.le.s32.totalorder 2, %s16
      // Predicated region
      $region57: #{transformer_forward.11} parent=5 // pred_check
        %p363 = pneg %p362
      $region58: #{transformer_forward.11} parent=5 // pred_check_branch
        %365 = sbr.rel (%p363) target = $region60
      $region59: #{transformer_forward.11} parent=5 // pred_region
        %s366 = ssub.s32 %s16, 2
        // Predicated region
        $region61: #{transformer_forward.11} parent=59 // pred_check
          %p367 = pneg %p148
        $region62: #{transformer_forward.11} parent=59 // pred_check_branch
          %369 = sbr.rel (%p367) target = $region64
        $region63: #{transformer_forward.11} parent=59 // pred_region
          %s370 = sand.u32 %s133, 1
          %s371 = scalar_lea.sflag [#allocation5], %s370
          %s372 = sand.u32 %s133, 1
          %s373 = smul.addr %s372, 4
          %s374 = scalar_lea.vmem [#allocation9], %s373
          %375 = dma.done %s371, 64
        $region64: #{transformer_forward.11} parent=59 // pred_fallthru
          _
      $region60: #{transformer_forward.11} parent=5 // pred_fallthru
        _
    $region6: #{transformer_forward.11} parent=1 // loop_footer
      %s20 = sadd.s32 1, %s16
    $region7: #{transformer_forward.11} parent=1 // loop_footer_branch
      %15 = sbr.rel target = $region3
    $region8: #{transformer_forward.11} parent=1 // loop_exit
      _
    %376 = vsyncpa [#allocation4], 1
    %s377 = scalar_lea.sflag [#allocation4], 1
    %378 = vsyncpa %s377, 1
    %379 = vsyncpa [#allocation7], 1
    %380 = vsyncpa [#allocation5], 1
    %s381 = scalar_lea.sflag [#allocation5], 1
    %382 = vsyncpa %s381, 1

// kernel: transformer_forward.10
$region0: #{transformer_forward.10}
  #allocation0 [shape = 'u32[]', space=smem, size = 0x4, offset = 0x4, fixed_abs, tag = 'smem constant byte address 0x4 - core index']
  #allocation1 [shape = 'u32[144,128]{1,0:T(1,128)}', space=vmem, size = 0x12000, scoped, tag = 'internal scratch']
  #allocation2 [shape = 'f32[8,32]{1,0:T(8,128)}', space=vmem, size = 0x1000, scoped, tag = 'scratch operand']
  %s0 = inlined_call_operand.hbm [shape: f32[16,16], index: 0, kind: input, shape index: {}]
  %s1 = inlined_call_operand.hbm [shape: bf16[16,32], index: 1, kind: input, shape index: {}]
  %s2 = inlined_call_operand.hbm [shape: f32[1,32], index: 2, kind: input, shape index: {}]
  %s3 = inlined_call_operand.hbm [shape: bf16[16,32], index: 3, kind: output, shape index: {}]
  %s4 = sld [smem:[#allocation0]]
  $region65: #{transformer_forward.10} parent=0
    _
  %s6 = ssub.s32 1, %s4
  %s7 = scalar_select 0, %s6, %s4
  $region1: #{transformer_forward.10} parent=0
    #allocation3 [shape = 'u8[8192]{0}', space=vmem, size = 0x2000, scoped, tag = 'input window, operand 0']
    #allocation4 [shape = 's32[2]{0}', space=sflag, size = 0x8, scoped, tag = 'scoped memory for transformer_forward.10']
    #allocation5 [shape = 's32[2]{0}', space=sflag, size = 0x8, scoped, tag = 'scoped memory for transformer_forward.10']
    #allocation6 [shape = 'u8[4096]{0}', space=vmem, size = 0x1000, scoped, tag = 'input window, operand 1, single buffered']
    #allocation7 [shape = 's32[1]{0}', space=sflag, size = 0x4, scoped, tag = 'scoped memory for transformer_forward.10']
    #allocation8 [shape = 'u8[512]{0}', space=vmem, size = 0x400, scoped, tag = 'input window, operand 2, single buffered']
    #allocation9 [shape = 'u8[4096]{0}', space=vmem, size = 0x1000, scoped, tag = 'output window, operand 0']
    %8 = vsyncpa [#allocation4], 0
    %s9 = scalar_lea.sflag [#allocation4], 1
    %10 = vsyncpa %s9, 0
    %11 = vsyncpa [#allocation7], 0
    %12 = vsyncpa [#allocation5], 0
    %s13 = scalar_lea.sflag [#allocation5], 1
    %14 = vsyncpa %s13, 0
    loop: start=0, step=1, limit=4
    $region2: #{transformer_forward.10} parent=1 // loop_pre_header
      _
    $region3: #{transformer_forward.10} parent=1 // loop_header
      %s16 = sphi 0, %s20
      %p17 = scmp.ge.s32.totalorder %s16, 4
      %s23 = sphi 0, %s42
      %s24 = sphi 0, %s38
      %s25 = sphi 0, %s34
      %s26 = sphi 0, %s23
      %s27 = sphi 0, %s24
      %s28 = sphi 0, %s25
      %s29 = sphi 0, %s26
      %s30 = sphi 0, %s27
      %s31 = sphi 0, %s28
      %s47 = sphi 0, %s49
      %s50 = sphi 0, %s47
      %s51 = sphi 0, %s50
      %s67 = sphi 0, %s51
      %s75 = sphi 0, %s77
      %s78 = sphi 0, %s75
      %s79 = sphi 0, %s78
      %s95 = sphi 0, %s79
      %s101 = sphi 0, %s103
      %s104 = sphi 0, %s101
      %s105 = sphi 0, %s104
      %s121 = sphi 0, %s105
      %s129 = sphi 0, %s131
      %s132 = sphi 0, %s129
      %s133 = sphi 0, %s132
      %s149 = sphi 0, %s133
    $region4: #{transformer_forward.10} parent=1 // loop_header_branch
      %19 = sbr.rel (%p17) target = $region8
    $region5: #{transformer_forward.10} parent=1 // loop_body
      %s21 = ssub.s32 %s16, 1
      %s22 = ssub.s32 %s16, 2
      %s32 = sadd.s32 1, %s25
      %p33 = scmp.ge.s32.totalorder %s32, 1
      %s34 = scalar_select %p33, 0, %s32
      %s35 = sadd.s32 1, %s24
      %s36 = scalar_select %p33, %s35, %s24
      %p37 = scmp.ge.s32.totalorder %s36, 1
      %s38 = scalar_select %p37, 0, %s36
      %s39 = sadd.s32 1, %s23
      %s40 = scalar_select %p37, %s39, %s23
      %p41 = scmp.ge.s32.totalorder %s40, 2
      %s42 = scalar_select %p41, 0, %s40
      %s43 = ssub.s32 %s23, %s42
      %s44 = ssub.s32 %s25, %s34
      %s45 = sor.u32 %s43, %s44
      %p46 = scmp.eq.s32.totalorder %s45, 0
      %s48 = sadd.s32 %s47, 1
      %s49 = scalar_select %p46, %s47, %s48
      %p52 = pneg %p46
      %p53 = scmp.eq.s32.totalorder %s16, 1
      %p54 = por %p52, %p53
      %p55 = scmp.ne.s32.totalorder %s47, %s50
      %p56 = scmp.eq.s32.totalorder %s16, 0
      %p57 = por %p55, %p56
      %p58 = scmp.ne.s32.totalorder %s47, %s50
      %p59 = scmp.eq.s32.totalorder %s21, 1
      %p60 = por %p58, %p59
      %p61 = scmp.ne.s32.totalorder %s50, %s51
      %p62 = scmp.eq.s32.totalorder %s21, 0
      %p63 = por %p61, %p62
      %p64 = scmp.ne.s32.totalorder %s50, %s51
      %p65 = scmp.eq.s32.totalorder %s22, 1
      %p66 = por %p64, %p65
      %p68 = scmp.ne.s32.totalorder %s51, %s67
      %p69 = scmp.eq.s32.totalorder %s22, 0
      %p70 = por %p68, %p69
      %s71 = ssub.s32 %s25, %s34
      %s72 = ssub.s32 %s24, %s38
      %s73 = sor.u32 %s71, %s72
      %p74 = scmp.eq.s32.totalorder %s73, 0
      %s76 = sadd.s32 %s75, 1
      %s77 = scalar_select %p74, %s75, %s76
      %p80 = pneg %p74
      %p81 = scmp.eq.s32.totalorder %s16, 1
      %p82 = por %p80, %p81
      %p83 = scmp.ne.s32.totalorder %s75, %s78
      %p84 = scmp.eq.s32.totalorder %s16, 0
      %p85 = por %p83, %p84
      %p86 = scmp.ne.s32.totalorder %s75, %s78
      %p87 = scmp.eq.s32.totalorder %s21, 1
      %p88 = por %p86, %p87
      %p89 = scmp.ne.s32.totalorder %s78, %s79
      %p90 = scmp.eq.s32.totalorder %s21, 0
      %p91 = por %p89, %p90
      %p92 = scmp.ne.s32.totalorder %s78, %s79
      %p93 = scmp.eq.s32.totalorder %s22, 1
      %p94 = por %p92, %p93
      %p96 = scmp.ne.s32.totalorder %s79, %s95
      %p97 = scmp.eq.s32.totalorder %s22, 0
      %p98 = por %p96, %p97
      %s99 = ssub.s32 %s24, %s38
      %p100 = scmp.eq.s32.totalorder %s99, 0
      %s102 = sadd.s32 %s101, 1
      %s103 = scalar_select %p100, %s101, %s102
      %p106 = pneg %p100
      %p107 = scmp.eq.s32.totalorder %s16, 1
      %p108 = por %p106, %p107
      %p109 = scmp.ne.s32.totalorder %s101, %s104
      %p110 = scmp.eq.s32.totalorder %s16, 0
      %p111 = por %p109, %p110
      %p112 = scmp.ne.s32.totalorder %s101, %s104
      %p113 = scmp.eq.s32.totalorder %s21, 1
      %p114 = por %p112, %p113
      %p115 = scmp.ne.s32.totalorder %s104, %s105
      %p116 = scmp.eq.s32.totalorder %s21, 0
      %p117 = por %p115, %p116
      %p118 = scmp.ne.s32.totalorder %s104, %s105
      %p119 = scmp.eq.s32.totalorder %s22, 1
      %p120 = por %p118, %p119
      %p122 = scmp.ne.s32.totalorder %s105, %s121
      %p123 = scmp.eq.s32.totalorder %s22, 0
      %p124 = por %p122, %p123
      %s125 = ssub.s32 %s23, %s42
      %s126 = ssub.s32 %s24, %s38
      %s127 = sor.u32 %s125, %s126
      %p128 = scmp.eq.s32.totalorder %s127, 0
      %s130 = sadd.s32 %s129, 1
      %s131 = scalar_select %p128, %s129, %s130
      %p134 = pneg %p128
      %p135 = scmp.eq.s32.totalorder %s16, 1
      %p136 = por %p134, %p135
      %p137 = scmp.ne.s32.totalorder %s129, %s132
      %p138 = scmp.eq.s32.totalorder %s16, 0
      %p139 = por %p137, %p138
      %p140 = scmp.ne.s32.totalorder %s129, %s132
      %p141 = scmp.eq.s32.totalorder %s21, 1
      %p142 = por %p140, %p141
      %p143 = scmp.ne.s32.totalorder %s132, %s133
      %p144 = scmp.eq.s32.totalorder %s21, 0
      %p145 = por %p143, %p144
      %p146 = scmp.ne.s32.totalorder %s132, %s133
      %p147 = scmp.eq.s32.totalorder %s22, 1
      %p148 = por %p146, %p147
      %p150 = scmp.ne.s32.totalorder %s133, %s149
      %p151 = scmp.eq.s32.totalorder %s22, 0
      %p152 = por %p150, %p151
      %p153 = scmp.le.s32.totalorder 1, %s16
      %p154 = scmp.lt.s32.totalorder %s16, 3
      %p155 = pnand %p153, %p154
      %p156 = pneg %p155
      // Predicated region
      $region9: #{transformer_forward.10} parent=5 // pred_check
        _
      $region10: #{transformer_forward.10} parent=5 // pred_check_branch
        %158 = sbr.rel (%p155) target = $region12
      $region11: #{transformer_forward.10} parent=5 // pred_region
        %s159 = ssub.s32 %s16, 1
        // Predicated region
        $region13: #{transformer_forward.10} parent=11 // pred_check
          %p160 = pneg %p91
        $region14: #{transformer_forward.10} parent=11 // pred_check_branch
          %162 = sbr.rel (%p160) target = $region16
        $region15: #{transformer_forward.10} parent=11 // pred_region
          %s163 = smul.u32 2, %s28
          %s165 = ssub.s32 128, 128
          %166 = vsyncadd [#allocation7], %s165
          %s167 = sadd.s32 %s27, %s163
          %s168 = smul.addr %s167, 64
          %s169 = scalar_lea.hbm %s1, %s168
          %s170 = sshll.u32 [#allocation6], 4
          %s171 = int_to_ptr.vmem [resolvable:$true] %s170
          %176 = dma.hbm_to_vmem [thread:$0]  %s169, 128, %s171, [#allocation7], 64, 64, 4
        $region16: #{transformer_forward.10} parent=11 // pred_fallthru
          _
        // Predicated region
        $region17: #{transformer_forward.10} parent=11 // pred_check
          %p177 = pneg %p117
        $region18: #{transformer_forward.10} parent=11 // pred_check_branch
          %179 = sbr.rel (%p177) target = $region20
        $region19: #{transformer_forward.10} parent=11 // pred_region
          %s181 = ssub.s32 16, 16
          %182 = vsyncadd [#allocation7], %s181
          %s183 = smul.addr %s27, 16
          %s184 = scalar_lea.hbm %s2, %s183
          %s186 = sshll.u32 [#allocation8], 4
          %s187 = int_to_ptr.vmem [resolvable:$true] %s186
          %189 = dma.hbm_to_vmem [thread:$0]  %s184, 16, %s187, [#allocation7]
        $region20: #{transformer_forward.10} parent=11 // pred_fallthru
          _
      $region12: #{transformer_forward.10} parent=5 // pred_fallthru
        _
      %p190 = scmp.lt.s32.totalorder %s16, 2
      // Predicated region
      $region21: #{transformer_forward.10} parent=5 // pred_check
        %p191 = pneg %p190
      $region22: #{transformer_forward.10} parent=5 // pred_check_branch
        %193 = sbr.rel (%p191) target = $region24
      $region23: #{transformer_forward.10} parent=5 // pred_region
        // Predicated region
        $region25: #{transformer_forward.10} parent=23 // pred_check
          %p194 = pneg %p57
        $region26: #{transformer_forward.10} parent=23 // pred_check_branch
          %196 = sbr.rel (%p194) target = $region28
        $region27: #{transformer_forward.10} parent=23 // pred_region
          %s197 = sand.u32 %s47, 1
          %s198 = scalar_lea.sflag [#allocation4], %s197
          %s199 = sand.u32 %s47, 1
          %s200 = smul.addr %s199, 8
          %s201 = scalar_lea.vmem [#allocation3], %s200
          %s203 = ssub.s32 128, 128
          %204 = vsyncadd %s198, %s203
          %s205 = sadd.s32 %s25, %s23
          %s206 = smul.addr %s205, 128
          %s207 = scalar_lea.hbm %s0, %s206
          %s209 = sshll.u32 %s201, 4
          %s210 = int_to_ptr.vmem [resolvable:$true] %s209
          %212 = dma.hbm_to_vmem [thread:$0]  %s207, 128, %s210, %s198
        $region28: #{transformer_forward.10} parent=23 // pred_fallthru
          _
      $region24: #{transformer_forward.10} parent=5 // pred_fallthru
        _
      %p213 = scmp.le.s32.totalorder 1, %s16
      %p214 = scmp.lt.s32.totalorder %s16, 3
      %p215 = pnand %p213, %p214
      %p216 = pneg %p215
      // Predicated region
      $region29: #{transformer_forward.10} parent=5 // pred_check
        _
      $region30: #{transformer_forward.10} parent=5 // pred_check_branch
        %218 = sbr.rel (%p215) target = $region32
      $region31: #{transformer_forward.10} parent=5 // pred_region
        %s219 = ssub.s32 %s16, 1
        %s220 = sand.u32 %s50, 1
        %s221 = scalar_lea.sflag [#allocation4], %s220
        %s222 = sand.u32 %s50, 1
        %s223 = smul.addr %s222, 8
        %s224 = scalar_lea.vmem [#allocation3], %s223
        // Predicated region
        $region33: #{transformer_forward.10} parent=31 // pred_check
          %p225 = pneg %p63
        $region34: #{transformer_forward.10} parent=31 // pred_check_branch
          %227 = sbr.rel (%p225) target = $region36
        $region35: #{transformer_forward.10} parent=31 // pred_region
          %228 = dma.done %s221, 128
        $region36: #{transformer_forward.10} parent=31 // pred_fallthru
          _
        // Predicated region
        $region37: #{transformer_forward.10} parent=31 // pred_check
          %p229 = pneg %p91
        $region38: #{transformer_forward.10} parent=31 // pred_check_branch
          %231 = sbr.rel (%p229) target = $region40
        $region39: #{transformer_forward.10} parent=31 // pred_region
          %232 = dma.done [#allocation7], 128
        $region40: #{transformer_forward.10} parent=31 // pred_fallthru
          _
        // Predicated region
        $region41: #{transformer_forward.10} parent=31 // pred_check
          %p233 = pneg %p117
        $region42: #{transformer_forward.10} parent=31 // pred_check_branch
          %235 = sbr.rel (%p233) target = $region44
        $region43: #{transformer_forward.10} parent=31 // pred_region
          %236 = dma.done [#allocation7], 16
        $region44: #{transformer_forward.10} parent=31 // pred_fallthru
          _
        %s237 = sand.u32 %s50, 1
        %s238 = scalar_lea.sflag [#allocation4], %s237
        %s239 = sand.u32 %s50, 1
        %s240 = smul.addr %s239, 8
        %s241 = scalar_lea.vmem [#allocation3], %s240
        %p242 = pneg %p63
        %p243 = pneg %p60
        %p244 = pneg %p91
        %p245 = pneg %p88
        %p246 = pneg %p117
        %p247 = pneg %p114
        %p248 = pneg %p145
        %p249 = pneg %p142
        %s250 = sand.u32 %s132, 1
        %s251 = scalar_lea.sflag [#allocation5], %s250
        %s252 = sand.u32 %s132, 1
        %s253 = smul.addr %s252, 4
        %s254 = scalar_lea.vmem [#allocation9], %s253
        %s255 = smul.u32 2, %s28
        %p257 = scmp.eq.s32.totalorder %s28, 0
        // Predicated region
        $region45: #{transformer_forward.10} parent=31 // pred_check
          %p258 = pneg %p257
        $region46: #{transformer_forward.10} parent=31 // pred_check_branch
          %260 = sbr.rel (%p258) target = $region48
        $region47: #{transformer_forward.10} parent=31 // pred_region
          %vm261 = vcmask 261120
          %262 = vst.msk [vmem:[#allocation2] sm:$0xff] %vm261, 0.0
        $region48: #{transformer_forward.10} parent=31 // pred_fallthru
          _
        %v263 = vld [vmem:[#allocation2] sm:$0xff]
        %v264 = vld [vmem:[%s224] sm:$0xff]
        %v265 = vpack.c.bf16 %v264, %v264
        %v266 = vld [vmem:[#allocation6] sm:$0xf]
        %v267 = vld [vmem:[#allocation6 + $0x4] sm:$0xf]
        %v270 = vunpack.c.l.b16 %v266
        %v271 = vunpack.c.l.b16 %v267
        %v272 = vpack.c.b16 %v271, %v270
        %vm274 = vcmask 130048
        %v276 = vsel %vm274, %v265, 0
        %278 = vmatprep.subr.bf16.mxu0 0
        %279 = vmatpush1.bf16.msra.mxu0 %v272
        %280 = vmatprep.subr.bf16.mxu0 0
        %281 = vmatpush1.bf16.msra.mxu0 0
        %282 = vmatprep.subr.bf16.mxu0 0
        %283 = vmatpush1.bf16.msra.mxu0 0
        %284 = vmatprep.subr.bf16.mxu0 0
        %285 = vmatpush1.bf16.msra.mxu0 0
        %286 = vmatprep.subr.bf16.mxu0 0
        %287 = vmatpush1.bf16.msra.mxu0 0
        %288 = vmatprep.subr.bf16.mxu0 0
        %289 = vmatpush1.bf16.msra.mxu0 0
        %290 = vmatprep.subr.bf16.mxu0 0
        %291 = vmatpush1.bf16.msra.mxu0 0
        %292 = vmatprep.subr.bf16.mxu0 0
        %293 = vmatpush1.bf16.msra.mxu0 0
        %294 = vmatprep.subr.bf16.mxu0 0
        %295 = vmatpush1.bf16.msra.mxu0 0
        %296 = vmatprep.subr.bf16.mxu0 0
        %297 = vmatpush1.bf16.msra.mxu0 0
        %298 = vmatprep.subr.bf16.mxu0 0
        %299 = vmatpush1.bf16.msra.mxu0 0
        %300 = vmatprep.subr.bf16.mxu0 0
        %301 = vmatpush1.bf16.msra.mxu0 0
        %302 = vmatprep.subr.bf16.mxu0 0
        %303 = vmatpush1.bf16.msra.mxu0 0
        %304 = vmatprep.subr.bf16.mxu0 0
        %305 = vmatpush1.bf16.msra.mxu0 0
        %306 = vmatprep.subr.bf16.mxu0 0
        %307 = vmatpush1.bf16.msra.mxu0 0
        %308 = vmatprep.subr.bf16.mxu0 0
        %309 = vmatpush1.bf16.msra.mxu0 0
        %310 = vmatprep.mubr.bf16.mxu0 0
        %311 = vmatmul.mubr.bf16.gmra.mrb[0].mxu0 %v276
        %v312 = vpop.f32.mrb[0].mxu0
        %v313 = vadd.f32 0.0, %v312
        %v314 = vpop.f32.mrb[0].mxu0
        %v315 = vpop.f32.mrb[0].mxu0
        %v316 = vpop.f32.mrb[0].mxu0
        %317 = vdwg.mxu0
        %v318 = vadd.f32 %v263, %v313
        %vm319 = vcmask 261120
        %320 = vst.msk [vmem:[#allocation2] sm:$0xff] %vm319, %v318
        // Predicated region
        $region49: #{transformer_forward.10} parent=31 // pred_check
          %p321 = pneg %p257
        $region50: #{transformer_forward.10} parent=31 // pred_check_branch
          %323 = sbr.rel (%p321) target = $region52
        $region51: #{transformer_forward.10} parent=31 // pred_region
          %v324 = vld [vmem:[#allocation2] sm:$0xff]
          %v325 = vld [vmem:[#allocation8] sm:$0x1]
          %v327 = vlaneseq
          %v328 = vshrl.u32 %v327, 7
          %v329 = vsub.s32 0, %v328
          %v330 = vrot.slane %v325, %v329
          %v332 = vadd.f32 %v324, %v330
          %v333 = vpack.c.bf16 %v332, %v332
          %vm334 = vcmask 257024
          %335 = vst.msk [vmem:[%s254] sm:$0xf] %vm334, %v333
        $region52: #{transformer_forward.10} parent=31 // pred_fallthru
          _
        %s336 = sand.u32 %s132, 1
        %s337 = scalar_lea.sflag [#allocation5], %s336
        %s338 = sand.u32 %s132, 1
        %s339 = smul.addr %s338, 4
        %s340 = scalar_lea.vmem [#allocation9], %s339
        // Predicated region
        $region53: #{transformer_forward.10} parent=31 // pred_check
          %p341 = pneg %p142
        $region54: #{transformer_forward.10} parent=31 // pred_check_branch
          %343 = sbr.rel (%p341) target = $region56
        $region55: #{transformer_forward.10} parent=31 // pred_region
          %s345 = ssub.s32 64, 64
          %346 = vsyncadd %s337, %s345
          %s347 = sadd.s32 %s27, %s26
          %s348 = smul.addr %s347, 64
          %s349 = scalar_lea.hbm %s3, %s348
          %s351 = sshll.u32 %s340, 4
          %s352 = int_to_ptr.vmem [resolvable:$true] %s351
          %354 = dma.vmem_to_hbm [thread:$0]  %s352, 64, %s349, %s337
        $region56: #{transformer_forward.10} parent=31 // pred_fallthru
          _
      $region32: #{transformer_forward.10} parent=5 // pred_fallthru
        _
      %p355 = scmp.le.s32.totalorder 2, %s16
      // Predicated region
      $region57: #{transformer_forward.10} parent=5 // pred_check
        %p356 = pneg %p355
      $region58: #{transformer_forward.10} parent=5 // pred_check_branch
        %358 = sbr.rel (%p356) target = $region60
      $region59: #{transformer_forward.10} parent=5 // pred_region
        %s359 = ssub.s32 %s16, 2
        // Predicated region
        $region61: #{transformer_forward.10} parent=59 // pred_check
          %p360 = pneg %p148
        $region62: #{transformer_forward.10} parent=59 // pred_check_branch
          %362 = sbr.rel (%p360) target = $region64
        $region63: #{transformer_forward.10} parent=59 // pred_region
          %s363 = sand.u32 %s133, 1
          %s364 = scalar_lea.sflag [#allocation5], %s363
          %s365 = sand.u32 %s133, 1
          %s366 = smul.addr %s365, 4
          %s367 = scalar_lea.vmem [#allocation9], %s366
          %368 = dma.done %s364, 64
        $region64: #{transformer_forward.10} parent=59 // pred_fallthru
          _
      $region60: #{transformer_forward.10} parent=5 // pred_fallthru
        _
    $region6: #{transformer_forward.10} parent=1 // loop_footer
      %s20 = sadd.s32 1, %s16
    $region7: #{transformer_forward.10} parent=1 // loop_footer_branch
      %15 = sbr.rel target = $region3
    $region8: #{transformer_forward.10} parent=1 // loop_exit
      _
    %369 = vsyncpa [#allocation4], 1
    %s370 = scalar_lea.sflag [#allocation4], 1
    %371 = vsyncpa %s370, 1
    %372 = vsyncpa [#allocation7], 1
    %373 = vsyncpa [#allocation5], 1
    %s374 = scalar_lea.sflag [#allocation5], 1
    %375 = vsyncpa %s374, 1

// kernel: transformer_forward.12
$region0: #{transformer_forward.12}
  #allocation0 [shape = 'u32[]', space=smem, size = 0x4, offset = 0x4, fixed_abs, tag = 'smem constant byte address 0x4 - core index']
  #allocation1 [shape = 'u32[144,128]{1,0:T(1,128)}', space=vmem, size = 0x12000, scoped, tag = 'internal scratch']
  #allocation2 [shape = 'f32[4,8,1]{2,1,0:T(8,128)}', space=vmem, size = 0x4000, scoped, tag = 'scratch operand']
  #allocation3 [shape = 'f32[4,8,1]{2,1,0:T(8,128)}', space=vmem, size = 0x4000, scoped, tag = 'scratch operand']
  #allocation4 [shape = 'f32[4,8,8]{2,1,0:T(8,128)}', space=vmem, size = 0x4000, scoped, tag = 'scratch operand']
  %s0 = inlined_call_operand.hbm [shape: bf16[8,8,8], index: 0, kind: input, shape index: {}]
  %s1 = inlined_call_operand.hbm [shape: bf16[8,8,8], index: 1, kind: input, shape index: {}]
  %s2 = inlined_call_operand.hbm [shape: bf16[8,8,8], index: 2, kind: input, shape index: {}]
  %s3 = inlined_call_operand.hbm [shape: bf16[8,8,8], index: 3, kind: output, shape index: {}]
  %s4 = sld [smem:[#allocation0]]
  $region65: #{transformer_forward.12} parent=0
    _
  %s6 = ssub.s32 1, %s4
  %s7 = scalar_select 0, %s6, %s4
  $region1: #{transformer_forward.12} parent=0
    #allocation5 [shape = 'u8[16384]{0}', space=vmem, size = 0x4000, scoped, tag = 'input window, operand 0']
    #allocation6 [shape = 's32[2]{0}', space=sflag, size = 0x8, scoped, tag = 'scoped memory for transformer_forward.12']
    #allocation7 [shape = 's32[2]{0}', space=sflag, size = 0x8, scoped, tag = 'scoped memory for transformer_forward.12']
    #allocation8 [shape = 'u8[16384]{0}', space=vmem, size = 0x4000, scoped, tag = 'input window, operand 1']
    #allocation9 [shape = 's32[2]{0}', space=sflag, size = 0x8, scoped, tag = 'scoped memory for transformer_forward.12']
    #allocation10 [shape = 'u8[16384]{0}', space=vmem, size = 0x4000, scoped, tag = 'input window, operand 2']
    #allocation11 [shape = 'u8[16384]{0}', space=vmem, size = 0x4000, scoped, tag = 'output window, operand 0']
    %8 = vsyncpa [#allocation6], 0
    %s9 = scalar_lea.sflag [#allocation6], 1
    %10 = vsyncpa %s9, 0
    %11 = vsyncpa [#allocation9], 0
    %s12 = scalar_lea.sflag [#allocation9], 1
    %13 = vsyncpa %s12, 0
    %14 = vsyncpa [#allocation7], 0
    %s15 = scalar_lea.sflag [#allocation7], 1
    %16 = vsyncpa %s15, 0
    loop: start=0, step=1, limit=4
    $region2: #{transformer_forward.12} parent=1 // loop_pre_header
      _
    $region3: #{transformer_forward.12} parent=1 // loop_header
      %s18 = sphi 0, %s22
      %p19 = scmp.ge.s32.totalorder %s18, 4
      %s25 = sphi 0, %s44
      %s26 = sphi 0, %s40
      %s27 = sphi 0, %s36
      %s28 = sphi 0, %s25
      %s29 = sphi 0, %s26
      %s30 = sphi 0, %s27
      %s31 = sphi 0, %s28
      %s32 = sphi 0, %s29
      %s33 = sphi 0, %s30
      %s49 = sphi 0, %s51
      %s52 = sphi 0, %s49
      %s53 = sphi 0, %s52
      %s69 = sphi 0, %s53
      %s77 = sphi 0, %s79
      %s80 = sphi 0, %s77
      %s81 = sphi 0, %s80
      %s97 = sphi 0, %s81
      %s105 = sphi 0, %s107
      %s108 = sphi 0, %s105
      %s109 = sphi 0, %s108
      %s125 = sphi 0, %s109
      %s133 = sphi 0, %s135
      %s136 = sphi 0, %s133
      %s137 = sphi 0, %s136
      %s153 = sphi 0, %s137
    $region4: #{transformer_forward.12} parent=1 // loop_header_branch
      %21 = sbr.rel (%p19) target = $region8
    $region5: #{transformer_forward.12} parent=1 // loop_body
      %s23 = ssub.s32 %s18, 1
      %s24 = ssub.s32 %s18, 2
      %s34 = sadd.s32 1, %s27
      %p35 = scmp.ge.s32.totalorder %s34, 1
      %s36 = scalar_select %p35, 0, %s34
      %s37 = sadd.s32 1, %s26
      %s38 = scalar_select %p35, %s37, %s26
      %p39 = scmp.ge.s32.totalorder %s38, 1
      %s40 = scalar_select %p39, 0, %s38
      %s41 = sadd.s32 1, %s25
      %s42 = scalar_select %p39, %s41, %s25
      %p43 = scmp.ge.s32.totalorder %s42, 2
      %s44 = scalar_select %p43, 0, %s42
      %s45 = ssub.s32 %s25, %s44
      %s46 = ssub.s32 %s26, %s40
      %s47 = sor.u32 %s45, %s46
      %p48 = scmp.eq.s32.totalorder %s47, 0
      %s50 = sadd.s32 %s49, 1
      %s51 = scalar_select %p48, %s49, %s50
      %p54 = pneg %p48
      %p55 = scmp.eq.s32.totalorder %s18, 1
      %p56 = por %p54, %p55
      %p57 = scmp.ne.s32.totalorder %s49, %s52
      %p58 = scmp.eq.s32.totalorder %s18, 0
      %p59 = por %p57, %p58
      %p60 = scmp.ne.s32.totalorder %s49, %s52
      %p61 = scmp.eq.s32.totalorder %s23, 1
      %p62 = por %p60, %p61
      %p63 = scmp.ne.s32.totalorder %s52, %s53
      %p64 = scmp.eq.s32.totalorder %s23, 0
      %p65 = por %p63, %p64
      %p66 = scmp.ne.s32.totalorder %s52, %s53
      %p67 = scmp.eq.s32.totalorder %s24, 1
      %p68 = por %p66, %p67
      %p70 = scmp.ne.s32.totalorder %s53, %s69
      %p71 = scmp.eq.s32.totalorder %s24, 0
      %p72 = por %p70, %p71
      %s73 = ssub.s32 %s25, %s44
      %s74 = ssub.s32 %s27, %s36
      %s75 = sor.u32 %s73, %s74
      %p76 = scmp.eq.s32.totalorder %s75, 0
      %s78 = sadd.s32 %s77, 1
      %s79 = scalar_select %p76, %s77, %s78
      %p82 = pneg %p76
      %p83 = scmp.eq.s32.totalorder %s18, 1
      %p84 = por %p82, %p83
      %p85 = scmp.ne.s32.totalorder %s77, %s80
      %p86 = scmp.eq.s32.totalorder %s18, 0
      %p87 = por %p85, %p86
      %p88 = scmp.ne.s32.totalorder %s77, %s80
      %p89 = scmp.eq.s32.totalorder %s23, 1
      %p90 = por %p88, %p89
      %p91 = scmp.ne.s32.totalorder %s80, %s81
      %p92 = scmp.eq.s32.totalorder %s23, 0
      %p93 = por %p91, %p92
      %p94 = scmp.ne.s32.totalorder %s80, %s81
      %p95 = scmp.eq.s32.totalorder %s24, 1
      %p96 = por %p94, %p95
      %p98 = scmp.ne.s32.totalorder %s81, %s97
      %p99 = scmp.eq.s32.totalorder %s24, 0
      %p100 = por %p98, %p99
      %s101 = ssub.s32 %s25, %s44
      %s102 = ssub.s32 %s27, %s36
      %s103 = sor.u32 %s101, %s102
      %p104 = scmp.eq.s32.totalorder %s103, 0
      %s106 = sadd.s32 %s105, 1
      %s107 = scalar_select %p104, %s105, %s106
      %p110 = pneg %p104
      %p111 = scmp.eq.s32.totalorder %s18, 1
      %p112 = por %p110, %p111
      %p113 = scmp.ne.s32.totalorder %s105, %s108
      %p114 = scmp.eq.s32.totalorder %s18, 0
      %p115 = por %p113, %p114
      %p116 = scmp.ne.s32.totalorder %s105, %s108
      %p117 = scmp.eq.s32.totalorder %s23, 1
      %p118 = por %p116, %p117
      %p119 = scmp.ne.s32.totalorder %s108, %s109
      %p120 = scmp.eq.s32.totalorder %s23, 0
      %p121 = por %p119, %p120
      %p122 = scmp.ne.s32.totalorder %s108, %s109
      %p123 = scmp.eq.s32.totalorder %s24, 1
      %p124 = por %p122, %p123
      %p126 = scmp.ne.s32.totalorder %s109, %s125
      %p127 = scmp.eq.s32.totalorder %s24, 0
      %p128 = por %p126, %p127
      %s129 = ssub.s32 %s25, %s44
      %s130 = ssub.s32 %s26, %s40
      %s131 = sor.u32 %s129, %s130
      %p132 = scmp.eq.s32.totalorder %s131, 0
      %s134 = sadd.s32 %s133, 1
      %s135 = scalar_select %p132, %s133, %s134
      %p138 = pneg %p132
      %p139 = scmp.eq.s32.totalorder %s18, 1
      %p140 = por %p138, %p139
      %p141 = scmp.ne.s32.totalorder %s133, %s136
      %p142 = scmp.eq.s32.totalorder %s18, 0
      %p143 = por %p141, %p142
      %p144 = scmp.ne.s32.totalorder %s133, %s136
      %p145 = scmp.eq.s32.totalorder %s23, 1
      %p146 = por %p144, %p145
      %p147 = scmp.ne.s32.totalorder %s136, %s137
      %p148 = scmp.eq.s32.totalorder %s23, 0
      %p149 = por %p147, %p148
      %p150 = scmp.ne.s32.totalorder %s136, %s137
      %p151 = scmp.eq.s32.totalorder %s24, 1
      %p152 = por %p150, %p151
      %p154 = scmp.ne.s32.totalorder %s137, %s153
      %p155 = scmp.eq.s32.totalorder %s24, 0
      %p156 = por %p154, %p155
      %p157 = scmp.le.s32.totalorder 1, %s18
      %p158 = scmp.lt.s32.totalorder %s18, 3
      %p159 = pnand %p157, %p158
      %p160 = pneg %p159
      // Predicated region
      $region9: #{transformer_forward.12} parent=5 // pred_check
        _
      $region10: #{transformer_forward.12} parent=5 // pred_check_branch
        %162 = sbr.rel (%p159) target = $region12
      $region11: #{transformer_forward.12} parent=5 // pred_region
        %s163 = ssub.s32 %s18, 1
      $region12: #{transformer_forward.12} parent=5 // pred_fallthru
        _
      %p164 = scmp.lt.s32.totalorder %s18, 2
      // Predicated region
      $region13: #{transformer_forward.12} parent=5 // pred_check
        %p165 = pneg %p164
      $region14: #{transformer_forward.12} parent=5 // pred_check_branch
        %167 = sbr.rel (%p165) target = $region16
      $region15: #{transformer_forward.12} parent=5 // pred_region
        // Predicated region
        $region17: #{transformer_forward.12} parent=15 // pred_check
          %p168 = pneg %p59
        $region18: #{transformer_forward.12} parent=15 // pred_check_branch
          %170 = sbr.rel (%p168) target = $region20
        $region19: #{transformer_forward.12} parent=15 // pred_region
          %s171 = sand.u32 %s49, 1
          %s172 = scalar_lea.sflag [#allocation6], %s171
          %s173 = sand.u32 %s49, 1
          %s174 = smul.addr %s173, 16
          %s175 = scalar_lea.vmem [#allocation5], %s174
          %s176 = smul.u32 4, %s25
          %s178 = ssub.s32 256, 256
          %179 = vsyncadd %s172, %s178
          %s180 = sadd.s32 %s26, %s176
          %s181 = smul.addr %s180, 64
          %s182 = scalar_lea.hbm %s0, %s181
          %s183 = sshll.u32 %s175, 4
          %s184 = int_to_ptr.vmem [resolvable:$true] %s183
          %189 = dma.hbm_to_vmem [thread:$0]  %s182, 256, %s184, %s172, 64, 64, 4
        $region20: #{transformer_forward.12} parent=15 // pred_fallthru
          _
        // Predicated region
        $region21: #{transformer_forward.12} parent=15 // pred_check
          %p190 = pneg %p87
        $region22: #{transformer_forward.12} parent=15 // pred_check_branch
          %192 = sbr.rel (%p190) target = $region24
        $region23: #{transformer_forward.12} parent=15 // pred_region
          %s193 = sand.u32 %s18, 1
          %s194 = scalar_lea.sflag [#allocation9], %s193
          %s195 = sand.u32 %s77, 1
          %s196 = smul.addr %s195, 16
          %s197 = scalar_lea.vmem [#allocation8], %s196
          %s198 = smul.u32 4, %s25
          %s200 = ssub.s32 256, 256
          %201 = vsyncadd %s194, %s200
          %s202 = sadd.s32 %s27, %s198
          %s203 = smul.addr %s202, 64
          %s204 = scalar_lea.hbm %s1, %s203
          %s205 = sshll.u32 %s197, 4
          %s206 = int_to_ptr.vmem [resolvable:$true] %s205
          %211 = dma.hbm_to_vmem [thread:$0]  %s204, 256, %s206, %s194, 64, 64, 4
        $region24: #{transformer_forward.12} parent=15 // pred_fallthru
          _
        // Predicated region
        $region25: #{transformer_forward.12} parent=15 // pred_check
          %p212 = pneg %p115
        $region26: #{transformer_forward.12} parent=15 // pred_check_branch
          %214 = sbr.rel (%p212) target = $region28
        $region27: #{transformer_forward.12} parent=15 // pred_region
          %s215 = sand.u32 %s18, 1
          %s216 = scalar_lea.sflag [#allocation9], %s215
          %s217 = sand.u32 %s105, 1
          %s218 = smul.addr %s217, 16
          %s219 = scalar_lea.vmem [#allocation10], %s218
          %s220 = smul.u32 4, %s25
          %s222 = ssub.s32 256, 256
          %223 = vsyncadd %s216, %s222
          %s224 = sadd.s32 %s27, %s220
          %s225 = smul.addr %s224, 64
          %s226 = scalar_lea.hbm %s2, %s225
          %s227 = sshll.u32 %s219, 4
          %s228 = int_to_ptr.vmem [resolvable:$true] %s227
          %233 = dma.hbm_to_vmem [thread:$0]  %s226, 256, %s228, %s216, 64, 64, 4
        $region28: #{transformer_forward.12} parent=15 // pred_fallthru
          _
      $region16: #{transformer_forward.12} parent=5 // pred_fallthru
        _
      %p234 = scmp.le.s32.totalorder 1, %s18
      %p235 = scmp.lt.s32.totalorder %s18, 3
      %p236 = pnand %p234, %p235
      %p237 = pneg %p236
      // Predicated region
      $region29: #{transformer_forward.12} parent=5 // pred_check
        _
      $region30: #{transformer_forward.12} parent=5 // pred_check_branch
        %239 = sbr.rel (%p236) target = $region32
      $region31: #{transformer_forward.12} parent=5 // pred_region
        %s240 = ssub.s32 %s18, 1
        %s241 = sand.u32 %s52, 1
        %s242 = scalar_lea.sflag [#allocation6], %s241
        %s243 = sand.u32 %s52, 1
        %s244 = smul.addr %s243, 16
        %s245 = scalar_lea.vmem [#allocation5], %s244
        // Predicated region
        $region33: #{transformer_forward.12} parent=31 // pred_check
          %p246 = pneg %p65
        $region34: #{transformer_forward.12} parent=31 // pred_check_branch
          %248 = sbr.rel (%p246) target = $region36
        $region35: #{transformer_forward.12} parent=31 // pred_region
          %249 = dma.done %s242, 256
        $region36: #{transformer_forward.12} parent=31 // pred_fallthru
          _
        %s250 = sand.u32 %s23, 1
        %s251 = scalar_lea.sflag [#allocation9], %s250
        %s252 = sand.u32 %s80, 1
        %s253 = smul.addr %s252, 16
        %s254 = scalar_lea.vmem [#allocation8], %s253
        // Predicated region
        $region37: #{transformer_forward.12} parent=31 // pred_check
          %p255 = pneg %p93
        $region38: #{transformer_forward.12} parent=31 // pred_check_branch
          %257 = sbr.rel (%p255) target = $region40
        $region39: #{transformer_forward.12} parent=31 // pred_region
          %258 = dma.done %s251, 256
        $region40: #{transformer_forward.12} parent=31 // pred_fallthru
          _
        %s259 = sand.u32 %s23, 1
        %s260 = scalar_lea.sflag [#allocation9], %s259
        %s261 = sand.u32 %s108, 1
        %s262 = smul.addr %s261, 16
        %s263 = scalar_lea.vmem [#allocation10], %s262
        // Predicated region
        $region41: #{transformer_forward.12} parent=31 // pred_check
          %p264 = pneg %p121
        $region42: #{transformer_forward.12} parent=31 // pred_check_branch
          %266 = sbr.rel (%p264) target = $region44
        $region43: #{transformer_forward.12} parent=31 // pred_region
          %267 = dma.done %s260, 256
        $region44: #{transformer_forward.12} parent=31 // pred_fallthru
          _
        %s268 = sand.u32 %s52, 1
        %s269 = scalar_lea.sflag [#allocation6], %s268
        %s270 = sand.u32 %s52, 1
        %s271 = smul.addr %s270, 16
        %s272 = scalar_lea.vmem [#allocation5], %s271
        %p273 = pneg %p65
        %p274 = pneg %p62
        %s275 = sand.u32 %s23, 1
        %s276 = scalar_lea.sflag [#allocation9], %s275
        %s277 = sand.u32 %s80, 1
        %s278 = smul.addr %s277, 16
        %s279 = scalar_lea.vmem [#allocation8], %s278
        %p280 = pneg %p93
        %p281 = pneg %p90
        %s282 = sand.u32 %s23, 1
        %s283 = scalar_lea.sflag [#allocation9], %s282
        %s284 = sand.u32 %s108, 1
        %s285 = smul.addr %s284, 16
        %s286 = scalar_lea.vmem [#allocation10], %s285
        %p287 = pneg %p121
        %p288 = pneg %p118
        %p289 = pneg %p149
        %p290 = pneg %p146
        %s291 = sand.u32 %s136, 1
        %s292 = scalar_lea.sflag [#allocation7], %s291
        %s293 = sand.u32 %s136, 1
        %s294 = smul.addr %s293, 16
        %s295 = scalar_lea.vmem [#allocation11], %s294
        %s296 = smul.u32 4, %s28
        %s297 = smul.u32 4, %s28
        %s298 = smul.u32 4, %s28
        %s299 = smul.u32 4, %s28
        %p301 = scmp.eq.s32.totalorder %s30, 0
        // Predicated region
        $region45: #{transformer_forward.12} parent=31 // pred_check
          %p302 = pneg %p301
        $region46: #{transformer_forward.12} parent=31 // pred_check_branch
          %304 = sbr.rel (%p302) target = $region48
        $region47: #{transformer_forward.12} parent=31 // pred_region
          %vm305 = vcmask 7168
          %306 = vst.msk [vmem:[#allocation2] sm:$0xff] %vm305, -inf
          %307 = vst.msk [vmem:[#allocation2 + $0x8] sm:$0xff] %vm305, -inf
          %308 = vst.msk [vmem:[#allocation2 + $0x10] sm:$0xff] %vm305, -inf
          %309 = vst.msk [vmem:[#allocation2 + $0x18] sm:$0xff] %vm305, -inf
          %310 = vst.msk [vmem:[#allocation3] sm:$0xff] %vm305, 0.0
          %311 = vst.msk [vmem:[#allocation3 + $0x8] sm:$0xff] %vm305, 0.0
          %312 = vst.msk [vmem:[#allocation3 + $0x10] sm:$0xff] %vm305, 0.0
          %313 = vst.msk [vmem:[#allocation3 + $0x18] sm:$0xff] %vm305, 0.0
          %vm314 = vcmask 64512
          %315 = vst.msk [vmem:[#allocation4] sm:$0xff] %vm314, 0.0
          %316 = vst.msk [vmem:[#allocation4 + $0x8] sm:$0xff] %vm314, 0.0
          %317 = vst.msk [vmem:[#allocation4 + $0x10] sm:$0xff] %vm314, 0.0
          %318 = vst.msk [vmem:[#allocation4 + $0x18] sm:$0xff] %vm314, 0.0
        $region48: #{transformer_forward.12} parent=31 // pred_fallthru
          _
        %v319 = vld [vmem:[%s245] sm:$0xf]
        %v320 = vld [vmem:[%s245 + $0x4] sm:$0xf]
        %v321 = vld [vmem:[%s245 + $0x8] sm:$0xf]
        %v322 = vld [vmem:[%s245 + $0xc] sm:$0xf]
        %v323 = vld [vmem:[%s254] sm:$0xf]
        %v324 = vld [vmem:[%s254 + $0x4] sm:$0xf]
        %v325 = vld [vmem:[%s254 + $0x8] sm:$0xf]
        %v326 = vld [vmem:[%s254 + $0xc] sm:$0xf]
        %vm327 = vcmask 64512
        %v329 = vsel %vm327, %v319, 0
        %v332 = vsel %vm327, %v323, 0
        %334 = vmatprep.subr.bf16.mxu0 0
        %335 = vmatpush1.bf16.xpose.msra.mxu0 %v332
        %336 = vmatprep.subr.bf16.mxu0 0
        %337 = vmatpush1.bf16.xpose.msra.mxu0 0
        %338 = vmatprep.subr.bf16.mxu0 0
        %339 = vmatpush1.bf16.xpose.msra.mxu0 0
        %340 = vmatprep.subr.bf16.mxu0 0
        %341 = vmatpush1.bf16.xpose.msra.mxu0 0
        %342 = vmatprep.subr.bf16.mxu0 0
        %343 = vmatpush1.bf16.xpose.msra.mxu0 0
        %344 = vmatprep.subr.bf16.mxu0 0
        %345 = vmatpush1.bf16.xpose.msra.mxu0 0
        %346 = vmatprep.subr.bf16.mxu0 0
        %347 = vmatpush1.bf16.xpose.msra.mxu0 0
        %348 = vmatprep.subr.bf16.mxu0 0
        %349 = vmatpush1.bf16.xpose.msra.mxu0 0
        %350 = vmatprep.subr.bf16.mxu0 0
        %351 = vmatpush1.bf16.xpose.msra.mxu0 0
        %352 = vmatprep.subr.bf16.mxu0 0
        %353 = vmatpush1.bf16.xpose.msra.mxu0 0
        %354 = vmatprep.subr.bf16.mxu0 0
        %355 = vmatpush1.bf16.xpose.msra.mxu0 0
        %356 = vmatprep.subr.bf16.mxu0 0
        %357 = vmatpush1.bf16.xpose.msra.mxu0 0
        %358 = vmatprep.subr.bf16.mxu0 0
        %359 = vmatpush1.bf16.xpose.msra.mxu0 0
        %360 = vmatprep.subr.bf16.mxu0 0
        %361 = vmatpush1.bf16.xpose.msra.mxu0 0
        %362 = vmatprep.subr.bf16.mxu0 0
        %363 = vmatpush1.bf16.xpose.msra.mxu0 0
        %364 = vmatprep.subr.bf16.mxu0 0
        %365 = vmatpush1.bf16.xpose.msra.mxu0 0
        %366 = vmatprep.mubr.bf16.mxu0 0
        %367 = vmatmul.mubr.bf16.gmra.mrb[0].mxu0 %v329
        %v368 = vpop.f32.mrb[0].mxu0
        %v369 = vadd.f32 0.0, %v368
        %v370 = vpop.f32.mrb[0].mxu0
        %v371 = vpop.f32.mrb[0].mxu0
        %v372 = vpop.f32.mrb[0].mxu0
        %373 = vdwg.mxu0
        %v375 = vsel %vm327, %v320, 0
        %v378 = vsel %vm327, %v324, 0
        %380 = vmatprep.subr.bf16.mxu0 0
        %381 = vmatpush1.bf16.xpose.msra.mxu0 %v378
        %382 = vmatprep.subr.bf16.mxu0 0
        %383 = vmatpush1.bf16.xpose.msra.mxu0 0
        %384 = vmatprep.subr.bf16.mxu0 0
        %385 = vmatpush1.bf16.xpose.msra.mxu0 0
        %386 = vmatprep.subr.bf16.mxu0 0
        %387 = vmatpush1.bf16.xpose.msra.mxu0 0
        %388 = vmatprep.subr.bf16.mxu0 0
        %389 = vmatpush1.bf16.xpose.msra.mxu0 0
        %390 = vmatprep.subr.bf16.mxu0 0
        %391 = vmatpush1.bf16.xpose.msra.mxu0 0
        %392 = vmatprep.subr.bf16.mxu0 0
        %393 = vmatpush1.bf16.xpose.msra.mxu0 0
        %394 = vmatprep.subr.bf16.mxu0 0
        %395 = vmatpush1.bf16.xpose.msra.mxu0 0
        %396 = vmatprep.subr.bf16.mxu0 0
        %397 = vmatpush1.bf16.xpose.msra.mxu0 0
        %398 = vmatprep.subr.bf16.mxu0 0
        %399 = vmatpush1.bf16.xpose.msra.mxu0 0
        %400 = vmatprep.subr.bf16.mxu0 0
        %401 = vmatpush1.bf16.xpose.msra.mxu0 0
        %402 = vmatprep.subr.bf16.mxu0 0
        %403 = vmatpush1.bf16.xpose.msra.mxu0 0
        %404 = vmatprep.subr.bf16.mxu0 0
        %405 = vmatpush1.bf16.xpose.msra.mxu0 0
        %406 = vmatprep.subr.bf16.mxu0 0
        %407 = vmatpush1.bf16.xpose.msra.mxu0 0
        %408 = vmatprep.subr.bf16.mxu0 0
        %409 = vmatpush1.bf16.xpose.msra.mxu0 0
        %410 = vmatprep.subr.bf16.mxu0 0
        %411 = vmatpush1.bf16.xpose.msra.mxu0 0
        %412 = vmatprep.mubr.bf16.mxu0 0
        %413 = vmatmul.mubr.bf16.gmra.mrb[0].mxu0 %v375
        %v414 = vpop.f32.mrb[0].mxu0
        %v415 = vadd.f32 0.0, %v414
        %v416 = vpop.f32.mrb[0].mxu0
        %v417 = vpop.f32.mrb[0].mxu0
        %v418 = vpop.f32.mrb[0].mxu0
        %419 = vdwg.mxu0
        %v421 = vsel %vm327, %v321, 0
        %v424 = vsel %vm327, %v325, 0
        %426 = vmatprep.subr.bf16.mxu0 0
        %427 = vmatpush1.bf16.xpose.msra.mxu0 %v424
        %428 = vmatprep.subr.bf16.mxu0 0
        %429 = vmatpush1.bf16.xpose.msra.mxu0 0
        %430 = vmatprep.subr.bf16.mxu0 0
        %431 = vmatpush1.bf16.xpose.msra.mxu0 0
        %432 = vmatprep.subr.bf16.mxu0 0
        %433 = vmatpush1.bf16.xpose.msra.mxu0 0
        %434 = vmatprep.subr.bf16.mxu0 0
        %435 = vmatpush1.bf16.xpose.msra.mxu0 0
        %436 = vmatprep.subr.bf16.mxu0 0
        %437 = vmatpush1.bf16.xpose.msra.mxu0 0
        %438 = vmatprep.subr.bf16.mxu0 0
        %439 = vmatpush1.bf16.xpose.msra.mxu0 0
        %440 = vmatprep.subr.bf16.mxu0 0
        %441 = vmatpush1.bf16.xpose.msra.mxu0 0
        %442 = vmatprep.subr.bf16.mxu0 0
        %443 = vmatpush1.bf16.xpose.msra.mxu0 0
        %444 = vmatprep.subr.bf16.mxu0 0
        %445 = vmatpush1.bf16.xpose.msra.mxu0 0
        %446 = vmatprep.subr.bf16.mxu0 0
        %447 = vmatpush1.bf16.xpose.msra.mxu0 0
        %448 = vmatprep.subr.bf16.mxu0 0
        %449 = vmatpush1.bf16.xpose.msra.mxu0 0
        %450 = vmatprep.subr.bf16.mxu0 0
        %451 = vmatpush1.bf16.xpose.msra.mxu0 0
        %452 = vmatprep.subr.bf16.mxu0 0
        %453 = vmatpush1.bf16.xpose.msra.mxu0 0
        %454 = vmatprep.subr.bf16.mxu0 0
        %455 = vmatpush1.bf16.xpose.msra.mxu0 0
        %456 = vmatprep.subr.bf16.mxu0 0
        %457 = vmatpush1.bf16.xpose.msra.mxu0 0
        %458 = vmatprep.mubr.bf16.mxu0 0
        %459 = vmatmul.mubr.bf16.gmra.mrb[0].mxu0 %v421
        %v460 = vpop.f32.mrb[0].mxu0
        %v461 = vadd.f32 0.0, %v460
        %v462 = vpop.f32.mrb[0].mxu0
        %v463 = vpop.f32.mrb[0].mxu0
        %v464 = vpop.f32.mrb[0].mxu0
        %465 = vdwg.mxu0
        %v467 = vsel %vm327, %v322, 0
        %v470 = vsel %vm327, %v326, 0
        %472 = vmatprep.subr.bf16.mxu0 0
        %473 = vmatpush1.bf16.xpose.msra.mxu0 %v470
        %474 = vmatprep.subr.bf16.mxu0 0
        %475 = vmatpush1.bf16.xpose.msra.mxu0 0
        %476 = vmatprep.subr.bf16.mxu0 0
        %477 = vmatpush1.bf16.xpose.msra.mxu0 0
        %478 = vmatprep.subr.bf16.mxu0 0
        %479 = vmatpush1.bf16.xpose.msra.mxu0 0
        %480 = vmatprep.subr.bf16.mxu0 0
        %481 = vmatpush1.bf16.xpose.msra.mxu0 0
        %482 = vmatprep.subr.bf16.mxu0 0
        %483 = vmatpush1.bf16.xpose.msra.mxu0 0
        %484 = vmatprep.subr.bf16.mxu0 0
        %485 = vmatpush1.bf16.xpose.msra.mxu0 0
        %486 = vmatprep.subr.bf16.mxu0 0
        %487 = vmatpush1.bf16.xpose.msra.mxu0 0
        %488 = vmatprep.subr.bf16.mxu0 0
        %489 = vmatpush1.bf16.xpose.msra.mxu0 0
        %490 = vmatprep.subr.bf16.mxu0 0
        %491 = vmatpush1.bf16.xpose.msra.mxu0 0
        %492 = vmatprep.subr.bf16.mxu0 0
        %493 = vmatpush1.bf16.xpose.msra.mxu0 0
        %494 = vmatprep.subr.bf16.mxu0 0
        %495 = vmatpush1.bf16.xpose.msra.mxu0 0
        %496 = vmatprep.subr.bf16.mxu0 0
        %497 = vmatpush1.bf16.xpose.msra.mxu0 0
        %498 = vmatprep.subr.bf16.mxu0 0
        %499 = vmatpush1.bf16.xpose.msra.mxu0 0
        %500 = vmatprep.subr.bf16.mxu0 0
        %501 = vmatpush1.bf16.xpose.msra.mxu0 0
        %502 = vmatprep.subr.bf16.mxu0 0
        %503 = vmatpush1.bf16.xpose.msra.mxu0 0
        %504 = vmatprep.mubr.bf16.mxu0 0
        %505 = vmatmul.mubr.bf16.gmra.mrb[0].mxu0 %v467
        %v506 = vpop.f32.mrb[0].mxu0
        %v507 = vadd.f32 0.0, %v506
        %v508 = vpop.f32.mrb[0].mxu0
        %v509 = vpop.f32.mrb[0].mxu0
        %v510 = vpop.f32.mrb[0].mxu0
        %511 = vdwg.mxu0
        %v512 = vld [vmem:[#allocation2] sm:$0xff]
        %v513 = vld [vmem:[#allocation2 + $0x8] sm:$0xff]
        %v514 = vld [vmem:[#allocation2 + $0x10] sm:$0xff]
        %v515 = vld [vmem:[#allocation2 + $0x18] sm:$0xff]
        %v516 = vsel %vm327, %v369, -inf
        %517 = vmax.xlane.f32.xlu0 %v516
        %v518 = vpop.xlane.xlu0 %517
        %v519 = vsel %vm327, %v415, -inf
        %520 = vmax.xlane.f32.xlu0 %v519
        %v521 = vpop.xlane.xlu0 %520
        %v522 = vsel %vm327, %v461, -inf
        %523 = vmax.xlane.f32.xlu0 %v522
        %v524 = vpop.xlane.xlu0 %523
        %v525 = vsel %vm327, %v507, -inf
        %526 = vmax.xlane.f32.xlu0 %v525
        %v527 = vpop.xlane.xlu0 %526
        %v528 = vmax.f32 %v512, %v518
        %v529 = vmax.f32 %v513, %v521
        %v530 = vmax.f32 %v514, %v524
        %v531 = vmax.f32 %v515, %v527
        %v532 = vsub.f32 %v512, %v528
        %v533 = vsub.f32 %v513, %v529
        %v534 = vsub.f32 %v514, %v530
        %v535 = vsub.f32 %v515, %v531
        %v536 = vmul.f32 %v532, 1.442695
        %v537 = vpow.pop %v536
        %v538 = vmul.f32 %v533, 1.442695
        %v539 = vpow.pop %v538
        %v540 = vmul.f32 %v534, 1.442695
        %v541 = vpow.pop %v540
        %v542 = vmul.f32 %v535, 1.442695
        %v543 = vpow.pop %v542
        %545 = vset.pattern.permute.xlu0 0
        %546 = vperm.xlu0 %545, %v528
        %v547 = vpop.permute.xlu0 %546
        %550 = vset.pattern.permute.xlu0 0
        %551 = vperm.xlu0 %550, %v529
        %v552 = vpop.permute.xlu0 %551
        %555 = vset.pattern.permute.xlu0 0
        %556 = vperm.xlu0 %555, %v530
        %v557 = vpop.permute.xlu0 %556
        %560 = vset.pattern.permute.xlu0 0
        %561 = vperm.xlu0 %560, %v531
        %v562 = vpop.permute.xlu0 %561
        %v564 = vsub.f32 %v369, %v547
        %v565 = vsub.f32 %v415, %v552
        %v566 = vsub.f32 %v461, %v557
        %v567 = vsub.f32 %v507, %v562
        %v568 = vmul.f32 %v564, 1.442695
        %v569 = vpow.pop %v568
        %v570 = vmul.f32 %v565, 1.442695
        %v571 = vpow.pop %v570
        %v572 = vmul.f32 %v566, 1.442695
        %v573 = vpow.pop %v572
        %v574 = vmul.f32 %v567, 1.442695
        %v575 = vpow.pop %v574
        %v576 = vld [vmem:[#allocation3] sm:$0xff]
        %v577 = vld [vmem:[#allocation3 + $0x8] sm:$0xff]
        %v578 = vld [vmem:[#allocation3 + $0x10] sm:$0xff]
        %v579 = vld [vmem:[#allocation3 + $0x18] sm:$0xff]
        %v580 = vmul.f32 %v537, %v576
        %v581 = vmul.f32 %v539, %v577
        %v582 = vmul.f32 %v541, %v578
        %v583 = vmul.f32 %v543, %v579
        %v584 = vsel %vm327, %v569, 0.0
        %585 = vadd.xlane.f32.xlu0 %v584
        %v586 = vpop.xlane.xlu0 %585
        %v587 = vsel %vm327, %v571, 0.0
        %588 = vadd.xlane.f32.xlu0 %v587
        %v589 = vpop.xlane.xlu0 %588
        %v590 = vsel %vm327, %v573, 0.0
        %591 = vadd.xlane.f32.xlu0 %v590
        %v592 = vpop.xlane.xlu0 %591
        %v593 = vsel %vm327, %v575, 0.0
        %594 = vadd.xlane.f32.xlu0 %v593
        %v595 = vpop.xlane.xlu0 %594
        %v596 = vadd.f32 %v580, %v586
        %v597 = vadd.f32 %v581, %v589
        %v598 = vadd.f32 %v582, %v592
        %v599 = vadd.f32 %v583, %v595
        %vm600 = vcmask 7168
        %601 = vst.msk [vmem:[#allocation3] sm:$0xff] %vm600, %v596
        %602 = vst.msk [vmem:[#allocation3 + $0x8] sm:$0xff] %vm600, %v597
        %603 = vst.msk [vmem:[#allocation3 + $0x10] sm:$0xff] %vm600, %v598
        %604 = vst.msk [vmem:[#allocation3 + $0x18] sm:$0xff] %vm600, %v599
        %v605 = vld [vmem:[#allocation4] sm:$0xff]
        %v606 = vld [vmem:[#allocation4 + $0x8] sm:$0xff]
        %v607 = vld [vmem:[#allocation4 + $0x10] sm:$0xff]
        %v608 = vld [vmem:[#allocation4 + $0x18] sm:$0xff]
        %610 = vset.pattern.permute.xlu0 0
        %611 = vperm.xlu0 %610, %v537
        %v612 = vpop.permute.xlu0 %611
        %615 = vset.pattern.permute.xlu0 0
        %616 = vperm.xlu0 %615, %v539
        %v617 = vpop.permute.xlu0 %616
        %620 = vset.pattern.permute.xlu0 0
        %621 = vperm.xlu0 %620, %v541
        %v622 = vpop.permute.xlu0 %621
        %625 = vset.pattern.permute.xlu0 0
        %626 = vperm.xlu0 %625, %v543
        %v627 = vpop.permute.xlu0 %626
        %v629 = vmul.f32 %v612, %v605
        %v630 = vmul.f32 %v617, %v606
        %v631 = vmul.f32 %v622, %v607
        %v632 = vmul.f32 %v627, %v608
        %v633 = vpack.c.bf16 %v569, %v569
        %v634 = vpack.c.bf16 %v571, %v571
        %v635 = vpack.c.bf16 %v573, %v573
        %v636 = vpack.c.bf16 %v575, %v575
        %v637 = vld [vmem:[%s263] sm:$0xf]
        %v638 = vld [vmem:[%s263 + $0x4] sm:$0xf]
        %v639 = vld [vmem:[%s263 + $0x8] sm:$0xf]
        %v640 = vld [vmem:[%s263 + $0xc] sm:$0xf]
        %v642 = vsel %vm327, %v633, 0
        %vm644 = vcmask 1043456
        %v646 = vsel %vm644, %v637, 0
        %648 = vmatprep.subr.bf16.mxu0 0
        %649 = vmatpush1.bf16.msra.mxu0 %v646
        %650 = vmatprep.subr.bf16.mxu0 0
        %651 = vmatpush1.bf16.msra.mxu0 0
        %652 = vmatprep.subr.bf16.mxu0 0
        %653 = vmatpush1.bf16.msra.mxu0 0
        %654 = vmatprep.subr.bf16.mxu0 0
        %655 = vmatpush1.bf16.msra.mxu0 0
        %656 = vmatprep.subr.bf16.mxu0 0
        %657 = vmatpush1.bf16.msra.mxu0 0
        %658 = vmatprep.subr.bf16.mxu0 0
        %659 = vmatpush1.bf16.msra.mxu0 0
        %660 = vmatprep.subr.bf16.mxu0 0
        %661 = vmatpush1.bf16.msra.mxu0 0
        %662 = vmatprep.subr.bf16.mxu0 0
        %663 = vmatpush1.bf16.msra.mxu0 0
        %664 = vmatprep.subr.bf16.mxu0 0
        %665 = vmatpush1.bf16.msra.mxu0 0
        %666 = vmatprep.subr.bf16.mxu0 0
        %667 = vmatpush1.bf16.msra.mxu0 0
        %668 = vmatprep.subr.bf16.mxu0 0
        %669 = vmatpush1.bf16.msra.mxu0 0
        %670 = vmatprep.subr.bf16.mxu0 0
        %671 = vmatpush1.bf16.msra.mxu0 0
        %672 = vmatprep.subr.bf16.mxu0 0
        %673 = vmatpush1.bf16.msra.mxu0 0
        %674 = vmatprep.subr.bf16.mxu0 0
        %675 = vmatpush1.bf16.msra.mxu0 0
        %676 = vmatprep.subr.bf16.mxu0 0
        %677 = vmatpush1.bf16.msra.mxu0 0
        %678 = vmatprep.subr.bf16.mxu0 0
        %679 = vmatpush1.bf16.msra.mxu0 0
        %680 = vmatprep.mubr.bf16.mxu0 0
        %681 = vmatmul.mubr.bf16.gmra.mrb[0].mxu0 %v642
        %v682 = vpop.f32.mrb[0].mxu0
        %v683 = vadd.f32 0.0, %v682
        %v684 = vpop.f32.mrb[0].mxu0
        %v685 = vpop.f32.mrb[0].mxu0
        %v686 = vpop.f32.mrb[0].mxu0
        %687 = vdwg.mxu0
        %v689 = vsel %vm327, %v634, 0
        %v692 = vsel %vm644, %v638, 0
        %694 = vmatprep.subr.bf16.mxu0 0
        %695 = vmatpush1.bf16.msra.mxu0 %v692
        %696 = vmatprep.subr.bf16.mxu0 0
        %697 = vmatpush1.bf16.msra.mxu0 0
        %698 = vmatprep.subr.bf16.mxu0 0
        %699 = vmatpush1.bf16.msra.mxu0 0
        %700 = vmatprep.subr.bf16.mxu0 0
        %701 = vmatpush1.bf16.msra.mxu0 0
        %702 = vmatprep.subr.bf16.mxu0 0
        %703 = vmatpush1.bf16.msra.mxu0 0
        %704 = vmatprep.subr.bf16.mxu0 0
        %705 = vmatpush1.bf16.msra.mxu0 0
        %706 = vmatprep.subr.bf16.mxu0 0
        %707 = vmatpush1.bf16.msra.mxu0 0
        %708 = vmatprep.subr.bf16.mxu0 0
        %709 = vmatpush1.bf16.msra.mxu0 0
        %710 = vmatprep.subr.bf16.mxu0 0
        %711 = vmatpush1.bf16.msra.mxu0 0
        %712 = vmatprep.subr.bf16.mxu0 0
        %713 = vmatpush1.bf16.msra.mxu0 0
        %714 = vmatprep.subr.bf16.mxu0 0
        %715 = vmatpush1.bf16.msra.mxu0 0
        %716 = vmatprep.subr.bf16.mxu0 0
        %717 = vmatpush1.bf16.msra.mxu0 0
        %718 = vmatprep.subr.bf16.mxu0 0
        %719 = vmatpush1.bf16.msra.mxu0 0
        %720 = vmatprep.subr.bf16.mxu0 0
        %721 = vmatpush1.bf16.msra.mxu0 0
        %722 = vmatprep.subr.bf16.mxu0 0
        %723 = vmatpush1.bf16.msra.mxu0 0
        %724 = vmatprep.subr.bf16.mxu0 0
        %725 = vmatpush1.bf16.msra.mxu0 0
        %726 = vmatprep.mubr.bf16.mxu0 0
        %727 = vmatmul.mubr.bf16.gmra.mrb[0].mxu0 %v689
        %v728 = vpop.f32.mrb[0].mxu0
        %v729 = vadd.f32 0.0, %v728
        %v730 = vpop.f32.mrb[0].mxu0
        %v731 = vpop.f32.mrb[0].mxu0
        %v732 = vpop.f32.mrb[0].mxu0
        %733 = vdwg.mxu0
        %v735 = vsel %vm327, %v635, 0
        %v738 = vsel %vm644, %v639, 0
        %740 = vmatprep.subr.bf16.mxu0 0
        %741 = vmatpush1.bf16.msra.mxu0 %v738
        %742 = vmatprep.subr.bf16.mxu0 0
        %743 = vmatpush1.bf16.msra.mxu0 0
        %744 = vmatprep.subr.bf16.mxu0 0
        %745 = vmatpush1.bf16.msra.mxu0 0
        %746 = vmatprep.subr.bf16.mxu0 0
        %747 = vmatpush1.bf16.msra.mxu0 0
        %748 = vmatprep.subr.bf16.mxu0 0
        %749 = vmatpush1.bf16.msra.mxu0 0
        %750 = vmatprep.subr.bf16.mxu0 0
        %751 = vmatpush1.bf16.msra.mxu0 0
        %752 = vmatprep.subr.bf16.mxu0 0
        %753 = vmatpush1.bf16.msra.mxu0 0
        %754 = vmatprep.subr.bf16.mxu0 0
        %755 = vmatpush1.bf16.msra.mxu0 0
        %756 = vmatprep.subr.bf16.mxu0 0
        %757 = vmatpush1.bf16.msra.mxu0 0
        %758 = vmatprep.subr.bf16.mxu0 0
        %759 = vmatpush1.bf16.msra.mxu0 0
        %760 = vmatprep.subr.bf16.mxu0 0
        %761 = vmatpush1.bf16.msra.mxu0 0
        %762 = vmatprep.subr.bf16.mxu0 0
        %763 = vmatpush1.bf16.msra.mxu0 0
        %764 = vmatprep.subr.bf16.mxu0 0
        %765 = vmatpush1.bf16.msra.mxu0 0
        %766 = vmatprep.subr.bf16.mxu0 0
        %767 = vmatpush1.bf16.msra.mxu0 0
        %768 = vmatprep.subr.bf16.mxu0 0
        %769 = vmatpush1.bf16.msra.mxu0 0
        %770 = vmatprep.subr.bf16.mxu0 0
        %771 = vmatpush1.bf16.msra.mxu0 0
        %772 = vmatprep.mubr.bf16.mxu0 0
        %773 = vmatmul.mubr.bf16.gmra.mrb[0].mxu0 %v735
        %v774 = vpop.f32.mrb[0].mxu0
        %v775 = vadd.f32 0.0, %v774
        %v776 = vpop.f32.mrb[0].mxu0
        %v777 = vpop.f32.mrb[0].mxu0
        %v778 = vpop.f32.mrb[0].mxu0
        %779 = vdwg.mxu0
        %v781 = vsel %vm327, %v636, 0
        %v784 = vsel %vm644, %v640, 0
        %786 = vmatprep.subr.bf16.mxu0 0
        %787 = vmatpush1.bf16.msra.mxu0 %v784
        %788 = vmatprep.subr.bf16.mxu0 0
        %789 = vmatpush1.bf16.msra.mxu0 0
        %790 = vmatprep.subr.bf16.mxu0 0
        %791 = vmatpush1.bf16.msra.mxu0 0
        %792 = vmatprep.subr.bf16.mxu0 0
        %793 = vmatpush1.bf16.msra.mxu0 0
        %794 = vmatprep.subr.bf16.mxu0 0
        %795 = vmatpush1.bf16.msra.mxu0 0
        %796 = vmatprep.subr.bf16.mxu0 0
        %797 = vmatpush1.bf16.msra.mxu0 0
        %798 = vmatprep.subr.bf16.mxu0 0
        %799 = vmatpush1.bf16.msra.mxu0 0
        %800 = vmatprep.subr.bf16.mxu0 0
        %801 = vmatpush1.bf16.msra.mxu0 0
        %802 = vmatprep.subr.bf16.mxu0 0
        %803 = vmatpush1.bf16.msra.mxu0 0
        %804 = vmatprep.subr.bf16.mxu0 0
        %805 = vmatpush1.bf16.msra.mxu0 0
        %806 = vmatprep.subr.bf16.mxu0 0
        %807 = vmatpush1.bf16.msra.mxu0 0
        %808 = vmatprep.subr.bf16.mxu0 0
        %809 = vmatpush1.bf16.msra.mxu0 0
        %810 = vmatprep.subr.bf16.mxu0 0
        %811 = vmatpush1.bf16.msra.mxu0 0
        %812 = vmatprep.subr.bf16.mxu0 0
        %813 = vmatpush1.bf16.msra.mxu0 0
        %814 = vmatprep.subr.bf16.mxu0 0
        %815 = vmatpush1.bf16.msra.mxu0 0
        %816 = vmatprep.subr.bf16.mxu0 0
        %817 = vmatpush1.bf16.msra.mxu0 0
        %818 = vmatprep.mubr.bf16.mxu0 0
        %819 = vmatmul.mubr.bf16.gmra.mrb[0].mxu0 %v781
        %v820 = vpop.f32.mrb[0].mxu0
        %v821 = vadd.f32 0.0, %v820
        %v822 = vpop.f32.mrb[0].mxu0
        %v823 = vpop.f32.mrb[0].mxu0
        %v824 = vpop.f32.mrb[0].mxu0
        %825 = vdwg.mxu0
        %v826 = vadd.f32 %v629, %v683
        %v827 = vadd.f32 %v630, %v729
        %v828 = vadd.f32 %v631, %v775
        %v829 = vadd.f32 %v632, %v821
        %830 = vst.msk [vmem:[#allocation4] sm:$0xff] %vm327, %v826
        %831 = vst.msk [vmem:[#allocation4 + $0x8] sm:$0xff] %vm327, %v827
        %832 = vst.msk [vmem:[#allocation4 + $0x10] sm:$0xff] %vm327, %v828
        %833 = vst.msk [vmem:[#allocation4 + $0x18] sm:$0xff] %vm327, %v829
        %834 = vst.msk [vmem:[#allocation2] sm:$0xff] %vm600, %v528
        %835 = vst.msk [vmem:[#allocation2 + $0x8] sm:$0xff] %vm600, %v529
        %836 = vst.msk [vmem:[#allocation2 + $0x10] sm:$0xff] %vm600, %v530
        %837 = vst.msk [vmem:[#allocation2 + $0x18] sm:$0xff] %vm600, %v531
        // Predicated region
        $region49: #{transformer_forward.12} parent=31 // pred_check
          %p838 = pneg %p301
        $region50: #{transformer_forward.12} parent=31 // pred_check_branch
          %840 = sbr.rel (%p838) target = $region52
        $region51: #{transformer_forward.12} parent=31 // pred_region
          %v841 = vld [vmem:[#allocation4] sm:$0xff]
          %v842 = vld [vmem:[#allocation4 + $0x8] sm:$0xff]
          %v843 = vld [vmem:[#allocation4 + $0x10] sm:$0xff]
          %v844 = vld [vmem:[#allocation4 + $0x18] sm:$0xff]
          %v845 = vld [vmem:[#allocation3] sm:$0xff]
          %v846 = vld [vmem:[#allocation3 + $0x8] sm:$0xff]
          %v847 = vld [vmem:[#allocation3 + $0x10] sm:$0xff]
          %v848 = vld [vmem:[#allocation3 + $0x18] sm:$0xff]
          %v849 = vrcp.pop %v845
          %v850 = vrcp.pop %v846
          %v851 = vrcp.pop %v847
          %v852 = vrcp.pop %v848
          %854 = vset.pattern.permute.xlu0 0
          %855 = vperm.xlu0 %854, %v849
          %v856 = vpop.permute.xlu0 %855
          %859 = vset.pattern.permute.xlu0 0
          %860 = vperm.xlu0 %859, %v850
          %v861 = vpop.permute.xlu0 %860
          %864 = vset.pattern.permute.xlu0 0
          %865 = vperm.xlu0 %864, %v851
          %v866 = vpop.permute.xlu0 %865
          %869 = vset.pattern.permute.xlu0 0
          %870 = vperm.xlu0 %869, %v852
          %v871 = vpop.permute.xlu0 %870
          %v873 = vmul.f32 %v841, %v856
          %v874 = vmul.f32 %v842, %v861
          %v875 = vmul.f32 %v843, %v866
          %v876 = vmul.f32 %v844, %v871
          %v877 = vpack.c.bf16 %v873, %v873
          %v878 = vpack.c.bf16 %v874, %v874
          %v879 = vpack.c.bf16 %v875, %v875
          %v880 = vpack.c.bf16 %v876, %v876
          %vm881 = vcmask 60416
          %882 = vst.msk [vmem:[%s295] sm:$0xf] %vm881, %v877
          %883 = vst.msk [vmem:[%s295 + $0x4] sm:$0xf] %vm881, %v878
          %884 = vst.msk [vmem:[%s295 + $0x8] sm:$0xf] %vm881, %v879
          %885 = vst.msk [vmem:[%s295 + $0xc] sm:$0xf] %vm881, %v880
        $region52: #{transformer_forward.12} parent=31 // pred_fallthru
          _
        %s886 = sand.u32 %s136, 1
        %s887 = scalar_lea.sflag [#allocation7], %s886
        %s888 = sand.u32 %s136, 1
        %s889 = smul.addr %s888, 16
        %s890 = scalar_lea.vmem [#allocation11], %s889
        // Predicated region
        $region53: #{transformer_forward.12} parent=31 // pred_check
          %p891 = pneg %p146
        $region54: #{transformer_forward.12} parent=31 // pred_check_branch
          %893 = sbr.rel (%p891) target = $region56
        $region55: #{transformer_forward.12} parent=31 // pred_region
          %s894 = smul.u32 4, %s28
          %s896 = ssub.s32 256, 256
          %897 = vsyncadd %s887, %s896
          %s898 = sadd.s32 %s29, %s894
          %s899 = smul.addr %s898, 64
          %s900 = scalar_lea.hbm %s3, %s899
          %s901 = sshll.u32 %s890, 4
          %s902 = int_to_ptr.vmem [resolvable:$true] %s901
          %907 = dma.vmem_to_hbm [thread:$0]  %s902, 256, %s900, %s887, 64, 64, 4
        $region56: #{transformer_forward.12} parent=31 // pred_fallthru
          _
      $region32: #{transformer_forward.12} parent=5 // pred_fallthru
        _
      %p908 = scmp.le.s32.totalorder 2, %s18
      // Predicated region
      $region57: #{transformer_forward.12} parent=5 // pred_check
        %p909 = pneg %p908
      $region58: #{transformer_forward.12} parent=5 // pred_check_branch
        %911 = sbr.rel (%p909) target = $region60
      $region59: #{transformer_forward.12} parent=5 // pred_region
        %s912 = ssub.s32 %s18, 2
        // Predicated region
        $region61: #{transformer_forward.12} parent=59 // pred_check
          %p913 = pneg %p152
        $region62: #{transformer_forward.12} parent=59 // pred_check_branch
          %915 = sbr.rel (%p913) target = $region64
        $region63: #{transformer_forward.12} parent=59 // pred_region
          %s916 = sand.u32 %s137, 1
          %s917 = scalar_lea.sflag [#allocation7], %s916
          %s918 = sand.u32 %s137, 1
          %s919 = smul.addr %s918, 16
          %s920 = scalar_lea.vmem [#allocation11], %s919
          %921 = dma.done %s917, 256
        $region64: #{transformer_forward.12} parent=59 // pred_fallthru
          _
      $region60: #{transformer_forward.12} parent=5 // pred_fallthru
        _
    $region6: #{transformer_forward.12} parent=1 // loop_footer
      %s22 = sadd.s32 1, %s18
    $region7: #{transformer_forward.12} parent=1 // loop_footer_branch
      %17 = sbr.rel target = $region3
    $region8: #{transformer_forward.12} parent=1 // loop_exit
      _
    %922 = vsyncpa [#allocation6], 1
    %s923 = scalar_lea.sflag [#allocation6], 1
    %924 = vsyncpa %s923, 1
    %925 = vsyncpa [#allocation9], 1
    %s926 = scalar_lea.sflag [#allocation9], 1
    %927 = vsyncpa %s926, 1
    %928 = vsyncpa [#allocation7], 1
    %s929 = scalar_lea.sflag [#allocation7], 1
    %930 = vsyncpa %s929, 1

// kernel: transformer_forward.13
$region0: #{transformer_forward.13}
  #allocation0 [shape = 'u32[]', space=smem, size = 0x4, offset = 0x4, fixed_abs, tag = 'smem constant byte address 0x4 - core index']
  #allocation1 [shape = 'u32[144,128]{1,0:T(1,128)}', space=vmem, size = 0x12000, scoped, tag = 'internal scratch']
  %s0 = inlined_call_operand.hbm [shape: bf16[16,32], index: 0, kind: input, shape index: {}]
  %s1 = inlined_call_operand.hbm [shape: bf16[16,32], index: 1, kind: input, shape index: {}]
  %s2 = inlined_call_operand.hbm [shape: bf16[32,32], index: 2, kind: input, shape index: {}]
  %s3 = inlined_call_operand.hbm [shape: f32[1,32], index: 3, kind: input, shape index: {}]
  %s4 = inlined_call_operand.hbm [shape: f32[1,32], index: 4, kind: input, shape index: {}]
  %s5 = inlined_call_operand.hbm [shape: f32[1,32], index: 5, kind: input, shape index: {}]
  %s6 = inlined_call_operand.hbm [shape: bf16[16,32], index: 6, kind: output, shape index: {}]
  %s7 = sld [smem:[#allocation0]]
  $region81: #{transformer_forward.13} parent=0
    _
  %s9 = ssub.s32 1, %s7
  %s10 = scalar_select 0, %s9, %s7
  $region1: #{transformer_forward.13} parent=0
    #allocation2 [shape = 'u8[4096]{0}', space=vmem, size = 0x1000, scoped, tag = 'input window, operand 0']
    #allocation3 [shape = 's32[2]{0}', space=sflag, size = 0x8, scoped, tag = 'scoped memory for transformer_forward.13']
    #allocation4 [shape = 's32[2]{0}', space=sflag, size = 0x8, scoped, tag = 'scoped memory for transformer_forward.13']
    #allocation5 [shape = 'u8[4096]{0}', space=vmem, size = 0x1000, scoped, tag = 'input window, operand 1']
    #allocation6 [shape = 's32[2]{0}', space=sflag, size = 0x8, scoped, tag = 'scoped memory for transformer_forward.13']
    #allocation7 [shape = 'u8[8192]{0}', space=vmem, size = 0x2000, scoped, tag = 'input window, operand 2, single buffered']
    #allocation8 [shape = 'u8[512]{0}', space=vmem, size = 0x400, scoped, tag = 'input window, operand 3, single buffered']
    #allocation9 [shape = 's32[1]{0}', space=sflag, size = 0x4, scoped, tag = 'scoped memory for transformer_forward.13']
    #allocation10 [shape = 'u8[512]{0}', space=vmem, size = 0x400, scoped, tag = 'input window, operand 4, single buffered']
    #allocation11 [shape = 'u8[512]{0}', space=vmem, size = 0x400, scoped, tag = 'input window, operand 5, single buffered']
    #allocation12 [shape = 's32[1]{0}', space=sflag, size = 0x4, scoped, tag = 'scoped memory for transformer_forward.13']
    #allocation13 [shape = 'u8[4096]{0}', space=vmem, size = 0x1000, scoped, tag = 'output window, operand 0']
    %11 = vsyncpa [#allocation3], 0
    %s12 = scalar_lea.sflag [#allocation3], 1
    %13 = vsyncpa %s12, 0
    %14 = vsyncpa [#allocation6], 0
    %s15 = scalar_lea.sflag [#allocation6], 1
    %16 = vsyncpa %s15, 0
    %17 = vsyncpa [#allocation9], 0
    %18 = vsyncpa [#allocation12], 0
    %19 = vsyncpa [#allocation4], 0
    %s20 = scalar_lea.sflag [#allocation4], 1
    %21 = vsyncpa %s20, 0
    loop: start=0, step=1, limit=4
    $region2: #{transformer_forward.13} parent=1 // loop_pre_header
      _
    $region3: #{transformer_forward.13} parent=1 // loop_header
      %s23 = sphi 0, %s27
      %p24 = scmp.ge.s32.totalorder %s23, 4
      %s33 = sphi 0, %s35
      %s36 = sphi 0, %s33
      %s37 = sphi 0, %s36
      %s53 = sphi 0, %s37
      %s59 = sphi 0, %s61
      %s62 = sphi 0, %s59
      %s63 = sphi 0, %s62
      %s79 = sphi 0, %s63
      %s83 = sphi 0, %s83
      %s85 = sphi 0, %s83
      %s86 = sphi 0, %s85
      %s100 = sphi 0, %s86
      %s104 = sphi 0, %s104
      %s106 = sphi 0, %s104
      %s107 = sphi 0, %s106
      %s121 = sphi 0, %s107
      %s125 = sphi 0, %s125
      %s127 = sphi 0, %s125
      %s128 = sphi 0, %s127
      %s142 = sphi 0, %s128
      %s146 = sphi 0, %s146
      %s148 = sphi 0, %s146
      %s149 = sphi 0, %s148
      %s163 = sphi 0, %s149
      %s169 = sphi 0, %s171
      %s172 = sphi 0, %s169
      %s173 = sphi 0, %s172
      %s189 = sphi 0, %s173
    $region4: #{transformer_forward.13} parent=1 // loop_header_branch
      %26 = sbr.rel (%p24) target = $region8
    $region5: #{transformer_forward.13} parent=1 // loop_body
      %s28 = ssub.s32 %s23, 1
      %s29 = ssub.s32 %s23, 2
      %s30 = sadd.s32 %s23, 1
      %s31 = ssub.s32 %s23, %s30
      %p32 = scmp.eq.s32.totalorder %s31, 0
      %s34 = sadd.s32 %s33, 1
      %s35 = scalar_select %p32, %s33, %s34
      %p38 = pneg %p32
      %p39 = scmp.eq.s32.totalorder %s23, 1
      %p40 = por %p38, %p39
      %p41 = scmp.ne.s32.totalorder %s33, %s36
      %p42 = scmp.eq.s32.totalorder %s23, 0
      %p43 = por %p41, %p42
      %p44 = scmp.ne.s32.totalorder %s33, %s36
      %p45 = scmp.eq.s32.totalorder %s28, 1
      %p46 = por %p44, %p45
      %p47 = scmp.ne.s32.totalorder %s36, %s37
      %p48 = scmp.eq.s32.totalorder %s28, 0
      %p49 = por %p47, %p48
      %p50 = scmp.ne.s32.totalorder %s36, %s37
      %p51 = scmp.eq.s32.totalorder %s29, 1
      %p52 = por %p50, %p51
      %p54 = scmp.ne.s32.totalorder %s37, %s53
      %p55 = scmp.eq.s32.totalorder %s29, 0
      %p56 = por %p54, %p55
      %s57 = ssub.s32 %s23, %s30
      %p58 = scmp.eq.s32.totalorder %s57, 0
      %s60 = sadd.s32 %s59, 1
      %s61 = scalar_select %p58, %s59, %s60
      %p64 = pneg %p58
      %p65 = scmp.eq.s32.totalorder %s23, 1
      %p66 = por %p64, %p65
      %p67 = scmp.ne.s32.totalorder %s59, %s62
      %p68 = scmp.eq.s32.totalorder %s23, 0
      %p69 = por %p67, %p68
      %p70 = scmp.ne.s32.totalorder %s59, %s62
      %p71 = scmp.eq.s32.totalorder %s28, 1
      %p72 = por %p70, %p71
      %p73 = scmp.ne.s32.totalorder %s62, %s63
      %p74 = scmp.eq.s32.totalorder %s28, 0
      %p75 = por %p73, %p74
      %p76 = scmp.ne.s32.totalorder %s62, %s63
      %p77 = scmp.eq.s32.totalorder %s29, 1
      %p78 = por %p76, %p77
      %p80 = scmp.ne.s32.totalorder %s63, %s79
      %p81 = scmp.eq.s32.totalorder %s29, 0
      %p82 = por %p80, %p81
      %s84 = sadd.s32 %s83, 1
      %p87 = scmp.eq.s32.totalorder %s23, 1
      %p88 = scmp.ne.s32.totalorder %s83, %s85
      %p89 = scmp.eq.s32.totalorder %s23, 0
      %p90 = por %p88, %p89
      %p91 = scmp.ne.s32.totalorder %s83, %s85
      %p92 = scmp.eq.s32.totalorder %s28, 1
      %p93 = por %p91, %p92
      %p94 = scmp.ne.s32.totalorder %s85, %s86
      %p95 = scmp.eq.s32.totalorder %s28, 0
      %p96 = por %p94, %p95
      %p97 = scmp.ne.s32.totalorder %s85, %s86
      %p98 = scmp.eq.s32.totalorder %s29, 1
      %p99 = por %p97, %p98
      %p101 = scmp.ne.s32.totalorder %s86, %s100
      %p102 = scmp.eq.s32.totalorder %s29, 0
      %p103 = por %p101, %p102
      %s105 = sadd.s32 %s104, 1
      %p108 = scmp.eq.s32.totalorder %s23, 1
      %p109 = scmp.ne.s32.totalorder %s104, %s106
      %p110 = scmp.eq.s32.totalorder %s23, 0
      %p111 = por %p109, %p110
      %p112 = scmp.ne.s32.totalorder %s104, %s106
      %p113 = scmp.eq.s32.totalorder %s28, 1
      %p114 = por %p112, %p113
      %p115 = scmp.ne.s32.totalorder %s106, %s107
      %p116 = scmp.eq.s32.totalorder %s28, 0
      %p117 = por %p115, %p116
      %p118 = scmp.ne.s32.totalorder %s106, %s107
      %p119 = scmp.eq.s32.totalorder %s29, 1
      %p120 = por %p118, %p119
      %p122 = scmp.ne.s32.totalorder %s107, %s121
      %p123 = scmp.eq.s32.totalorder %s29, 0
      %p124 = por %p122, %p123
      %s126 = sadd.s32 %s125, 1
      %p129 = scmp.eq.s32.totalorder %s23, 1
      %p130 = scmp.ne.s32.totalorder %s125, %s127
      %p131 = scmp.eq.s32.totalorder %s23, 0
      %p132 = por %p130, %p131
      %p133 = scmp.ne.s32.totalorder %s125, %s127
      %p134 = scmp.eq.s32.totalorder %s28, 1
      %p135 = por %p133, %p134
      %p136 = scmp.ne.s32.totalorder %s127, %s128
      %p137 = scmp.eq.s32.totalorder %s28, 0
      %p138 = por %p136, %p137
      %p139 = scmp.ne.s32.totalorder %s127, %s128
      %p140 = scmp.eq.s32.totalorder %s29, 1
      %p141 = por %p139, %p140
      %p143 = scmp.ne.s32.totalorder %s128, %s142
      %p144 = scmp.eq.s32.totalorder %s29, 0
      %p145 = por %p143, %p144
      %s147 = sadd.s32 %s146, 1
      %p150 = scmp.eq.s32.totalorder %s23, 1
      %p151 = scmp.ne.s32.totalorder %s146, %s148
      %p152 = scmp.eq.s32.totalorder %s23, 0
      %p153 = por %p151, %p152
      %p154 = scmp.ne.s32.totalorder %s146, %s148
      %p155 = scmp.eq.s32.totalorder %s28, 1
      %p156 = por %p154, %p155
      %p157 = scmp.ne.s32.totalorder %s148, %s149
      %p158 = scmp.eq.s32.totalorder %s28, 0
      %p159 = por %p157, %p158
      %p160 = scmp.ne.s32.totalorder %s148, %s149
      %p161 = scmp.eq.s32.totalorder %s29, 1
      %p162 = por %p160, %p161
      %p164 = scmp.ne.s32.totalorder %s149, %s163
      %p165 = scmp.eq.s32.totalorder %s29, 0
      %p166 = por %p164, %p165
      %s167 = ssub.s32 %s23, %s30
      %p168 = scmp.eq.s32.totalorder %s167, 0
      %s170 = sadd.s32 %s169, 1
      %s171 = scalar_select %p168, %s169, %s170
      %p174 = pneg %p168
      %p175 = scmp.eq.s32.totalorder %s23, 1
      %p176 = por %p174, %p175
      %p177 = scmp.ne.s32.totalorder %s169, %s172
      %p178 = scmp.eq.s32.totalorder %s23, 0
      %p179 = por %p177, %p178
      %p180 = scmp.ne.s32.totalorder %s169, %s172
      %p181 = scmp.eq.s32.totalorder %s28, 1
      %p182 = por %p180, %p181
      %p183 = scmp.ne.s32.totalorder %s172, %s173
      %p184 = scmp.eq.s32.totalorder %s28, 0
      %p185 = por %p183, %p184
      %p186 = scmp.ne.s32.totalorder %s172, %s173
      %p187 = scmp.eq.s32.totalorder %s29, 1
      %p188 = por %p186, %p187
      %p190 = scmp.ne.s32.totalorder %s173, %s189
      %p191 = scmp.eq.s32.totalorder %s29, 0
      %p192 = por %p190, %p191
      %p193 = scmp.le.s32.totalorder 1, %s23
      %p194 = scmp.lt.s32.totalorder %s23, 3
      %p195 = pnand %p193, %p194
      %p196 = pneg %p195
      // Predicated region
      $region9: #{transformer_forward.13} parent=5 // pred_check
        _
      $region10: #{transformer_forward.13} parent=5 // pred_check_branch
        %198 = sbr.rel (%p195) target = $region12
      $region11: #{transformer_forward.13} parent=5 // pred_region
        %s199 = ssub.s32 %s23, 1
        // Predicated region
        $region13: #{transformer_forward.13} parent=11 // pred_check
          %p200 = pneg %p96
        $region14: #{transformer_forward.13} parent=11 // pred_check_branch
          %202 = sbr.rel (%p200) target = $region16
        $region15: #{transformer_forward.13} parent=11 // pred_region
          %s204 = ssub.s32 256, 256
          %205 = vsyncadd [#allocation6], %s204
          %s206 = sshll.u32 [#allocation7], 4
          %s207 = int_to_ptr.vmem [resolvable:$true] %s206
          %212 = dma.hbm_to_vmem [thread:$0]  %s2, 256, %s207, [#allocation6], 64, 64, 4
        $region16: #{transformer_forward.13} parent=11 // pred_fallthru
          _
        // Predicated region
        $region17: #{transformer_forward.13} parent=11 // pred_check
          %p213 = pneg %p117
        $region18: #{transformer_forward.13} parent=11 // pred_check_branch
          %215 = sbr.rel (%p213) target = $region20
        $region19: #{transformer_forward.13} parent=11 // pred_region
          %s217 = ssub.s32 16, 16
          %218 = vsyncadd [#allocation9], %s217
          %s220 = sshll.u32 [#allocation8], 4
          %s221 = int_to_ptr.vmem [resolvable:$true] %s220
          %223 = dma.hbm_to_vmem [thread:$0]  %s3, 16, %s221, [#allocation9]
        $region20: #{transformer_forward.13} parent=11 // pred_fallthru
          _
        // Predicated region
        $region21: #{transformer_forward.13} parent=11 // pred_check
          %p224 = pneg %p138
        $region22: #{transformer_forward.13} parent=11 // pred_check_branch
          %226 = sbr.rel (%p224) target = $region24
        $region23: #{transformer_forward.13} parent=11 // pred_region
          %s228 = ssub.s32 16, 16
          %229 = vsyncadd [#allocation9], %s228
          %s231 = sshll.u32 [#allocation10], 4
          %s232 = int_to_ptr.vmem [resolvable:$true] %s231
          %234 = dma.hbm_to_vmem [thread:$0]  %s4, 16, %s232, [#allocation9]
        $region24: #{transformer_forward.13} parent=11 // pred_fallthru
          _
        // Predicated region
        $region25: #{transformer_forward.13} parent=11 // pred_check
          %p235 = pneg %p159
        $region26: #{transformer_forward.13} parent=11 // pred_check_branch
          %237 = sbr.rel (%p235) target = $region28
        $region27: #{transformer_forward.13} parent=11 // pred_region
          %s239 = ssub.s32 16, 16
          %240 = vsyncadd [#allocation12], %s239
          %s242 = sshll.u32 [#allocation11], 4
          %s243 = int_to_ptr.vmem [resolvable:$true] %s242
          %245 = dma.hbm_to_vmem [thread:$0]  %s5, 16, %s243, [#allocation12]
        $region28: #{transformer_forward.13} parent=11 // pred_fallthru
          _
      $region12: #{transformer_forward.13} parent=5 // pred_fallthru
        _
      %p246 = scmp.lt.s32.totalorder %s23, 2
      // Predicated region
      $region29: #{transformer_forward.13} parent=5 // pred_check
        %p247 = pneg %p246
      $region30: #{transformer_forward.13} parent=5 // pred_check_branch
        %249 = sbr.rel (%p247) target = $region32
      $region31: #{transformer_forward.13} parent=5 // pred_region
        // Predicated region
        $region33: #{transformer_forward.13} parent=31 // pred_check
          %p250 = pneg %p43
        $region34: #{transformer_forward.13} parent=31 // pred_check_branch
          %252 = sbr.rel (%p250) target = $region36
        $region35: #{transformer_forward.13} parent=31 // pred_region
          %s253 = sand.u32 %s33, 1
          %s254 = scalar_lea.sflag [#allocation3], %s253
          %s255 = sand.u32 %s33, 1
          %s256 = smul.addr %s255, 4
          %s257 = scalar_lea.vmem [#allocation2], %s256
          %s259 = ssub.s32 64, 64
          %260 = vsyncadd %s254, %s259
          %s261 = smul.addr %s23, 64
          %s262 = scalar_lea.hbm %s0, %s261
          %s264 = sshll.u32 %s257, 4
          %s265 = int_to_ptr.vmem [resolvable:$true] %s264
          %267 = dma.hbm_to_vmem [thread:$0]  %s262, 64, %s265, %s254
        $region36: #{transformer_forward.13} parent=31 // pred_fallthru
          _
        // Predicated region
        $region37: #{transformer_forward.13} parent=31 // pred_check
          %p268 = pneg %p69
        $region38: #{transformer_forward.13} parent=31 // pred_check_branch
          %270 = sbr.rel (%p268) target = $region40
        $region39: #{transformer_forward.13} parent=31 // pred_region
          %s271 = sand.u32 %s23, 1
          %s272 = scalar_lea.sflag [#allocation6], %s271
          %s273 = sand.u32 %s59, 1
          %s274 = smul.addr %s273, 4
          %s275 = scalar_lea.vmem [#allocation5], %s274
          %s277 = ssub.s32 64, 64
          %278 = vsyncadd %s272, %s277
          %s279 = smul.addr %s23, 64
          %s280 = scalar_lea.hbm %s1, %s279
          %s282 = sshll.u32 %s275, 4
          %s283 = int_to_ptr.vmem [resolvable:$true] %s282
          %285 = dma.hbm_to_vmem [thread:$0]  %s280, 64, %s283, %s272
        $region40: #{transformer_forward.13} parent=31 // pred_fallthru
          _
      $region32: #{transformer_forward.13} parent=5 // pred_fallthru
        _
      %p286 = scmp.le.s32.totalorder 1, %s23
      %p287 = scmp.lt.s32.totalorder %s23, 3
      %p288 = pnand %p286, %p287
      %p289 = pneg %p288
      // Predicated region
      $region41: #{transformer_forward.13} parent=5 // pred_check
        _
      $region42: #{transformer_forward.13} parent=5 // pred_check_branch
        %291 = sbr.rel (%p288) target = $region44
      $region43: #{transformer_forward.13} parent=5 // pred_region
        %s292 = ssub.s32 %s23, 1
        %s293 = sand.u32 %s36, 1
        %s294 = scalar_lea.sflag [#allocation3], %s293
        %s295 = sand.u32 %s36, 1
        %s296 = smul.addr %s295, 4
        %s297 = scalar_lea.vmem [#allocation2], %s296
        // Predicated region
        $region45: #{transformer_forward.13} parent=43 // pred_check
          %p298 = pneg %p49
        $region46: #{transformer_forward.13} parent=43 // pred_check_branch
          %300 = sbr.rel (%p298) target = $region48
        $region47: #{transformer_forward.13} parent=43 // pred_region
          %301 = dma.done %s294, 64
        $region48: #{transformer_forward.13} parent=43 // pred_fallthru
          _
        %s302 = sand.u32 %s28, 1
        %s303 = scalar_lea.sflag [#allocation6], %s302
        %s304 = sand.u32 %s62, 1
        %s305 = smul.addr %s304, 4
        %s306 = scalar_lea.vmem [#allocation5], %s305
        // Predicated region
        $region49: #{transformer_forward.13} parent=43 // pred_check
          %p307 = pneg %p75
        $region50: #{transformer_forward.13} parent=43 // pred_check_branch
          %309 = sbr.rel (%p307) target = $region52
        $region51: #{transformer_forward.13} parent=43 // pred_region
          %310 = dma.done %s303, 64
        $region52: #{transformer_forward.13} parent=43 // pred_fallthru
          _
        // Predicated region
        $region53: #{transformer_forward.13} parent=43 // pred_check
          %p311 = pneg %p96
        $region54: #{transformer_forward.13} parent=43 // pred_check_branch
          %313 = sbr.rel (%p311) target = $region56
        $region55: #{transformer_forward.13} parent=43 // pred_region
          %314 = dma.done [#allocation6], 256
        $region56: #{transformer_forward.13} parent=43 // pred_fallthru
          _
        // Predicated region
        $region57: #{transformer_forward.13} parent=43 // pred_check
          %p315 = pneg %p117
        $region58: #{transformer_forward.13} parent=43 // pred_check_branch
          %317 = sbr.rel (%p315) target = $region60
        $region59: #{transformer_forward.13} parent=43 // pred_region
          %318 = dma.done [#allocation9], 16
        $region60: #{transformer_forward.13} parent=43 // pred_fallthru
          _
        // Predicated region
        $region61: #{transformer_forward.13} parent=43 // pred_check
          %p319 = pneg %p138
        $region62: #{transformer_forward.13} parent=43 // pred_check_branch
          %321 = sbr.rel (%p319) target = $region64
        $region63: #{transformer_forward.13} parent=43 // pred_region
          %322 = dma.done [#allocation9], 16
        $region64: #{transformer_forward.13} parent=43 // pred_fallthru
          _
        // Predicated region
        $region65: #{transformer_forward.13} parent=43 // pred_check
          %p323 = pneg %p159
        $region66: #{transformer_forward.13} parent=43 // pred_check_branch
          %325 = sbr.rel (%p323) target = $region68
        $region67: #{transformer_forward.13} parent=43 // pred_region
          %326 = dma.done [#allocation12], 16
        $region68: #{transformer_forward.13} parent=43 // pred_fallthru
          _
        %s327 = sand.u32 %s36, 1
        %s328 = scalar_lea.sflag [#allocation3], %s327
        %s329 = sand.u32 %s36, 1
        %s330 = smul.addr %s329, 4
        %s331 = scalar_lea.vmem [#allocation2], %s330
        %p332 = pneg %p49
        %p333 = pneg %p46
        %s334 = sand.u32 %s28, 1
        %s335 = scalar_lea.sflag [#allocation6], %s334
        %s336 = sand.u32 %s62, 1
        %s337 = smul.addr %s336, 4
        %s338 = scalar_lea.vmem [#allocation5], %s337
        %p339 = pneg %p75
        %p340 = pneg %p72
        %p341 = pneg %p96
        %p342 = pneg %p93
        %p343 = pneg %p117
        %p344 = pneg %p114
        %p345 = pneg %p138
        %p346 = pneg %p135
        %p347 = pneg %p159
        %p348 = pneg %p156
        %p349 = pneg %p185
        %p350 = pneg %p182
        %s351 = sand.u32 %s172, 1
        %s352 = scalar_lea.sflag [#allocation4], %s351
        %s353 = sand.u32 %s172, 1
        %s354 = smul.addr %s353, 4
        %s355 = scalar_lea.vmem [#allocation13], %s354
        %v357 = vld [vmem:[%s297] sm:$0xf]
        %v358 = vld [vmem:[#allocation7] sm:$0xf]
        %v359 = vld [vmem:[#allocation7 + $0x4] sm:$0xf]
        %v360 = vld [vmem:[#allocation7 + $0x8] sm:$0xf]
        %v361 = vld [vmem:[#allocation7 + $0xc] sm:$0xf]
        %v362 = vld [vmem:[#allocation8] sm:$0x1]
        %v364 = vlaneseq
        %v365 = vshrl.u32 %v364, 7
        %v366 = vsub.s32 0, %v365
        %v367 = vrot.slane %v362, %v366
        %v373 = vunpack.c.l.b16 %v358
        %v374 = vunpack.c.l.b16 %v359
        %v375 = vunpack.c.l.b16 %v360
        %v376 = vunpack.c.l.b16 %v361
        %v377 = vpack.c.b16 %v374, %v373
        %v378 = vpack.c.b16 %v376, %v375
        %vm381 = vcmask 261120
        %v383 = vsel %vm381, %v357, 0
        %385 = vmatprep.subr.bf16.mxu0 0
        %386 = vmatpush1.bf16.msra.mxu0 %v377
        %387 = vmatprep.subr.bf16.mxu0 0
        %388 = vmatpush1.bf16.msra.mxu0 %v378
        %389 = vmatprep.subr.bf16.mxu0 0
        %390 = vmatpush1.bf16.msra.mxu0 0
        %391 = vmatprep.subr.bf16.mxu0 0
        %392 = vmatpush1.bf16.msra.mxu0 0
        %393 = vmatprep.subr.bf16.mxu0 0
        %394 = vmatpush1.bf16.msra.mxu0 0
        %395 = vmatprep.subr.bf16.mxu0 0
        %396 = vmatpush1.bf16.msra.mxu0 0
        %397 = vmatprep.subr.bf16.mxu0 0
        %398 = vmatpush1.bf16.msra.mxu0 0
        %399 = vmatprep.subr.bf16.mxu0 0
        %400 = vmatpush1.bf16.msra.mxu0 0
        %401 = vmatprep.subr.bf16.mxu0 0
        %402 = vmatpush1.bf16.msra.mxu0 0
        %403 = vmatprep.subr.bf16.mxu0 0
        %404 = vmatpush1.bf16.msra.mxu0 0
        %405 = vmatprep.subr.bf16.mxu0 0
        %406 = vmatpush1.bf16.msra.mxu0 0
        %407 = vmatprep.subr.bf16.mxu0 0
        %408 = vmatpush1.bf16.msra.mxu0 0
        %409 = vmatprep.subr.bf16.mxu0 0
        %410 = vmatpush1.bf16.msra.mxu0 0
        %411 = vmatprep.subr.bf16.mxu0 0
        %412 = vmatpush1.bf16.msra.mxu0 0
        %413 = vmatprep.subr.bf16.mxu0 0
        %414 = vmatpush1.bf16.msra.mxu0 0
        %415 = vmatprep.subr.bf16.mxu0 0
        %416 = vmatpush1.bf16.msra.mxu0 0
        %417 = vmatprep.mubr.bf16.mxu0 0
        %418 = vmatmul.mubr.bf16.gmra.mrb[0].mxu0 %v383
        %v419 = vpop.f32.mrb[0].mxu0
        %v420 = vadd.f32 %v367, %v419
        %v421 = vpop.f32.mrb[0].mxu0
        %v422 = vpop.f32.mrb[0].mxu0
        %v423 = vpop.f32.mrb[0].mxu0
        %424 = vdwg.mxu0
        %v425 = vld [vmem:[%s306] sm:$0xf]
        %v426 = vunpack.c.l.bf16 %v425
        %v427 = vadd.f32 %v420, %v426
        %v428 = vsel %vm381, %v427, 0.0
        %429 = vadd.xlane.f32.xlu0 %v428
        %v430 = vpop.xlane.xlu0 %429
        %v431 = vrcp.pop 32.0
        %v432 = vmul.f32 %v430, %v431
        %v433 = vsub.f32 %v427, %v432
        %v434 = vmul.f32 %v433, %v433
        %v435 = vsel %vm381, %v434, 0.0
        %436 = vadd.xlane.f32.xlu0 %v435
        %v437 = vpop.xlane.xlu0 %436
        %v438 = vmul.f32 %v437, %v431
        %v439 = vadd.f32 %v438, 1e-05
        %v440 = vrsqrt.pop %v439
        %v441 = vmul.f32 %v433, %v440
        %v442 = vld [vmem:[#allocation10] sm:$0x1]
        %v444 = vlaneseq
        %v445 = vshrl.u32 %v444, 7
        %v446 = vsub.s32 0, %v445
        %v447 = vrot.slane %v442, %v446
        %v449 = vmul.f32 %v441, %v447
        %v450 = vld [vmem:[#allocation11] sm:$0x1]
        %v452 = vlaneseq
        %v453 = vshrl.u32 %v452, 7
        %v454 = vsub.s32 0, %v453
        %v455 = vrot.slane %v450, %v454
        %v457 = vadd.f32 %v449, %v455
        %v458 = vpack.c.bf16 %v457, %v457
        %vm459 = vcmask 257024
        %460 = vst.msk [vmem:[%s355] sm:$0xf] %vm459, %v458
        %s461 = sand.u32 %s172, 1
        %s462 = scalar_lea.sflag [#allocation4], %s461
        %s463 = sand.u32 %s172, 1
        %s464 = smul.addr %s463, 4
        %s465 = scalar_lea.vmem [#allocation13], %s464
        // Predicated region
        $region69: #{transformer_forward.13} parent=43 // pred_check
          %p466 = pneg %p182
        $region70: #{transformer_forward.13} parent=43 // pred_check_branch
          %468 = sbr.rel (%p466) target = $region72
        $region71: #{transformer_forward.13} parent=43 // pred_region
          %s470 = ssub.s32 64, 64
          %471 = vsyncadd %s462, %s470
          %s472 = smul.addr %s28, 64
          %s473 = scalar_lea.hbm %s6, %s472
          %s475 = sshll.u32 %s465, 4
          %s476 = int_to_ptr.vmem [resolvable:$true] %s475
          %478 = dma.vmem_to_hbm [thread:$0]  %s476, 64, %s473, %s462
        $region72: #{transformer_forward.13} parent=43 // pred_fallthru
          _
      $region44: #{transformer_forward.13} parent=5 // pred_fallthru
        _
      %p479 = scmp.le.s32.totalorder 2, %s23
      // Predicated region
      $region73: #{transformer_forward.13} parent=5 // pred_check
        %p480 = pneg %p479
      $region74: #{transformer_forward.13} parent=5 // pred_check_branch
        %482 = sbr.rel (%p480) target = $region76
      $region75: #{transformer_forward.13} parent=5 // pred_region
        %s483 = ssub.s32 %s23, 2
        // Predicated region
        $region77: #{transformer_forward.13} parent=75 // pred_check
          %p484 = pneg %p188
        $region78: #{transformer_forward.13} parent=75 // pred_check_branch
          %486 = sbr.rel (%p484) target = $region80
        $region79: #{transformer_forward.13} parent=75 // pred_region
          %s487 = sand.u32 %s173, 1
          %s488 = scalar_lea.sflag [#allocation4], %s487
          %s489 = sand.u32 %s173, 1
          %s490 = smul.addr %s489, 4
          %s491 = scalar_lea.vmem [#allocation13], %s490
          %492 = dma.done %s488, 64
        $region80: #{transformer_forward.13} parent=75 // pred_fallthru
          _
      $region76: #{transformer_forward.13} parent=5 // pred_fallthru
        _
    $region6: #{transformer_forward.13} parent=1 // loop_footer
      %s27 = sadd.s32 1, %s23
    $region7: #{transformer_forward.13} parent=1 // loop_footer_branch
      %22 = sbr.rel target = $region3
    $region8: #{transformer_forward.13} parent=1 // loop_exit
      _
    %493 = vsyncpa [#allocation3], 1
    %s494 = scalar_lea.sflag [#allocation3], 1
    %495 = vsyncpa %s494, 1
    %496 = vsyncpa [#allocation6], 1
    %s497 = scalar_lea.sflag [#allocation6], 1
    %498 = vsyncpa %s497, 1
    %499 = vsyncpa [#allocation9], 1
    %500 = vsyncpa [#allocation12], 1
    %501 = vsyncpa [#allocation4], 1
    %s502 = scalar_lea.sflag [#allocation4], 1
    %503 = vsyncpa %s502, 1

// kernel: transformer_forward.14
$region0: #{transformer_forward.14}
  #allocation0 [shape = 'u32[]', space=smem, size = 0x4, offset = 0x4, fixed_abs, tag = 'smem constant byte address 0x4 - core index']
  #allocation1 [shape = 'u32[144,128]{1,0:T(1,128)}', space=vmem, size = 0x12000, scoped, tag = 'internal scratch']
  #allocation2 [shape = 'f32[8,32]{1,0:T(8,128)}', space=vmem, size = 0x1000, scoped, tag = 'scratch operand']
  %s0 = inlined_call_operand.hbm [shape: bf16[16,32], index: 0, kind: input, shape index: {}]
  %s1 = inlined_call_operand.hbm [shape: bf16[32,2048], index: 1, kind: input, shape index: {}]
  %s2 = inlined_call_operand.hbm [shape: f32[1,2048], index: 2, kind: input, shape index: {}]
  %s3 = inlined_call_operand.hbm [shape: bf16[2048,32], index: 3, kind: input, shape index: {}]
  %s4 = inlined_call_operand.hbm [shape: f32[1,32], index: 4, kind: input, shape index: {}]
  %s5 = inlined_call_operand.hbm [shape: f32[1,32], index: 5, kind: input, shape index: {}]
  %s6 = inlined_call_operand.hbm [shape: f32[1,32], index: 6, kind: input, shape index: {}]
  %s7 = inlined_call_operand.hbm [shape: bf16[16,32], index: 7, kind: output, shape index: {}]
  %s8 = sld [smem:[#allocation0]]
  $region97: #{transformer_forward.14} parent=0
    _
  %s10 = ssub.s32 1, %s8
  %s11 = scalar_select 0, %s10, %s8
  $region1: #{transformer_forward.14} parent=0
    #allocation3 [shape = 'u8[4096]{0}', space=vmem, size = 0x1000, scoped, tag = 'input window, operand 0']
    #allocation4 [shape = 's32[2]{0}', space=sflag, size = 0x8, scoped, tag = 'scoped memory for transformer_forward.14']
    #allocation5 [shape = 's32[2]{0}', space=sflag, size = 0x8, scoped, tag = 'scoped memory for transformer_forward.14']
    #allocation6 [shape = 'u8[65536]{0}', space=vmem, size = 0x10000, scoped, tag = 'input window, operand 1']
    #allocation7 [shape = 's32[2]{0}', space=sflag, size = 0x8, scoped, tag = 'scoped memory for transformer_forward.14']
    #allocation8 [shape = 'u8[4096]{0}', space=vmem, size = 0x1000, scoped, tag = 'input window, operand 2']
    #allocation9 [shape = 'u8[262144]{0}', space=vmem, size = 0x40000, scoped, tag = 'input window, operand 3']
    #allocation10 [shape = 's32[2]{0}', space=sflag, size = 0x8, scoped, tag = 'scoped memory for transformer_forward.14']
    #allocation11 [shape = 'u8[512]{0}', space=vmem, size = 0x400, scoped, tag = 'input window, operand 4, single buffered']
    #allocation12 [shape = 'u8[512]{0}', space=vmem, size = 0x400, scoped, tag = 'input window, operand 5, single buffered']
    #allocation13 [shape = 's32[1]{0}', space=sflag, size = 0x4, scoped, tag = 'scoped memory for transformer_forward.14']
    #allocation14 [shape = 'u8[512]{0}', space=vmem, size = 0x400, scoped, tag = 'input window, operand 6, single buffered']
    #allocation15 [shape = 'u8[4096]{0}', space=vmem, size = 0x1000, scoped, tag = 'output window, operand 0']
    %12 = vsyncpa [#allocation4], 0
    %s13 = scalar_lea.sflag [#allocation4], 1
    %14 = vsyncpa %s13, 0
    %15 = vsyncpa [#allocation7], 0
    %s16 = scalar_lea.sflag [#allocation7], 1
    %17 = vsyncpa %s16, 0
    %18 = vsyncpa [#allocation10], 0
    %s19 = scalar_lea.sflag [#allocation10], 1
    %20 = vsyncpa %s19, 0
    %21 = vsyncpa [#allocation13], 0
    %22 = vsyncpa [#allocation5], 0
    %s23 = scalar_lea.sflag [#allocation5], 1
    %24 = vsyncpa %s23, 0
    loop: start=0, step=1, limit=10
    $region2: #{transformer_forward.14} parent=1 // loop_pre_header
      _
    $region3: #{transformer_forward.14} parent=1 // loop_header
      %s26 = sphi 0, %s30
      %p27 = scmp.ge.s32.totalorder %s26, 10
      %s33 = sphi 0, %s45
      %s34 = sphi 0, %s41
      %s35 = sphi 0, %s33
      %s36 = sphi 0, %s34
      %s37 = sphi 0, %s35
      %s38 = sphi 0, %s36
      %s48 = sphi 0, %s50
      %s51 = sphi 0, %s48
      %s52 = sphi 0, %s51
      %s68 = sphi 0, %s52
      %s74 = sphi 0, %s76
      %s77 = sphi 0, %s74
      %s78 = sphi 0, %s77
      %s94 = sphi 0, %s78
      %s100 = sphi 0, %s102
      %s103 = sphi 0, %s100
      %s104 = sphi 0, %s103
      %s120 = sphi 0, %s104
      %s126 = sphi 0, %s128
      %s129 = sphi 0, %s126
      %s130 = sphi 0, %s129
      %s146 = sphi 0, %s130
      %s150 = sphi 0, %s150
      %s152 = sphi 0, %s150
      %s153 = sphi 0, %s152
      %s167 = sphi 0, %s153
      %s171 = sphi 0, %s171
      %s173 = sphi 0, %s171
      %s174 = sphi 0, %s173
      %s188 = sphi 0, %s174
      %s192 = sphi 0, %s192
      %s194 = sphi 0, %s192
      %s195 = sphi 0, %s194
      %s209 = sphi 0, %s195
      %s215 = sphi 0, %s217
      %s218 = sphi 0, %s215
      %s219 = sphi 0, %s218
      %s235 = sphi 0, %s219
    $region4: #{transformer_forward.14} parent=1 // loop_header_branch
      %29 = sbr.rel (%p27) target = $region8
    $region5: #{transformer_forward.14} parent=1 // loop_body
      %s31 = ssub.s32 %s26, 1
      %s32 = ssub.s32 %s26, 2
      %s39 = sadd.s32 1, %s34
      %p40 = scmp.ge.s32.totalorder %s39, 4
      %s41 = scalar_select %p40, 0, %s39
      %s42 = sadd.s32 1, %s33
      %s43 = scalar_select %p40, %s42, %s33
      %p44 = scmp.ge.s32.totalorder %s43, 2
      %s45 = scalar_select %p44, 0, %s43
      %s46 = ssub.s32 %s33, %s45
      %p47 = scmp.eq.s32.totalorder %s46, 0
      %s49 = sadd.s32 %s48, 1
      %s50 = scalar_select %p47, %s48, %s49
      %p53 = pneg %p47
      %p54 = scmp.eq.s32.totalorder %s26, 7
      %p55 = por %p53, %p54
      %p56 = scmp.ne.s32.totalorder %s48, %s51
      %p57 = scmp.eq.s32.totalorder %s26, 0
      %p58 = por %p56, %p57
      %p59 = scmp.ne.s32.totalorder %s48, %s51
      %p60 = scmp.eq.s32.totalorder %s31, 7
      %p61 = por %p59, %p60
      %p62 = scmp.ne.s32.totalorder %s51, %s52
      %p63 = scmp.eq.s32.totalorder %s31, 0
      %p64 = por %p62, %p63
      %p65 = scmp.ne.s32.totalorder %s51, %s52
      %p66 = scmp.eq.s32.totalorder %s32, 7
      %p67 = por %p65, %p66
      %p69 = scmp.ne.s32.totalorder %s52, %s68
      %p70 = scmp.eq.s32.totalorder %s32, 0
      %p71 = por %p69, %p70
      %s72 = ssub.s32 %s34, %s41
      %p73 = scmp.eq.s32.totalorder %s72, 0
      %s75 = sadd.s32 %s74, 1
      %s76 = scalar_select %p73, %s74, %s75
      %p79 = pneg %p73
      %p80 = scmp.eq.s32.totalorder %s26, 7
      %p81 = por %p79, %p80
      %p82 = scmp.ne.s32.totalorder %s74, %s77
      %p83 = scmp.eq.s32.totalorder %s26, 0
      %p84 = por %p82, %p83
      %p85 = scmp.ne.s32.totalorder %s74, %s77
      %p86 = scmp.eq.s32.totalorder %s31, 7
      %p87 = por %p85, %p86
      %p88 = scmp.ne.s32.totalorder %s77, %s78
      %p89 = scmp.eq.s32.totalorder %s31, 0
      %p90 = por %p88, %p89
      %p91 = scmp.ne.s32.totalorder %s77, %s78
      %p92 = scmp.eq.s32.totalorder %s32, 7
      %p93 = por %p91, %p92
      %p95 = scmp.ne.s32.totalorder %s78, %s94
      %p96 = scmp.eq.s32.totalorder %s32, 0
      %p97 = por %p95, %p96
      %s98 = ssub.s32 %s34, %s41
      %p99 = scmp.eq.s32.totalorder %s98, 0
      %s101 = sadd.s32 %s100, 1
      %s102 = scalar_select %p99, %s100, %s101
      %p105 = pneg %p99
      %p106 = scmp.eq.s32.totalorder %s26, 7
      %p107 = por %p105, %p106
      %p108 = scmp.ne.s32.totalorder %s100, %s103
      %p109 = scmp.eq.s32.totalorder %s26, 0
      %p110 = por %p108, %p109
      %p111 = scmp.ne.s32.totalorder %s100, %s103
      %p112 = scmp.eq.s32.totalorder %s31, 7
      %p113 = por %p111, %p112
      %p114 = scmp.ne.s32.totalorder %s103, %s104
      %p115 = scmp.eq.s32.totalorder %s31, 0
      %p116 = por %p114, %p115
      %p117 = scmp.ne.s32.totalorder %s103, %s104
      %p118 = scmp.eq.s32.totalorder %s32, 7
      %p119 = por %p117, %p118
      %p121 = scmp.ne.s32.totalorder %s104, %s120
      %p122 = scmp.eq.s32.totalorder %s32, 0
      %p123 = por %p121, %p122
      %s124 = ssub.s32 %s34, %s41
      %p125 = scmp.eq.s32.totalorder %s124, 0
      %s127 = sadd.s32 %s126, 1
      %s128 = scalar_select %p125, %s126, %s127
      %p131 = pneg %p125
      %p132 = scmp.eq.s32.totalorder %s26, 7
      %p133 = por %p131, %p132
      %p134 = scmp.ne.s32.totalorder %s126, %s129
      %p135 = scmp.eq.s32.totalorder %s26, 0
      %p136 = por %p134, %p135
      %p137 = scmp.ne.s32.totalorder %s126, %s129
      %p138 = scmp.eq.s32.totalorder %s31, 7
      %p139 = por %p137, %p138
      %p140 = scmp.ne.s32.totalorder %s129, %s130
      %p141 = scmp.eq.s32.totalorder %s31, 0
      %p142 = por %p140, %p141
      %p143 = scmp.ne.s32.totalorder %s129, %s130
      %p144 = scmp.eq.s32.totalorder %s32, 7
      %p145 = por %p143, %p144
      %p147 = scmp.ne.s32.totalorder %s130, %s146
      %p148 = scmp.eq.s32.totalorder %s32, 0
      %p149 = por %p147, %p148
      %s151 = sadd.s32 %s150, 1
      %p154 = scmp.eq.s32.totalorder %s26, 7
      %p155 = scmp.ne.s32.totalorder %s150, %s152
      %p156 = scmp.eq.s32.totalorder %s26, 0
      %p157 = por %p155, %p156
      %p158 = scmp.ne.s32.totalorder %s150, %s152
      %p159 = scmp.eq.s32.totalorder %s31, 7
      %p160 = por %p158, %p159
      %p161 = scmp.ne.s32.totalorder %s152, %s153
      %p162 = scmp.eq.s32.totalorder %s31, 0
      %p163 = por %p161, %p162
      %p164 = scmp.ne.s32.totalorder %s152, %s153
      %p165 = scmp.eq.s32.totalorder %s32, 7
      %p166 = por %p164, %p165
      %p168 = scmp.ne.s32.totalorder %s153, %s167
      %p169 = scmp.eq.s32.totalorder %s32, 0
      %p170 = por %p168, %p169
      %s172 = sadd.s32 %s171, 1
      %p175 = scmp.eq.s32.totalorder %s26, 7
      %p176 = scmp.ne.s32.totalorder %s171, %s173
      %p177 = scmp.eq.s32.totalorder %s26, 0
      %p178 = por %p176, %p177
      %p179 = scmp.ne.s32.totalorder %s171, %s173
      %p180 = scmp.eq.s32.totalorder %s31, 7
      %p181 = por %p179, %p180
      %p182 = scmp.ne.s32.totalorder %s173, %s174
      %p183 = scmp.eq.s32.totalorder %s31, 0
      %p184 = por %p182, %p183
      %p185 = scmp.ne.s32.totalorder %s173, %s174
      %p186 = scmp.eq.s32.totalorder %s32, 7
      %p187 = por %p185, %p186
      %p189 = scmp.ne.s32.totalorder %s174, %s188
      %p190 = scmp.eq.s32.totalorder %s32, 0
      %p191 = por %p189, %p190
      %s193 = sadd.s32 %s192, 1
      %p196 = scmp.eq.s32.totalorder %s26, 7
      %p197 = scmp.ne.s32.totalorder %s192, %s194
      %p198 = scmp.eq.s32.totalorder %s26, 0
      %p199 = por %p197, %p198
      %p200 = scmp.ne.s32.totalorder %s192, %s194
      %p201 = scmp.eq.s32.totalorder %s31, 7
      %p202 = por %p200, %p201
      %p203 = scmp.ne.s32.totalorder %s194, %s195
      %p204 = scmp.eq.s32.totalorder %s31, 0
      %p205 = por %p203, %p204
      %p206 = scmp.ne.s32.totalorder %s194, %s195
      %p207 = scmp.eq.s32.totalorder %s32, 7
      %p208 = por %p206, %p207
      %p210 = scmp.ne.s32.totalorder %s195, %s209
      %p211 = scmp.eq.s32.totalorder %s32, 0
      %p212 = por %p210, %p211
      %s213 = ssub.s32 %s33, %s45
      %p214 = scmp.eq.s32.totalorder %s213, 0
      %s216 = sadd.s32 %s215, 1
      %s217 = scalar_select %p214, %s215, %s216
      %p220 = pneg %p214
      %p221 = scmp.eq.s32.totalorder %s26, 7
      %p222 = por %p220, %p221
      %p223 = scmp.ne.s32.totalorder %s215, %s218
      %p224 = scmp.eq.s32.totalorder %s26, 0
      %p225 = por %p223, %p224
      %p226 = scmp.ne.s32.totalorder %s215, %s218
      %p227 = scmp.eq.s32.totalorder %s31, 7
      %p228 = por %p226, %p227
      %p229 = scmp.ne.s32.totalorder %s218, %s219
      %p230 = scmp.eq.s32.totalorder %s31, 0
      %p231 = por %p229, %p230
      %p232 = scmp.ne.s32.totalorder %s218, %s219
      %p233 = scmp.eq.s32.totalorder %s32, 7
      %p234 = por %p232, %p233
      %p236 = scmp.ne.s32.totalorder %s219, %s235
      %p237 = scmp.eq.s32.totalorder %s32, 0
      %p238 = por %p236, %p237
      %p239 = scmp.le.s32.totalorder 1, %s26
      %p240 = scmp.lt.s32.totalorder %s26, 9
      %p241 = pnand %p239, %p240
      %p242 = pneg %p241
      // Predicated region
      $region9: #{transformer_forward.14} parent=5 // pred_check
        _
      $region10: #{transformer_forward.14} parent=5 // pred_check_branch
        %244 = sbr.rel (%p241) target = $region12
      $region11: #{transformer_forward.14} parent=5 // pred_region
        %s245 = ssub.s32 %s26, 1
        // Predicated region
        $region13: #{transformer_forward.14} parent=11 // pred_check
          %p246 = pneg %p163
        $region14: #{transformer_forward.14} parent=11 // pred_check_branch
          %248 = sbr.rel (%p246) target = $region16
        $region15: #{transformer_forward.14} parent=11 // pred_region
          %s250 = ssub.s32 16, 16
          %251 = vsyncadd [#allocation10], %s250
          %s253 = sshll.u32 [#allocation11], 4
          %s254 = int_to_ptr.vmem [resolvable:$true] %s253
          %256 = dma.hbm_to_vmem [thread:$0]  %s4, 16, %s254, [#allocation10]
        $region16: #{transformer_forward.14} parent=11 // pred_fallthru
          _
        // Predicated region
        $region17: #{transformer_forward.14} parent=11 // pred_check
          %p257 = pneg %p184
        $region18: #{transformer_forward.14} parent=11 // pred_check_branch
          %259 = sbr.rel (%p257) target = $region20
        $region19: #{transformer_forward.14} parent=11 // pred_region
          %s261 = ssub.s32 16, 16
          %262 = vsyncadd [#allocation13], %s261
          %s264 = sshll.u32 [#allocation12], 4
          %s265 = int_to_ptr.vmem [resolvable:$true] %s264
          %267 = dma.hbm_to_vmem [thread:$0]  %s5, 16, %s265, [#allocation13]
        $region20: #{transformer_forward.14} parent=11 // pred_fallthru
          _
        // Predicated region
        $region21: #{transformer_forward.14} parent=11 // pred_check
          %p268 = pneg %p205
        $region22: #{transformer_forward.14} parent=11 // pred_check_branch
          %270 = sbr.rel (%p268) target = $region24
        $region23: #{transformer_forward.14} parent=11 // pred_region
          %s272 = ssub.s32 16, 16
          %273 = vsyncadd [#allocation13], %s272
          %s275 = sshll.u32 [#allocation14], 4
          %s276 = int_to_ptr.vmem [resolvable:$true] %s275
          %278 = dma.hbm_to_vmem [thread:$0]  %s6, 16, %s276, [#allocation13]
        $region24: #{transformer_forward.14} parent=11 // pred_fallthru
          _
      $region12: #{transformer_forward.14} parent=5 // pred_fallthru
        _
      %p279 = scmp.lt.s32.totalorder %s26, 8
      // Predicated region
      $region25: #{transformer_forward.14} parent=5 // pred_check
        %p280 = pneg %p279
      $region26: #{transformer_forward.14} parent=5 // pred_check_branch
        %282 = sbr.rel (%p280) target = $region28
      $region27: #{transformer_forward.14} parent=5 // pred_region
        // Predicated region
        $region29: #{transformer_forward.14} parent=27 // pred_check
          %p283 = pneg %p58
        $region30: #{transformer_forward.14} parent=27 // pred_check_branch
          %285 = sbr.rel (%p283) target = $region32
        $region31: #{transformer_forward.14} parent=27 // pred_region
          %s286 = sand.u32 %s48, 1
          %s287 = scalar_lea.sflag [#allocation4], %s286
          %s288 = sand.u32 %s48, 1
          %s289 = smul.addr %s288, 4
          %s290 = scalar_lea.vmem [#allocation3], %s289
          %s292 = ssub.s32 64, 64
          %293 = vsyncadd %s287, %s292
          %s294 = smul.addr %s33, 64
          %s295 = scalar_lea.hbm %s0, %s294
          %s297 = sshll.u32 %s290, 4
          %s298 = int_to_ptr.vmem [resolvable:$true] %s297
          %300 = dma.hbm_to_vmem [thread:$0]  %s295, 64, %s298, %s287
        $region32: #{transformer_forward.14} parent=27 // pred_fallthru
          _
        // Predicated region
        $region33: #{transformer_forward.14} parent=27 // pred_check
          %p301 = pneg %p84
        $region34: #{transformer_forward.14} parent=27 // pred_check_branch
          %303 = sbr.rel (%p301) target = $region36
        $region35: #{transformer_forward.14} parent=27 // pred_region
          %s304 = sand.u32 %s26, 1
          %s305 = scalar_lea.sflag [#allocation7], %s304
          %s306 = sand.u32 %s74, 1
          %s307 = smul.addr %s306, 64
          %s308 = scalar_lea.vmem [#allocation6], %s307
          %s309 = smul.u32 4, %s34
          %s311 = ssub.s32 1024, 1024
          %312 = vsyncadd %s305, %s311
          %s313 = smul.addr %s309, 64
          %s314 = scalar_lea.hbm %s1, %s313
          %s315 = sshll.u32 %s308, 4
          %s316 = int_to_ptr.vmem [resolvable:$true] %s315
          %321 = dma.hbm_to_vmem [thread:$0]  %s314, 1024, %s316, %s305, 1024, 256, 16
        $region36: #{transformer_forward.14} parent=27 // pred_fallthru
          _
        // Predicated region
        $region37: #{transformer_forward.14} parent=27 // pred_check
          %p322 = pneg %p110
        $region38: #{transformer_forward.14} parent=27 // pred_check_branch
          %324 = sbr.rel (%p322) target = $region40
        $region39: #{transformer_forward.14} parent=27 // pred_region
          %s325 = sand.u32 %s26, 1
          %s326 = scalar_lea.sflag [#allocation7], %s325
          %s327 = sand.u32 %s100, 1
          %s328 = smul.addr %s327, 4
          %s329 = scalar_lea.vmem [#allocation8], %s328
          %s330 = smul.u32 4, %s34
          %s332 = ssub.s32 64, 64
          %333 = vsyncadd %s326, %s332
          %s334 = smul.addr %s330, 16
          %s335 = scalar_lea.hbm %s2, %s334
          %s337 = sshll.u32 %s329, 4
          %s338 = int_to_ptr.vmem [resolvable:$true] %s337
          %340 = dma.hbm_to_vmem [thread:$0]  %s335, 64, %s338, %s326
        $region40: #{transformer_forward.14} parent=27 // pred_fallthru
          _
        // Predicated region
        $region41: #{transformer_forward.14} parent=27 // pred_check
          %p341 = pneg %p136
        $region42: #{transformer_forward.14} parent=27 // pred_check_branch
          %343 = sbr.rel (%p341) target = $region44
        $region43: #{transformer_forward.14} parent=27 // pred_region
          %s344 = sand.u32 %s26, 1
          %s345 = scalar_lea.sflag [#allocation10], %s344
          %s346 = sand.u32 %s126, 1
          %s347 = smul.addr %s346, 256
          %s348 = scalar_lea.vmem [#allocation9], %s347
          %s349 = smul.u32 64, %s34
          %s351 = ssub.s32 4096, 4096
          %352 = vsyncadd %s345, %s351
          %s353 = smul.addr %s349, 64
          %s354 = scalar_lea.hbm %s3, %s353
          %s355 = sshll.u32 %s348, 4
          %s356 = int_to_ptr.vmem [resolvable:$true] %s355
          %361 = dma.hbm_to_vmem [thread:$0]  %s354, 4096, %s356, %s345, 64, 64, 4
        $region44: #{transformer_forward.14} parent=27 // pred_fallthru
          _
      $region28: #{transformer_forward.14} parent=5 // pred_fallthru
        _
      %p362 = scmp.le.s32.totalorder 1, %s26
      %p363 = scmp.lt.s32.totalorder %s26, 9
      %p364 = pnand %p362, %p363
      %p365 = pneg %p364
      // Predicated region
      $region45: #{transformer_forward.14} parent=5 // pred_check
        _
      $region46: #{transformer_forward.14} parent=5 // pred_check_branch
        %367 = sbr.rel (%p364) target = $region48
      $region47: #{transformer_forward.14} parent=5 // pred_region
        %s368 = ssub.s32 %s26, 1
        %s369 = sand.u32 %s51, 1
        %s370 = scalar_lea.sflag [#allocation4], %s369
        %s371 = sand.u32 %s51, 1
        %s372 = smul.addr %s371, 4
        %s373 = scalar_lea.vmem [#allocation3], %s372
        // Predicated region
        $region49: #{transformer_forward.14} parent=47 // pred_check
          %p374 = pneg %p64
        $region50: #{transformer_forward.14} parent=47 // pred_check_branch
          %376 = sbr.rel (%p374) target = $region52
        $region51: #{transformer_forward.14} parent=47 // pred_region
          %377 = dma.done %s370, 64
        $region52: #{transformer_forward.14} parent=47 // pred_fallthru
          _
        %s378 = sand.u32 %s31, 1
        %s379 = scalar_lea.sflag [#allocation7], %s378
        %s380 = sand.u32 %s77, 1
        %s381 = smul.addr %s380, 64
        %s382 = scalar_lea.vmem [#allocation6], %s381
        // Predicated region
        $region53: #{transformer_forward.14} parent=47 // pred_check
          %p383 = pneg %p90
        $region54: #{transformer_forward.14} parent=47 // pred_check_branch
          %385 = sbr.rel (%p383) target = $region56
        $region55: #{transformer_forward.14} parent=47 // pred_region
          %386 = dma.done %s379, 1024
        $region56: #{transformer_forward.14} parent=47 // pred_fallthru
          _
        %s387 = sand.u32 %s31, 1
        %s388 = scalar_lea.sflag [#allocation7], %s387
        %s389 = sand.u32 %s103, 1
        %s390 = smul.addr %s389, 4
        %s391 = scalar_lea.vmem [#allocation8], %s390
        // Predicated region
        $region57: #{transformer_forward.14} parent=47 // pred_check
          %p392 = pneg %p116
        $region58: #{transformer_forward.14} parent=47 // pred_check_branch
          %394 = sbr.rel (%p392) target = $region60
        $region59: #{transformer_forward.14} parent=47 // pred_region
          %395 = dma.done %s388, 64
        $region60: #{transformer_forward.14} parent=47 // pred_fallthru
          _
        %s396 = sand.u32 %s31, 1
        %s397 = scalar_lea.sflag [#allocation10], %s396
        %s398 = sand.u32 %s129, 1
        %s399 = smul.addr %s398, 256
        %s400 = scalar_lea.vmem [#allocation9], %s399
        // Predicated region
        $region61: #{transformer_forward.14} parent=47 // pred_check
          %p401 = pneg %p142
        $region62: #{transformer_forward.14} parent=47 // pred_check_branch
          %403 = sbr.rel (%p401) target = $region64
        $region63: #{transformer_forward.14} parent=47 // pred_region
          %404 = dma.done %s397, 4096
        $region64: #{transformer_forward.14} parent=47 // pred_fallthru
          _
        // Predicated region
        $region65: #{transformer_forward.14} parent=47 // pred_check
          %p405 = pneg %p163
        $region66: #{transformer_forward.14} parent=47 // pred_check_branch
          %407 = sbr.rel (%p405) target = $region68
        $region67: #{transformer_forward.14} parent=47 // pred_region
          %408 = dma.done [#allocation10], 16
        $region68: #{transformer_forward.14} parent=47 // pred_fallthru
          _
        // Predicated region
        $region69: #{transformer_forward.14} parent=47 // pred_check
          %p409 = pneg %p184
        $region70: #{transformer_forward.14} parent=47 // pred_check_branch
          %411 = sbr.rel (%p409) target = $region72
        $region71: #{transformer_forward.14} parent=47 // pred_region
          %412 = dma.done [#allocation13], 16
        $region72: #{transformer_forward.14} parent=47 // pred_fallthru
          _
        // Predicated region
        $region73: #{transformer_forward.14} parent=47 // pred_check
          %p413 = pneg %p205
        $region74: #{transformer_forward.14} parent=47 // pred_check_branch
          %415 = sbr.rel (%p413) target = $region76
        $region75: #{transformer_forward.14} parent=47 // pred_region
          %416 = dma.done [#allocation13], 16
        $region76: #{transformer_forward.14} parent=47 // pred_fallthru
          _
        %s417 = sand.u32 %s51, 1
        %s418 = scalar_lea.sflag [#allocation4], %s417
        %s419 = sand.u32 %s51, 1
        %s420 = smul.addr %s419, 4
        %s421 = scalar_lea.vmem [#allocation3], %s420
        %p422 = pneg %p64
        %p423 = pneg %p61
        %s424 = sand.u32 %s31, 1
        %s425 = scalar_lea.sflag [#allocation7], %s424
        %s426 = sand.u32 %s77, 1
        %s427 = smul.addr %s426, 64
        %s428 = scalar_lea.vmem [#allocation6], %s427
        %p429 = pneg %p90
        %p430 = pneg %p87
        %s431 = sand.u32 %s31, 1
        %s432 = scalar_lea.sflag [#allocation7], %s431
        %s433 = sand.u32 %s103, 1
        %s434 = smul.addr %s433, 4
        %s435 = scalar_lea.vmem [#allocation8], %s434
        %p436 = pneg %p116
        %p437 = pneg %p113
        %s438 = sand.u32 %s31, 1
        %s439 = scalar_lea.sflag [#allocation10], %s438
        %s440 = sand.u32 %s129, 1
        %s441 = smul.addr %s440, 256
        %s442 = scalar_lea.vmem [#allocation9], %s441
        %p443 = pneg %p142
        %p444 = pneg %p139
        %p445 = pneg %p163
        %p446 = pneg %p160
        %p447 = pneg %p184
        %p448 = pneg %p181
        %p449 = pneg %p205
        %p450 = pneg %p202
        %p451 = pneg %p231
        %p452 = pneg %p228
        %s453 = sand.u32 %s218, 1
        %s454 = scalar_lea.sflag [#allocation5], %s453
        %s455 = sand.u32 %s218, 1
        %s456 = smul.addr %s455, 4
        %s457 = scalar_lea.vmem [#allocation15], %s456
        %s458 = smul.u32 4, %s36
        %s459 = smul.u32 4, %s36
        %s460 = smul.u32 64, %s36
        %p462 = scmp.eq.s32.totalorder %s36, 0
        // Predicated region
        $region77: #{transformer_forward.14} parent=47 // pred_check
          %p463 = pneg %p462
        $region78: #{transformer_forward.14} parent=47 // pred_check_branch
          %465 = sbr.rel (%p463) target = $region80
        $region79: #{transformer_forward.14} parent=47 // pred_region
          %vm466 = vcmask 261120
          %467 = vst.msk [vmem:[#allocation2] sm:$0xff] %vm466, 0.0
        $region80: #{transformer_forward.14} parent=47 // pred_fallthru
          _
        %v468 = vld [vmem:[%s373] sm:$0xf]
        %v469 = vld [vmem:[%s382] sm:$0xff]
        %v470 = vld [vmem:[%s382 + $0x8] sm:$0xff]
        %v471 = vld [vmem:[%s382 + $0x10] sm:$0xff]
        %v472 = vld [vmem:[%s382 + $0x18] sm:$0xff]
        %v473 = vld [vmem:[%s382 + $0x20] sm:$0xff]
        %v474 = vld [vmem:[%s382 + $0x28] sm:$0xff]
        %v475 = vld [vmem:[%s382 + $0x30] sm:$0xff]
        %v476 = vld [vmem:[%s382 + $0x38] sm:$0xff]
        %v477 = vld [vmem:[%s391] sm:$0xf]
        %v479 = vlaneseq
        %v480 = vshrl.u32 %v479, 7
        %v481 = vsub.s32 0, %v480
        %v482 = vrot.slane %v477, %v481
        %v483 = vlaneseq
        %v484 = vshrl.u32 %v483, 7
        %v485 = vsub.s32 1, %v484
        %v486 = vrot.slane %v477, %v485
        %v487 = vlaneseq
        %v488 = vshrl.u32 %v487, 7
        %v489 = vsub.s32 2, %v488
        %v490 = vrot.slane %v477, %v489
        %v491 = vlaneseq
        %v492 = vshrl.u32 %v491, 7
        %v493 = vsub.s32 3, %v492
        %v494 = vrot.slane %v477, %v493
        %v507 = vunpack.c.l.b16 %v469
        %v508 = vunpack.c.h.b16 %v469
        %v509 = vunpack.c.l.b16 %v470
        %v510 = vunpack.c.h.b16 %v470
        %v511 = vunpack.c.l.b16 %v471
        %v512 = vunpack.c.h.b16 %v471
        %v513 = vunpack.c.l.b16 %v472
        %v514 = vunpack.c.h.b16 %v472
        %v515 = vunpack.c.l.b16 %v473
        %v516 = vunpack.c.h.b16 %v473
        %v517 = vunpack.c.l.b16 %v474
        %v518 = vunpack.c.h.b16 %v474
        %v519 = vunpack.c.l.b16 %v475
        %v520 = vunpack.c.h.b16 %v475
        %v521 = vunpack.c.l.b16 %v476
        %v522 = vunpack.c.h.b16 %v476
        %v523 = vpack.c.b16 %v511, %v507
        %v524 = vpack.c.b16 %v512, %v508
        %v525 = vpack.c.b16 %v513, %v509
        %v526 = vpack.c.b16 %v514, %v510
        %v527 = vpack.c.b16 %v519, %v515
        %v528 = vpack.c.b16 %v520, %v516
        %v529 = vpack.c.b16 %v521, %v517
        %v530 = vpack.c.b16 %v522, %v518
        %vm539 = vcmask 261120
        %v541 = vsel %vm539, %v468, 0
        %543 = vmatprep.subr.bf16.mxu0 %v524
        %544 = vmatpush1.bf16.msra.mxu0 %v523
        %545 = vmatprep.subr.bf16.mxu0 %v528
        %546 = vmatpush1.bf16.msra.mxu0 %v527
        %547 = vmatprep.subr.bf16.mxu0 0
        %548 = vmatpush1.bf16.msra.mxu0 0
        %549 = vmatprep.subr.bf16.mxu0 0
        %550 = vmatpush1.bf16.msra.mxu0 0
        %551 = vmatprep.subr.bf16.mxu0 0
        %552 = vmatpush1.bf16.msra.mxu0 0
        %553 = vmatprep.subr.bf16.mxu0 0
        %554 = vmatpush1.bf16.msra.mxu0 0
        %555 = vmatprep.subr.bf16.mxu0 0
        %556 = vmatpush1.bf16.msra.mxu0 0
        %557 = vmatprep.subr.bf16.mxu0 0
        %558 = vmatpush1.bf16.msra.mxu0 0
        %559 = vmatprep.subr.bf16.mxu0 0
        %560 = vmatpush1.bf16.msra.mxu0 0
        %561 = vmatprep.subr.bf16.mxu0 0
        %562 = vmatpush1.bf16.msra.mxu0 0
        %563 = vmatprep.subr.bf16.mxu0 0
        %564 = vmatpush1.bf16.msra.mxu0 0
        %565 = vmatprep.subr.bf16.mxu0 0
        %566 = vmatpush1.bf16.msra.mxu0 0
        %567 = vmatprep.subr.bf16.mxu0 0
        %568 = vmatpush1.bf16.msra.mxu0 0
        %569 = vmatprep.subr.bf16.mxu0 0
        %570 = vmatpush1.bf16.msra.mxu0 0
        %571 = vmatprep.subr.bf16.mxu0 0
        %572 = vmatpush1.bf16.msra.mxu0 0
        %573 = vmatprep.subr.bf16.mxu0 0
        %574 = vmatpush1.bf16.msra.mxu0 0
        %575 = vmatprep.mubr.bf16.mxu0 0
        %576 = vmatmul.mubr.bf16.gmra.mrb[0].mxu0 %v541
        %v577 = vpop.f32.mrb[0].mxu0
        %v578 = vadd.f32 %v482, %v577
        %v579 = vpop.f32.mrb[0].mxu0
        %v580 = vadd.f32 %v486, %v579
        %v581 = vpop.f32.mrb[0].mxu0
        %v582 = vpop.f32.mrb[0].mxu0
        %583 = vdwg.mxu0
        %584 = vmatprep.subr.bf16.mxu0 %v526
        %585 = vmatpush1.bf16.msra.mxu0 %v525
        %586 = vmatprep.subr.bf16.mxu0 %v530
        %587 = vmatpush1.bf16.msra.mxu0 %v529
        %588 = vmatprep.subr.bf16.mxu0 0
        %589 = vmatpush1.bf16.msra.mxu0 0
        %590 = vmatprep.subr.bf16.mxu0 0
        %591 = vmatpush1.bf16.msra.mxu0 0
        %592 = vmatprep.subr.bf16.mxu0 0
        %593 = vmatpush1.bf16.msra.mxu0 0
        %594 = vmatprep.subr.bf16.mxu0 0
        %595 = vmatpush1.bf16.msra.mxu0 0
        %596 = vmatprep.subr.bf16.mxu0 0
        %597 = vmatpush1.bf16.msra.mxu0 0
        %598 = vmatprep.subr.bf16.mxu0 0
        %599 = vmatpush1.bf16.msra.mxu0 0
        %600 = vmatprep.subr.bf16.mxu0 0
        %601 = vmatpush1.bf16.msra.mxu0 0
        %602 = vmatprep.subr.bf16.mxu0 0
        %603 = vmatpush1.bf16.msra.mxu0 0
        %604 = vmatprep.subr.bf16.mxu0 0
        %605 = vmatpush1.bf16.msra.mxu0 0
        %606 = vmatprep.subr.bf16.mxu0 0
        %607 = vmatpush1.bf16.msra.mxu0 0
        %608 = vmatprep.subr.bf16.mxu0 0
        %609 = vmatpush1.bf16.msra.mxu0 0
        %610 = vmatprep.subr.bf16.mxu0 0
        %611 = vmatpush1.bf16.msra.mxu0 0
        %612 = vmatprep.subr.bf16.mxu0 0
        %613 = vmatpush1.bf16.msra.mxu0 0
        %614 = vmatprep.subr.bf16.mxu0 0
        %615 = vmatpush1.bf16.msra.mxu0 0
        %616 = vmatprep.mubr.bf16.mxu0 0
        %617 = vmatmul.mubr.bf16.gmra.mrb[0].mxu0 %v541
        %v618 = vpop.f32.mrb[0].mxu0
        %v619 = vadd.f32 %v490, %v618
        %v620 = vpop.f32.mrb[0].mxu0
        %v621 = vadd.f32 %v494, %v620
        %v622 = vpop.f32.mrb[0].mxu0
        %v623 = vpop.f32.mrb[0].mxu0
        %624 = vdwg.mxu0
        %v625 = vmax.f32 %v578, 0.0
        %v626 = vmax.f32 %v580, 0.0
        %v627 = vmax.f32 %v619, 0.0
        %v628 = vmax.f32 %v621, 0.0
        %v629 = vld [vmem:[#allocation2] sm:$0xff]
        %v630 = vpack.c.bf16 %v625, %v625
        %v631 = vpack.c.bf16 %v626, %v626
        %v632 = vpack.c.bf16 %v627, %v627
        %v633 = vpack.c.bf16 %v628, %v628
        %v634 = vld [vmem:[%s400] sm:$0xf]
        %v635 = vld [vmem:[%s400 + $0x4] sm:$0xf]
        %v636 = vld [vmem:[%s400 + $0x8] sm:$0xf]
        %v637 = vld [vmem:[%s400 + $0xc] sm:$0xf]
        %v638 = vld [vmem:[%s400 + $0x10] sm:$0xf]
        %v639 = vld [vmem:[%s400 + $0x14] sm:$0xf]
        %v640 = vld [vmem:[%s400 + $0x18] sm:$0xf]
        %v641 = vld [vmem:[%s400 + $0x1c] sm:$0xf]
        %v642 = vld [vmem:[%s400 + $0x20] sm:$0xf]
        %v643 = vld [vmem:[%s400 + $0x24] sm:$0xf]
        %v644 = vld [vmem:[%s400 + $0x28] sm:$0xf]
        %v645 = vld [vmem:[%s400 + $0x2c] sm:$0xf]
        %v646 = vld [vmem:[%s400 + $0x30] sm:$0xf]
        %v647 = vld [vmem:[%s400 + $0x34] sm:$0xf]
        %v648 = vld [vmem:[%s400 + $0x38] sm:$0xf]
        %v649 = vld [vmem:[%s400 + $0x3c] sm:$0xf]
        %v650 = vld [vmem:[%s400 + $0x40] sm:$0xf]
        %v651 = vld [vmem:[%s400 + $0x44] sm:$0xf]
        %v652 = vld [vmem:[%s400 + $0x48] sm:$0xf]
        %v653 = vld [vmem:[%s400 + $0x4c] sm:$0xf]
        %v654 = vld [vmem:[%s400 + $0x50] sm:$0xf]
        %v655 = vld [vmem:[%s400 + $0x54] sm:$0xf]
        %v656 = vld [vmem:[%s400 + $0x58] sm:$0xf]
        %v657 = vld [vmem:[%s400 + $0x5c] sm:$0xf]
        %v658 = vld [vmem:[%s400 + $0x60] sm:$0xf]
        %v659 = vld [vmem:[%s400 + $0x64] sm:$0xf]
        %v660 = vld [vmem:[%s400 + $0x68] sm:$0xf]
        %v661 = vld [vmem:[%s400 + $0x6c] sm:$0xf]
        %v662 = vld [vmem:[%s400 + $0x70] sm:$0xf]
        %v663 = vld [vmem:[%s400 + $0x74] sm:$0xf]
        %v664 = vld [vmem:[%s400 + $0x78] sm:$0xf]
        %v665 = vld [vmem:[%s400 + $0x7c] sm:$0xf]
        %v666 = vld [vmem:[%s400 + $0x80] sm:$0xf]
        %v667 = vld [vmem:[%s400 + $0x84] sm:$0xf]
        %v668 = vld [vmem:[%s400 + $0x88] sm:$0xf]
        %v669 = vld [vmem:[%s400 + $0x8c] sm:$0xf]
        %v670 = vld [vmem:[%s400 + $0x90] sm:$0xf]
        %v671 = vld [vmem:[%s400 + $0x94] sm:$0xf]
        %v672 = vld [vmem:[%s400 + $0x98] sm:$0xf]
        %v673 = vld [vmem:[%s400 + $0x9c] sm:$0xf]
        %v674 = vld [vmem:[%s400 + $0xa0] sm:$0xf]
        %v675 = vld [vmem:[%s400 + $0xa4] sm:$0xf]
        %v676 = vld [vmem:[%s400 + $0xa8] sm:$0xf]
        %v677 = vld [vmem:[%s400 + $0xac] sm:$0xf]
        %v678 = vld [vmem:[%s400 + $0xb0] sm:$0xf]
        %v679 = vld [vmem:[%s400 + $0xb4] sm:$0xf]
        %v680 = vld [vmem:[%s400 + $0xb8] sm:$0xf]
        %v681 = vld [vmem:[%s400 + $0xbc] sm:$0xf]
        %v682 = vld [vmem:[%s400 + $0xc0] sm:$0xf]
        %v683 = vld [vmem:[%s400 + $0xc4] sm:$0xf]
        %v684 = vld [vmem:[%s400 + $0xc8] sm:$0xf]
        %v685 = vld [vmem:[%s400 + $0xcc] sm:$0xf]
        %v686 = vld [vmem:[%s400 + $0xd0] sm:$0xf]
        %v687 = vld [vmem:[%s400 + $0xd4] sm:$0xf]
        %v688 = vld [vmem:[%s400 + $0xd8] sm:$0xf]
        %v689 = vld [vmem:[%s400 + $0xdc] sm:$0xf]
        %v690 = vld [vmem:[%s400 + $0xe0] sm:$0xf]
        %v691 = vld [vmem:[%s400 + $0xe4] sm:$0xf]
        %v692 = vld [vmem:[%s400 + $0xe8] sm:$0xf]
        %v693 = vld [vmem:[%s400 + $0xec] sm:$0xf]
        %v694 = vld [vmem:[%s400 + $0xf0] sm:$0xf]
        %v695 = vld [vmem:[%s400 + $0xf4] sm:$0xf]
        %v696 = vld [vmem:[%s400 + $0xf8] sm:$0xf]
        %v697 = vld [vmem:[%s400 + $0xfc] sm:$0xf]
        %v762 = vunpack.c.l.b16 %v634
        %v763 = vunpack.c.l.b16 %v635
        %v764 = vunpack.c.l.b16 %v636
        %v765 = vunpack.c.l.b16 %v637
        %v766 = vunpack.c.l.b16 %v638
        %v767 = vunpack.c.l.b16 %v639
        %v768 = vunpack.c.l.b16 %v640
        %v769 = vunpack.c.l.b16 %v641
        %v770 = vunpack.c.l.b16 %v642
        %v771 = vunpack.c.l.b16 %v643
        %v772 = vunpack.c.l.b16 %v644
        %v773 = vunpack.c.l.b16 %v645
        %v774 = vunpack.c.l.b16 %v646
        %v775 = vunpack.c.l.b16 %v647
        %v776 = vunpack.c.l.b16 %v648
        %v777 = vunpack.c.l.b16 %v649
        %v778 = vunpack.c.l.b16 %v650
        %v779 = vunpack.c.l.b16 %v651
        %v780 = vunpack.c.l.b16 %v652
        %v781 = vunpack.c.l.b16 %v653
        %v782 = vunpack.c.l.b16 %v654
        %v783 = vunpack.c.l.b16 %v655
        %v784 = vunpack.c.l.b16 %v656
        %v785 = vunpack.c.l.b16 %v657
        %v786 = vunpack.c.l.b16 %v658
        %v787 = vunpack.c.l.b16 %v659
        %v788 = vunpack.c.l.b16 %v660
        %v789 = vunpack.c.l.b16 %v661
        %v790 = vunpack.c.l.b16 %v662
        %v791 = vunpack.c.l.b16 %v663
        %v792 = vunpack.c.l.b16 %v664
        %v793 = vunpack.c.l.b16 %v665
        %v794 = vunpack.c.l.b16 %v666
        %v795 = vunpack.c.l.b16 %v667
        %v796 = vunpack.c.l.b16 %v668
        %v797 = vunpack.c.l.b16 %v669
        %v798 = vunpack.c.l.b16 %v670
        %v799 = vunpack.c.l.b16 %v671
        %v800 = vunpack.c.l.b16 %v672
        %v801 = vunpack.c.l.b16 %v673
        %v802 = vunpack.c.l.b16 %v674
        %v803 = vunpack.c.l.b16 %v675
        %v804 = vunpack.c.l.b16 %v676
        %v805 = vunpack.c.l.b16 %v677
        %v806 = vunpack.c.l.b16 %v678
        %v807 = vunpack.c.l.b16 %v679
        %v808 = vunpack.c.l.b16 %v680
        %v809 = vunpack.c.l.b16 %v681
        %v810 = vunpack.c.l.b16 %v682
        %v811 = vunpack.c.l.b16 %v683
        %v812 = vunpack.c.l.b16 %v684
        %v813 = vunpack.c.l.b16 %v685
        %v814 = vunpack.c.l.b16 %v686
        %v815 = vunpack.c.l.b16 %v687
        %v816 = vunpack.c.l.b16 %v688
        %v817 = vunpack.c.l.b16 %v689
        %v818 = vunpack.c.l.b16 %v690
        %v819 = vunpack.c.l.b16 %v691
        %v820 = vunpack.c.l.b16 %v692
        %v821 = vunpack.c.l.b16 %v693
        %v822 = vunpack.c.l.b16 %v694
        %v823 = vunpack.c.l.b16 %v695
        %v824 = vunpack.c.l.b16 %v696
        %v825 = vunpack.c.l.b16 %v697
        %v826 = vpack.c.b16 %v763, %v762
        %v827 = vpack.c.b16 %v765, %v764
        %v828 = vpack.c.b16 %v767, %v766
        %v829 = vpack.c.b16 %v769, %v768
        %v830 = vpack.c.b16 %v771, %v770
        %v831 = vpack.c.b16 %v773, %v772
        %v832 = vpack.c.b16 %v775, %v774
        %v833 = vpack.c.b16 %v777, %v776
        %v834 = vpack.c.b16 %v779, %v778
        %v835 = vpack.c.b16 %v781, %v780
        %v836 = vpack.c.b16 %v783, %v782
        %v837 = vpack.c.b16 %v785, %v784
        %v838 = vpack.c.b16 %v787, %v786
        %v839 = vpack.c.b16 %v789, %v788
        %v840 = vpack.c.b16 %v791, %v790
        %v841 = vpack.c.b16 %v793, %v792
        %v842 = vpack.c.b16 %v795, %v794
        %v843 = vpack.c.b16 %v797, %v796
        %v844 = vpack.c.b16 %v799, %v798
        %v845 = vpack.c.b16 %v801, %v800
        %v846 = vpack.c.b16 %v803, %v802
        %v847 = vpack.c.b16 %v805, %v804
        %v848 = vpack.c.b16 %v807, %v806
        %v849 = vpack.c.b16 %v809, %v808
        %v850 = vpack.c.b16 %v811, %v810
        %v851 = vpack.c.b16 %v813, %v812
        %v852 = vpack.c.b16 %v815, %v814
        %v853 = vpack.c.b16 %v817, %v816
        %v854 = vpack.c.b16 %v819, %v818
        %v855 = vpack.c.b16 %v821, %v820
        %v856 = vpack.c.b16 %v823, %v822
        %v857 = vpack.c.b16 %v825, %v824
        %890 = vmatprep.subr.bf16.mxu0 0
        %891 = vmatpush1.bf16.msra.mxu0 %v826
        %892 = vmatprep.subr.bf16.mxu0 0
        %893 = vmatpush1.bf16.msra.mxu0 %v827
        %894 = vmatprep.subr.bf16.mxu0 0
        %895 = vmatpush1.bf16.msra.mxu0 %v828
        %896 = vmatprep.subr.bf16.mxu0 0
        %897 = vmatpush1.bf16.msra.mxu0 %v829
        %898 = vmatprep.subr.bf16.mxu0 0
        %899 = vmatpush1.bf16.msra.mxu0 %v830
        %900 = vmatprep.subr.bf16.mxu0 0
        %901 = vmatpush1.bf16.msra.mxu0 %v831
        %902 = vmatprep.subr.bf16.mxu0 0
        %903 = vmatpush1.bf16.msra.mxu0 %v832
        %904 = vmatprep.subr.bf16.mxu0 0
        %905 = vmatpush1.bf16.msra.mxu0 %v833
        %906 = vmatprep.subr.bf16.mxu0 0
        %907 = vmatpush1.bf16.msra.mxu0 %v834
        %908 = vmatprep.subr.bf16.mxu0 0
        %909 = vmatpush1.bf16.msra.mxu0 %v835
        %910 = vmatprep.subr.bf16.mxu0 0
        %911 = vmatpush1.bf16.msra.mxu0 %v836
        %912 = vmatprep.subr.bf16.mxu0 0
        %913 = vmatpush1.bf16.msra.mxu0 %v837
        %914 = vmatprep.subr.bf16.mxu0 0
        %915 = vmatpush1.bf16.msra.mxu0 %v838
        %916 = vmatprep.subr.bf16.mxu0 0
        %917 = vmatpush1.bf16.msra.mxu0 %v839
        %918 = vmatprep.subr.bf16.mxu0 0
        %919 = vmatpush1.bf16.msra.mxu0 %v840
        %920 = vmatprep.subr.bf16.mxu0 0
        %921 = vmatpush1.bf16.msra.mxu0 %v841
        %922 = vmatprep.mubr.bf16.mxu0 %v631
        %923 = vmatmul.mubr.bf16.gmra.mrb[0].mxu0 %v630
        %v924 = vpop.f32.mrb[0].mxu0
        %v925 = vadd.f32 0.0, %v924
        %v926 = vpop.f32.mrb[0].mxu0
        %v927 = vpop.f32.mrb[0].mxu0
        %v928 = vpop.f32.mrb[0].mxu0
        %929 = vdwg.mxu0
        %930 = vmatprep.subr.bf16.mxu0 0
        %931 = vmatpush1.bf16.msra.mxu0 %v842
        %932 = vmatprep.subr.bf16.mxu0 0
        %933 = vmatpush1.bf16.msra.mxu0 %v843
        %934 = vmatprep.subr.bf16.mxu0 0
        %935 = vmatpush1.bf16.msra.mxu0 %v844
        %936 = vmatprep.subr.bf16.mxu0 0
        %937 = vmatpush1.bf16.msra.mxu0 %v845
        %938 = vmatprep.subr.bf16.mxu0 0
        %939 = vmatpush1.bf16.msra.mxu0 %v846
        %940 = vmatprep.subr.bf16.mxu0 0
        %941 = vmatpush1.bf16.msra.mxu0 %v847
        %942 = vmatprep.subr.bf16.mxu0 0
        %943 = vmatpush1.bf16.msra.mxu0 %v848
        %944 = vmatprep.subr.bf16.mxu0 0
        %945 = vmatpush1.bf16.msra.mxu0 %v849
        %946 = vmatprep.subr.bf16.mxu0 0
        %947 = vmatpush1.bf16.msra.mxu0 %v850
        %948 = vmatprep.subr.bf16.mxu0 0
        %949 = vmatpush1.bf16.msra.mxu0 %v851
        %950 = vmatprep.subr.bf16.mxu0 0
        %951 = vmatpush1.bf16.msra.mxu0 %v852
        %952 = vmatprep.subr.bf16.mxu0 0
        %953 = vmatpush1.bf16.msra.mxu0 %v853
        %954 = vmatprep.subr.bf16.mxu0 0
        %955 = vmatpush1.bf16.msra.mxu0 %v854
        %956 = vmatprep.subr.bf16.mxu0 0
        %957 = vmatpush1.bf16.msra.mxu0 %v855
        %958 = vmatprep.subr.bf16.mxu0 0
        %959 = vmatpush1.bf16.msra.mxu0 %v856
        %960 = vmatprep.subr.bf16.mxu0 0
        %961 = vmatpush1.bf16.msra.mxu0 %v857
        %962 = vmatprep.mubr.bf16.mxu0 %v633
        %963 = vmatmul.mubr.bf16.gmra.mrb[0].mxu0 %v632
        %v964 = vpop.f32.mrb[0].mxu0
        %v965 = vadd.f32 %v925, %v964
        %v966 = vpop.f32.mrb[0].mxu0
        %v967 = vpop.f32.mrb[0].mxu0
        %v968 = vpop.f32.mrb[0].mxu0
        %969 = vdwg.mxu0
        %v970 = vadd.f32 %v629, %v965
        %971 = vst.msk [vmem:[#allocation2] sm:$0xff] %vm539, %v970
        %p972 = scmp.eq.s32.totalorder %s36, 3
        // Predicated region
        $region81: #{transformer_forward.14} parent=47 // pred_check
          %p973 = pneg %p972
        $region82: #{transformer_forward.14} parent=47 // pred_check_branch
          %975 = sbr.rel (%p973) target = $region84
        $region83: #{transformer_forward.14} parent=47 // pred_region
          %v976 = vld [vmem:[#allocation2] sm:$0xff]
          %v977 = vld [vmem:[#allocation11] sm:$0x1]
          %v979 = vlaneseq
          %v980 = vshrl.u32 %v979, 7
          %v981 = vsub.s32 0, %v980
          %v982 = vrot.slane %v977, %v981
          %v984 = vadd.f32 %v976, %v982
          %v985 = vld [vmem:[%s373] sm:$0xf]
          %v986 = vunpack.c.l.bf16 %v985
          %v987 = vadd.f32 %v984, %v986
          %v988 = vsel %vm539, %v987, 0.0
          %989 = vadd.xlane.f32.xlu0 %v988
          %v990 = vpop.xlane.xlu0 %989
          %v991 = vrcp.pop 32.0
          %v992 = vmul.f32 %v990, %v991
          %v993 = vsub.f32 %v987, %v992
          %v994 = vmul.f32 %v993, %v993
          %v995 = vsel %vm539, %v994, 0.0
          %996 = vadd.xlane.f32.xlu0 %v995
          %v997 = vpop.xlane.xlu0 %996
          %v998 = vmul.f32 %v997, %v991
          %v999 = vadd.f32 %v998, 1e-05
          %v1000 = vrsqrt.pop %v999
          %v1001 = vmul.f32 %v993, %v1000
          %v1002 = vld [vmem:[#allocation12] sm:$0x1]
          %v1004 = vlaneseq
          %v1005 = vshrl.u32 %v1004, 7
          %v1006 = vsub.s32 0, %v1005
          %v1007 = vrot.slane %v1002, %v1006
          %v1009 = vmul.f32 %v1001, %v1007
          %v1010 = vld [vmem:[#allocation14] sm:$0x1]
          %v1012 = vlaneseq
          %v1013 = vshrl.u32 %v1012, 7
          %v1014 = vsub.s32 0, %v1013
          %v1015 = vrot.slane %v1010, %v1014
          %v1017 = vadd.f32 %v1009, %v1015
          %v1018 = vpack.c.bf16 %v1017, %v1017
          %vm1019 = vcmask 257024
          %1020 = vst.msk [vmem:[%s457] sm:$0xf] %vm1019, %v1018
        $region84: #{transformer_forward.14} parent=47 // pred_fallthru
          _
        %s1021 = sand.u32 %s218, 1
        %s1022 = scalar_lea.sflag [#allocation5], %s1021
        %s1023 = sand.u32 %s218, 1
        %s1024 = smul.addr %s1023, 4
        %s1025 = scalar_lea.vmem [#allocation15], %s1024
        // Predicated region
        $region85: #{transformer_forward.14} parent=47 // pred_check
          %p1026 = pneg %p228
        $region86: #{transformer_forward.14} parent=47 // pred_check_branch
          %1028 = sbr.rel (%p1026) target = $region88
        $region87: #{transformer_forward.14} parent=47 // pred_region
          %s1030 = ssub.s32 64, 64
          %1031 = vsyncadd %s1022, %s1030
          %s1032 = smul.addr %s35, 64
          %s1033 = scalar_lea.hbm %s7, %s1032
          %s1035 = sshll.u32 %s1025, 4
          %s1036 = int_to_ptr.vmem [resolvable:$true] %s1035
          %1038 = dma.vmem_to_hbm [thread:$0]  %s1036, 64, %s1033, %s1022
        $region88: #{transformer_forward.14} parent=47 // pred_fallthru
          _
      $region48: #{transformer_forward.14} parent=5 // pred_fallthru
        _
      %p1039 = scmp.le.s32.totalorder 2, %s26
      // Predicated region
      $region89: #{transformer_forward.14} parent=5 // pred_check
        %p1040 = pneg %p1039
      $region90: #{transformer_forward.14} parent=5 // pred_check_branch
        %1042 = sbr.rel (%p1040) target = $region92
      $region91: #{transformer_forward.14} parent=5 // pred_region
        %s1043 = ssub.s32 %s26, 2
        // Predicated region
        $region93: #{transformer_forward.14} parent=91 // pred_check
          %p1044 = pneg %p234
        $region94: #{transformer_forward.14} parent=91 // pred_check_branch
          %1046 = sbr.rel (%p1044) target = $region96
        $region95: #{transformer_forward.14} parent=91 // pred_region
          %s1047 = sand.u32 %s219, 1
          %s1048 = scalar_lea.sflag [#allocation5], %s1047
          %s1049 = sand.u32 %s219, 1
          %s1050 = smul.addr %s1049, 4
          %s1051 = scalar_lea.vmem [#allocation15], %s1050
          %1052 = dma.done %s1048, 64
        $region96: #{transformer_forward.14} parent=91 // pred_fallthru
          _
      $region92: #{transformer_forward.14} parent=5 // pred_fallthru
        _
    $region6: #{transformer_forward.14} parent=1 // loop_footer
      %s30 = sadd.s32 1, %s26
    $region7: #{transformer_forward.14} parent=1 // loop_footer_branch
      %25 = sbr.rel target = $region3
    $region8: #{transformer_forward.14} parent=1 // loop_exit
      _
    %1053 = vsyncpa [#allocation4], 1
    %s1054 = scalar_lea.sflag [#allocation4], 1
    %1055 = vsyncpa %s1054, 1
    %1056 = vsyncpa [#allocation7], 1
    %s1057 = scalar_lea.sflag [#allocation7], 1
    %1058 = vsyncpa %s1057, 1
    %1059 = vsyncpa [#allocation10], 1
    %s1060 = scalar_lea.sflag [#allocation10], 1
    %1061 = vsyncpa %s1060, 1
    %1062 = vsyncpa [#allocation13], 1
    %1063 = vsyncpa [#allocation5], 1
    %s1064 = scalar_lea.sflag [#allocation5], 1
    %1065 = vsyncpa %s1064, 1

// kernel: transformer_forward.19
$region0: #{transformer_forward.19}
  #allocation0 [shape = 'u32[]', space=smem, size = 0x4, offset = 0x4, fixed_abs, tag = 'smem constant byte address 0x4 - core index']
  #allocation1 [shape = 'u32[144,128]{1,0:T(1,128)}', space=vmem, size = 0x12000, scoped, tag = 'internal scratch']
  %s0 = inlined_call_operand.hbm [shape: bf16[16,32], index: 0, kind: input, shape index: {}]
  %s1 = inlined_call_operand.hbm [shape: f32[1,32], index: 1, kind: input, shape index: {}]
  %s2 = inlined_call_operand.hbm [shape: f32[1,32], index: 2, kind: input, shape index: {}]
  %s3 = inlined_call_operand.hbm [shape: f32[16,32], index: 3, kind: output, shape index: {}]
  %s4 = sld [smem:[#allocation0]]
  $region57: #{transformer_forward.19} parent=0
    _
  %s6 = ssub.s32 1, %s4
  %s7 = scalar_select 0, %s6, %s4
  $region1: #{transformer_forward.19} parent=0
    #allocation2 [shape = 'u8[4096]{0}', space=vmem, size = 0x1000, scoped, tag = 'input window, operand 0']
    #allocation3 [shape = 's32[2]{0}', space=sflag, size = 0x8, scoped, tag = 'scoped memory for transformer_forward.19']
    #allocation4 [shape = 's32[2]{0}', space=sflag, size = 0x8, scoped, tag = 'scoped memory for transformer_forward.19']
    #allocation5 [shape = 'u8[512]{0}', space=vmem, size = 0x400, scoped, tag = 'input window, operand 1, single buffered']
    #allocation6 [shape = 's32[1]{0}', space=sflag, size = 0x4, scoped, tag = 'scoped memory for transformer_forward.19']
    #allocation7 [shape = 'u8[512]{0}', space=vmem, size = 0x400, scoped, tag = 'input window, operand 2, single buffered']
    #allocation8 [shape = 'u8[8192]{0}', space=vmem, size = 0x2000, scoped, tag = 'output window, operand 0']
    %8 = vsyncpa [#allocation3], 0
    %s9 = scalar_lea.sflag [#allocation3], 1
    %10 = vsyncpa %s9, 0
    %11 = vsyncpa [#allocation6], 0
    %12 = vsyncpa [#allocation4], 0
    %s13 = scalar_lea.sflag [#allocation4], 1
    %14 = vsyncpa %s13, 0
    loop: start=0, step=1, limit=4
    $region2: #{transformer_forward.19} parent=1 // loop_pre_header
      _
    $region3: #{transformer_forward.19} parent=1 // loop_header
      %s16 = sphi 0, %s20
      %p17 = scmp.ge.s32.totalorder %s16, 4
      %s26 = sphi 0, %s28
      %s29 = sphi 0, %s26
      %s30 = sphi 0, %s29
      %s46 = sphi 0, %s30
      %s50 = sphi 0, %s50
      %s52 = sphi 0, %s50
      %s53 = sphi 0, %s52
      %s67 = sphi 0, %s53
      %s71 = sphi 0, %s71
      %s73 = sphi 0, %s71
      %s74 = sphi 0, %s73
      %s88 = sphi 0, %s74
      %s94 = sphi 0, %s96
      %s97 = sphi 0, %s94
      %s98 = sphi 0, %s97
      %s114 = sphi 0, %s98
    $region4: #{transformer_forward.19} parent=1 // loop_header_branch
      %19 = sbr.rel (%p17) target = $region8
    $region5: #{transformer_forward.19} parent=1 // loop_body
      %s21 = ssub.s32 %s16, 1
      %s22 = ssub.s32 %s16, 2
      %s23 = sadd.s32 %s16, 1
      %s24 = ssub.s32 %s16, %s23
      %p25 = scmp.eq.s32.totalorder %s24, 0
      %s27 = sadd.s32 %s26, 1
      %s28 = scalar_select %p25, %s26, %s27
      %p31 = pneg %p25
      %p32 = scmp.eq.s32.totalorder %s16, 1
      %p33 = por %p31, %p32
      %p34 = scmp.ne.s32.totalorder %s26, %s29
      %p35 = scmp.eq.s32.totalorder %s16, 0
      %p36 = por %p34, %p35
      %p37 = scmp.ne.s32.totalorder %s26, %s29
      %p38 = scmp.eq.s32.totalorder %s21, 1
      %p39 = por %p37, %p38
      %p40 = scmp.ne.s32.totalorder %s29, %s30
      %p41 = scmp.eq.s32.totalorder %s21, 0
      %p42 = por %p40, %p41
      %p43 = scmp.ne.s32.totalorder %s29, %s30
      %p44 = scmp.eq.s32.totalorder %s22, 1
      %p45 = por %p43, %p44
      %p47 = scmp.ne.s32.totalorder %s30, %s46
      %p48 = scmp.eq.s32.totalorder %s22, 0
      %p49 = por %p47, %p48
      %s51 = sadd.s32 %s50, 1
      %p54 = scmp.eq.s32.totalorder %s16, 1
      %p55 = scmp.ne.s32.totalorder %s50, %s52
      %p56 = scmp.eq.s32.totalorder %s16, 0
      %p57 = por %p55, %p56
      %p58 = scmp.ne.s32.totalorder %s50, %s52
      %p59 = scmp.eq.s32.totalorder %s21, 1
      %p60 = por %p58, %p59
      %p61 = scmp.ne.s32.totalorder %s52, %s53
      %p62 = scmp.eq.s32.totalorder %s21, 0
      %p63 = por %p61, %p62
      %p64 = scmp.ne.s32.totalorder %s52, %s53
      %p65 = scmp.eq.s32.totalorder %s22, 1
      %p66 = por %p64, %p65
      %p68 = scmp.ne.s32.totalorder %s53, %s67
      %p69 = scmp.eq.s32.totalorder %s22, 0
      %p70 = por %p68, %p69
      %s72 = sadd.s32 %s71, 1
      %p75 = scmp.eq.s32.totalorder %s16, 1
      %p76 = scmp.ne.s32.totalorder %s71, %s73
      %p77 = scmp.eq.s32.totalorder %s16, 0
      %p78 = por %p76, %p77
      %p79 = scmp.ne.s32.totalorder %s71, %s73
      %p80 = scmp.eq.s32.totalorder %s21, 1
      %p81 = por %p79, %p80
      %p82 = scmp.ne.s32.totalorder %s73, %s74
      %p83 = scmp.eq.s32.totalorder %s21, 0
      %p84 = por %p82, %p83
      %p85 = scmp.ne.s32.totalorder %s73, %s74
      %p86 = scmp.eq.s32.totalorder %s22, 1
      %p87 = por %p85, %p86
      %p89 = scmp.ne.s32.totalorder %s74, %s88
      %p90 = scmp.eq.s32.totalorder %s22, 0
      %p91 = por %p89, %p90
      %s92 = ssub.s32 %s16, %s23
      %p93 = scmp.eq.s32.totalorder %s92, 0
      %s95 = sadd.s32 %s94, 1
      %s96 = scalar_select %p93, %s94, %s95
      %p99 = pneg %p93
      %p100 = scmp.eq.s32.totalorder %s16, 1
      %p101 = por %p99, %p100
      %p102 = scmp.ne.s32.totalorder %s94, %s97
      %p103 = scmp.eq.s32.totalorder %s16, 0
      %p104 = por %p102, %p103
      %p105 = scmp.ne.s32.totalorder %s94, %s97
      %p106 = scmp.eq.s32.totalorder %s21, 1
      %p107 = por %p105, %p106
      %p108 = scmp.ne.s32.totalorder %s97, %s98
      %p109 = scmp.eq.s32.totalorder %s21, 0
      %p110 = por %p108, %p109
      %p111 = scmp.ne.s32.totalorder %s97, %s98
      %p112 = scmp.eq.s32.totalorder %s22, 1
      %p113 = por %p111, %p112
      %p115 = scmp.ne.s32.totalorder %s98, %s114
      %p116 = scmp.eq.s32.totalorder %s22, 0
      %p117 = por %p115, %p116
      %p118 = scmp.le.s32.totalorder 1, %s16
      %p119 = scmp.lt.s32.totalorder %s16, 3
      %p120 = pnand %p118, %p119
      %p121 = pneg %p120
      // Predicated region
      $region9: #{transformer_forward.19} parent=5 // pred_check
        _
      $region10: #{transformer_forward.19} parent=5 // pred_check_branch
        %123 = sbr.rel (%p120) target = $region12
      $region11: #{transformer_forward.19} parent=5 // pred_region
        %s124 = ssub.s32 %s16, 1
        // Predicated region
        $region13: #{transformer_forward.19} parent=11 // pred_check
          %p125 = pneg %p63
        $region14: #{transformer_forward.19} parent=11 // pred_check_branch
          %127 = sbr.rel (%p125) target = $region16
        $region15: #{transformer_forward.19} parent=11 // pred_region
          %s129 = ssub.s32 16, 16
          %130 = vsyncadd [#allocation6], %s129
          %s132 = sshll.u32 [#allocation5], 4
          %s133 = int_to_ptr.vmem [resolvable:$true] %s132
          %135 = dma.hbm_to_vmem [thread:$0]  %s1, 16, %s133, [#allocation6]
        $region16: #{transformer_forward.19} parent=11 // pred_fallthru
          _
        // Predicated region
        $region17: #{transformer_forward.19} parent=11 // pred_check
          %p136 = pneg %p84
        $region18: #{transformer_forward.19} parent=11 // pred_check_branch
          %138 = sbr.rel (%p136) target = $region20
        $region19: #{transformer_forward.19} parent=11 // pred_region
          %s140 = ssub.s32 16, 16
          %141 = vsyncadd [#allocation6], %s140
          %s143 = sshll.u32 [#allocation7], 4
          %s144 = int_to_ptr.vmem [resolvable:$true] %s143
          %146 = dma.hbm_to_vmem [thread:$0]  %s2, 16, %s144, [#allocation6]
        $region20: #{transformer_forward.19} parent=11 // pred_fallthru
          _
      $region12: #{transformer_forward.19} parent=5 // pred_fallthru
        _
      %p147 = scmp.lt.s32.totalorder %s16, 2
      // Predicated region
      $region21: #{transformer_forward.19} parent=5 // pred_check
        %p148 = pneg %p147
      $region22: #{transformer_forward.19} parent=5 // pred_check_branch
        %150 = sbr.rel (%p148) target = $region24
      $region23: #{transformer_forward.19} parent=5 // pred_region
        // Predicated region
        $region25: #{transformer_forward.19} parent=23 // pred_check
          %p151 = pneg %p36
        $region26: #{transformer_forward.19} parent=23 // pred_check_branch
          %153 = sbr.rel (%p151) target = $region28
        $region27: #{transformer_forward.19} parent=23 // pred_region
          %s154 = sand.u32 %s26, 1
          %s155 = scalar_lea.sflag [#allocation3], %s154
          %s156 = sand.u32 %s26, 1
          %s157 = smul.addr %s156, 4
          %s158 = scalar_lea.vmem [#allocation2], %s157
          %s160 = ssub.s32 64, 64
          %161 = vsyncadd %s155, %s160
          %s162 = smul.addr %s16, 64
          %s163 = scalar_lea.hbm %s0, %s162
          %s165 = sshll.u32 %s158, 4
          %s166 = int_to_ptr.vmem [resolvable:$true] %s165
          %168 = dma.hbm_to_vmem [thread:$0]  %s163, 64, %s166, %s155
        $region28: #{transformer_forward.19} parent=23 // pred_fallthru
          _
      $region24: #{transformer_forward.19} parent=5 // pred_fallthru
        _
      %p169 = scmp.le.s32.totalorder 1, %s16
      %p170 = scmp.lt.s32.totalorder %s16, 3
      %p171 = pnand %p169, %p170
      %p172 = pneg %p171
      // Predicated region
      $region29: #{transformer_forward.19} parent=5 // pred_check
        _
      $region30: #{transformer_forward.19} parent=5 // pred_check_branch
        %174 = sbr.rel (%p171) target = $region32
      $region31: #{transformer_forward.19} parent=5 // pred_region
        %s175 = ssub.s32 %s16, 1
        %s176 = sand.u32 %s29, 1
        %s177 = scalar_lea.sflag [#allocation3], %s176
        %s178 = sand.u32 %s29, 1
        %s179 = smul.addr %s178, 4
        %s180 = scalar_lea.vmem [#allocation2], %s179
        // Predicated region
        $region33: #{transformer_forward.19} parent=31 // pred_check
          %p181 = pneg %p42
        $region34: #{transformer_forward.19} parent=31 // pred_check_branch
          %183 = sbr.rel (%p181) target = $region36
        $region35: #{transformer_forward.19} parent=31 // pred_region
          %184 = dma.done %s177, 64
        $region36: #{transformer_forward.19} parent=31 // pred_fallthru
          _
        // Predicated region
        $region37: #{transformer_forward.19} parent=31 // pred_check
          %p185 = pneg %p63
        $region38: #{transformer_forward.19} parent=31 // pred_check_branch
          %187 = sbr.rel (%p185) target = $region40
        $region39: #{transformer_forward.19} parent=31 // pred_region
          %188 = dma.done [#allocation6], 16
        $region40: #{transformer_forward.19} parent=31 // pred_fallthru
          _
        // Predicated region
        $region41: #{transformer_forward.19} parent=31 // pred_check
          %p189 = pneg %p84
        $region42: #{transformer_forward.19} parent=31 // pred_check_branch
          %191 = sbr.rel (%p189) target = $region44
        $region43: #{transformer_forward.19} parent=31 // pred_region
          %192 = dma.done [#allocation6], 16
        $region44: #{transformer_forward.19} parent=31 // pred_fallthru
          _
        %s193 = sand.u32 %s29, 1
        %s194 = scalar_lea.sflag [#allocation3], %s193
        %s195 = sand.u32 %s29, 1
        %s196 = smul.addr %s195, 4
        %s197 = scalar_lea.vmem [#allocation2], %s196
        %p198 = pneg %p42
        %p199 = pneg %p39
        %p200 = pneg %p63
        %p201 = pneg %p60
        %p202 = pneg %p84
        %p203 = pneg %p81
        %p204 = pneg %p110
        %p205 = pneg %p107
        %s206 = sand.u32 %s97, 1
        %s207 = scalar_lea.sflag [#allocation4], %s206
        %s208 = sand.u32 %s97, 1
        %s209 = smul.addr %s208, 8
        %s210 = scalar_lea.vmem [#allocation8], %s209
        %v211 = vld [vmem:[%s180] sm:$0xf]
        %v212 = vunpack.c.l.bf16 %v211
        %vm213 = vcmask 261120
        %v214 = vsel %vm213, %v212, 0.0
        %215 = vadd.xlane.f32.xlu0 %v214
        %v216 = vpop.xlane.xlu0 %215
        %v217 = vrcp.pop 32.0
        %v218 = vmul.f32 %v216, %v217
        %v219 = vsub.f32 %v212, %v218
        %v220 = vmul.f32 %v219, %v219
        %v221 = vsel %vm213, %v220, 0.0
        %222 = vadd.xlane.f32.xlu0 %v221
        %v223 = vpop.xlane.xlu0 %222
        %v224 = vmul.f32 %v223, %v217
        %v225 = vadd.f32 %v224, 1e-05
        %v226 = vrsqrt.pop %v225
        %v227 = vmul.f32 %v219, %v226
        %v228 = vld [vmem:[#allocation5] sm:$0x1]
        %v230 = vlaneseq
        %v231 = vshrl.u32 %v230, 7
        %v232 = vsub.s32 0, %v231
        %v233 = vrot.slane %v228, %v232
        %v235 = vmul.f32 %v227, %v233
        %v236 = vld [vmem:[#allocation7] sm:$0x1]
        %v238 = vlaneseq
        %v239 = vshrl.u32 %v238, 7
        %v240 = vsub.s32 0, %v239
        %v241 = vrot.slane %v236, %v240
        %v243 = vadd.f32 %v235, %v241
        %244 = vst.msk [vmem:[%s210] sm:$0xff] %vm213, %v243
        %s245 = sand.u32 %s97, 1
        %s246 = scalar_lea.sflag [#allocation4], %s245
        %s247 = sand.u32 %s97, 1
        %s248 = smul.addr %s247, 8
        %s249 = scalar_lea.vmem [#allocation8], %s248
        // Predicated region
        $region45: #{transformer_forward.19} parent=31 // pred_check
          %p250 = pneg %p107
        $region46: #{transformer_forward.19} parent=31 // pred_check_branch
          %252 = sbr.rel (%p250) target = $region48
        $region47: #{transformer_forward.19} parent=31 // pred_region
          %s254 = ssub.s32 128, 128
          %255 = vsyncadd %s246, %s254
          %s256 = smul.addr %s21, 128
          %s257 = scalar_lea.hbm %s3, %s256
          %s259 = sshll.u32 %s249, 4
          %s260 = int_to_ptr.vmem [resolvable:$true] %s259
          %262 = dma.vmem_to_hbm [thread:$0]  %s260, 128, %s257, %s246
        $region48: #{transformer_forward.19} parent=31 // pred_fallthru
          _
      $region32: #{transformer_forward.19} parent=5 // pred_fallthru
        _
      %p263 = scmp.le.s32.totalorder 2, %s16
      // Predicated region
      $region49: #{transformer_forward.19} parent=5 // pred_check
        %p264 = pneg %p263
      $region50: #{transformer_forward.19} parent=5 // pred_check_branch
        %266 = sbr.rel (%p264) target = $region52
      $region51: #{transformer_forward.19} parent=5 // pred_region
        %s267 = ssub.s32 %s16, 2
        // Predicated region
        $region53: #{transformer_forward.19} parent=51 // pred_check
          %p268 = pneg %p113
        $region54: #{transformer_forward.19} parent=51 // pred_check_branch
          %270 = sbr.rel (%p268) target = $region56
        $region55: #{transformer_forward.19} parent=51 // pred_region
          %s271 = sand.u32 %s98, 1
          %s272 = scalar_lea.sflag [#allocation4], %s271
          %s273 = sand.u32 %s98, 1
          %s274 = smul.addr %s273, 8
          %s275 = scalar_lea.vmem [#allocation8], %s274
          %276 = dma.done %s272, 128
        $region56: #{transformer_forward.19} parent=51 // pred_fallthru
          _
      $region52: #{transformer_forward.19} parent=5 // pred_fallthru
        _
    $region6: #{transformer_forward.19} parent=1 // loop_footer
      %s20 = sadd.s32 1, %s16
    $region7: #{transformer_forward.19} parent=1 // loop_footer_branch
      %15 = sbr.rel target = $region3
    $region8: #{transformer_forward.19} parent=1 // loop_exit
      _
    %277 = vsyncpa [#allocation3], 1
    %s278 = scalar_lea.sflag [#allocation3], 1
    %279 = vsyncpa %s278, 1
    %280 = vsyncpa [#allocation6], 1
    %281 = vsyncpa [#allocation4], 1
    %s282 = scalar_lea.sflag [#allocation4], 1
    %283 = vsyncpa %s282, 1

</llo_original>
